<compile_context>
chip_gen: v7x
topology: tpu7x:2x2x1
jax: 0.10.0
libtpu: 0.0.40
codegen_flags: <defaults>
</compile_context>

<pallas_src>
import functools

import jax
import jax.numpy as jnp
from jax.experimental import pallas as pl
from jax.experimental.pallas import tpu as pltpu


# ----------------------------------------------------------------------------
# Shared excitation MLP (VPU-only; far too small for the MXU).
# ----------------------------------------------------------------------------
def _excite(s, w1t_ref, b1_ref, w2_ref, b2_ref):
    # s: (C, 1) f32 pooled mean -> (C, 1) f32 sigmoid gate
    h = jnp.sum(w1t_ref[...].astype(jnp.float32) * s, axis=0, keepdims=True)
    h = jnp.maximum(h + b1_ref[...].astype(jnp.float32), 0.0)          # (1, Cr)
    g = jnp.sum(w2_ref[...].astype(jnp.float32) * h, axis=1, keepdims=True)
    g = g + b2_ref[...].astype(jnp.float32)                            # (C, 1)
    return 1.0 / (1.0 + jnp.exp(-g))


def _partial_column_sum(x_ref):
    """Sum of 128-lane column groups of x_ref[0] -> (C, 128) f32, VALU-only."""
    ncols = x_ref.shape[2] // 128
    psum = x_ref[0, :, 0:128].astype(jnp.float32)
    for j in range(1, ncols):
        psum = psum + x_ref[0, :, j * 128:(j + 1) * 128].astype(jnp.float32)
    return psum


# ----------------------------------------------------------------------------
# Fused kernel: grid (N, phase, T).  Phase 0 = pool (+cache x in VMEM, compute
# gate on last tile); phase 1 = scale from the VMEM-resident slab.
# ----------------------------------------------------------------------------
def _se_fused_kernel(x_ref, w1t_ref, b1_ref, w2_ref, b2_ref, o_ref,
                     slab_ref, acc_ref, gate_ref, *, inv_spatial):
    # x_ref/o_ref : (1, C, tS)   lane-dense spatial tile
    # slab_ref    : (T, C, tS)   VMEM cache of the whole per-batch slab
    # acc_ref     : (C, 128)     partial per-channel sums (f32)
    # gate_ref    : (C, 1)       sigmoid gate (f32)
    p = pl.program_id(1)
    t = pl.program_id(2)
    last_t = pl.num_programs(2) - 1

    @pl.when(jnp.logical_and(p == 0, t == 0))
    def _init():
        acc_ref[...] = jnp.zeros_like(acc_ref)

    @pl.when(p == 0)
    def _pool_phase():
        slab_ref[t] = x_ref[0]                       # cache tile on-chip
        acc_ref[...] += _partial_column_sum(x_ref)   # VALU adds only

        @pl.when(t == last_t)
        def _finalize():
            s = jnp.sum(acc_ref[...], axis=1, keepdims=True) * inv_spatial
            gate_ref[...] = _excite(s, w1t_ref, b1_ref, w2_ref, b2_ref)

    @pl.when(p == 1)
    def _scale_phase():
        xs = slab_ref[t]                              # (C, tS), never re-read HBM
        g = gate_ref[...].astype(xs.dtype)            # (C, 1) native-dtype gate
        o_ref[...] = (xs * g)[None].astype(o_ref.dtype)


# ----------------------------------------------------------------------------
# Two-pass fallback (x too large to cache per batch in VMEM).
# ----------------------------------------------------------------------------
def _se_pool_excite_kernel(x_ref, w1t_ref, b1_ref, w2_ref, b2_ref,
                           scale_ref, acc_ref, *, inv_spatial):
    t = pl.program_id(1)

    @pl.when(t == 0)
    def _init():
        acc_ref[...] = jnp.zeros_like(acc_ref)

    acc_ref[...] += _partial_column_sum(x_ref)

    @pl.when(t == pl.num_programs(1) - 1)
    def _finalize():
        s = jnp.sum(acc_ref[...], axis=1, keepdims=True) * inv_spatial
        g = _excite(s, w1t_ref, b1_ref, w2_ref, b2_ref)
        scale_ref[...] = g[None].astype(scale_ref.dtype)


def _se_scale_kernel(scale_ref, x_ref, o_ref):
    g = scale_ref[...].astype(x_ref.dtype)            # (1, C, 1)
    o_ref[...] = (x_ref[...] * g).astype(o_ref.dtype)


# ----------------------------------------------------------------------------
# Sizing helpers (byte-aware, VMEM-budget driven).
# ----------------------------------------------------------------------------
def _vmem_limit_bytes():
    try:
        cap = int(pltpu.get_tpu_info().vmem_capacity_bytes)
    except Exception:
        cap = 64 * 1024 * 1024            # conservative (v7x physical VMEM)
    return int(max(32 * 1024 * 1024, min(cap * 3 // 4, 100 * 1024 * 1024)))


def _pick_spatial_tile(s_pad, c, itemsize, budget_bytes, n_bufs):
    """Largest multiple-of-128 divisor of s_pad whose n_bufs pipeline copies fit."""
    m = s_pad // 128
    bytes_per_col = n_bufs * c * 128 * itemsize
    max_cols = max(1, budget_bytes // bytes_per_col)
    best = 1
    for d in range(1, m + 1):
        if m % d == 0 and d <= max_cols:
            best = d
    return best * 128


# ----------------------------------------------------------------------------
# Wrapper.
# ----------------------------------------------------------------------------
def squeeze_excitation(x, fc1_w, fc1_b, fc2_w, fc2_b, *, force_two_pass=False):
    """
    x     : (N, C, D, H, W)
    fc1_w : (Cr, C) = nn.Linear(C, Cr).weight ;  fc1_b : (Cr,)
    fc2_w : (C, Cr) = nn.Linear(Cr, C).weight ;  fc2_b : (C,)
    returns x * sigmoid(fc2(relu(fc1(mean_{DHW}(x)))))
    """
    N, C, D, H, W = x.shape
    Cr = fc1_w.shape[0]
    S = D * H * W
    itemsize = jnp.dtype(x.dtype).itemsize
    S_pad = ((S + 127) // 128) * 128

    x2 = x.reshape(N, C, S)                       # contiguous -> free
    if S_pad != S:
        # Zero-pad the lane axis: zeros don't affect the pooled SUM (mean uses
        # 1/S), padded output columns are sliced off below.
        x2 = jnp.pad(x2, ((0, 0), (0, 0), (0, S_pad - S)))

    w1t = jnp.transpose(fc1_w)                    # (C, Cr)
    b1r = fc1_b.reshape(1, Cr)
    b2c = fc2_b.reshape(C, 1)

    vmem_limit = _vmem_limit_bytes()
    inv_spatial = 1.0 / S
    reserve = 2 * 1024 * 1024                     # weights / scratch / headroom
    slab_bytes = C * S_pad * itemsize
    min_tile_bytes = 4 * C * 128 * itemsize       # 2 in + 2 out bufs, 128 lanes

    fused_budget = int(0.85 * vmem_limit) - reserve - slab_bytes
    use_fused = (not force_two_pass) and fused_budget >= min_tile_bytes

    if use_fused:
        tS = _pick_spatial_tile(S_pad, C, itemsize, fused_budget, n_bufs=4)
        T = S_pad // tS
        last = T - 1

        out2 = pl.pallas_call(
            functools.partial(_se_fused_kernel, inv_spatial=inv_spatial),
            out_shape=jax.ShapeDtypeStruct((N, C, S_pad), x.dtype),
            grid_spec=pltpu.PrefetchScalarGridSpec(
                num_scalar_prefetch=0,
                grid=(N, 2, T),
                in_specs=[
                    # phase 0 streams tile t; phase 1 pins the last tile index
                    # so NO x re-DMA happens while scaling from the VMEM slab.
                    pl.BlockSpec((1, C, tS),
                                 lambda n, p, t: (n, 0, jnp.where(p == 0, t, last))),
                    pl.BlockSpec((C, Cr), lambda n, p, t: (0, 0)),
                    pl.BlockSpec((1, Cr), lambda n, p, t: (0, 0)),
                    pl.BlockSpec((C, Cr), lambda n, p, t: (0, 0)),
                    pl.BlockSpec((C, 1), lambda n, p, t: (0, 0)),
                ],
                # phase 0 parks on block (n,0,0); it is only flushed after the
                # phase-1 iteration that actually writes it.
                out_specs=pl.BlockSpec(
                    (1, C, tS),
                    lambda n, p, t: (n, 0, jnp.where(p == 0, 0, t))),
                scratch_shapes=[
                    pltpu.VMEM((T, C, tS), x.dtype),      # per-batch x slab
                    pltpu.VMEM((C, 128), jnp.float32),    # partial sums
                    pltpu.VMEM((C, 1), jnp.float32),      # gate
                ],
            ),
            compiler_params=pltpu.CompilerParams(
                dimension_semantics=("parallel", "arbitrary", "arbitrary"),
                vmem_limit_bytes=vmem_limit),
        )(x2, w1t, b1r, fc2_w, b2c)
    else:
        # ---- fallback pass 1: tiled pooled sum + excitation MLP -> gate -----
        two_pass_budget = max(int(0.5 * vmem_limit) - reserve, min_tile_bytes)
        tS = _pick_spatial_tile(S_pad, C, itemsize, two_pass_budget, n_bufs=4)
        T = S_pad // tS

        scale = pl.pallas_call(
            functools.partial(_se_pool_excite_kernel, inv_spatial=inv_spatial),
            out_shape=jax.ShapeDtypeStruct((N, C, 1), jnp.float32),
            grid_spec=pltpu.PrefetchScalarGridSpec(
                num_scalar_prefetch=0,
                grid=(N, T),
                in_specs=[
                    pl.BlockSpec((1, C, tS), lambda n, t: (n, 0, t)),
                    pl.BlockSpec((C, Cr), lambda n, t: (0, 0)),
                    pl.BlockSpec((1, Cr), lambda n, t: (0, 0)),
                    pl.BlockSpec((C, Cr), lambda n, t: (0, 0)),
                    pl.BlockSpec((C, 1), lambda n, t: (0, 0)),
                ],
                out_specs=pl.BlockSpec((1, C, 1), lambda n, t: (n, 0, 0)),
                scratch_shapes=[pltpu.VMEM((C, 128), jnp.float32)],
            ),
            compiler_params=pltpu.CompilerParams(
                dimension_semantics=("parallel", "arbitrary"),
                vmem_limit_bytes=vmem_limit),
        )(x2, w1t, b1r, fc2_w, b2c)

        # ---- fallback pass 2: out = x * gate (fully parallel, megacore) -----
        out2 = pl.pallas_call(
            _se_scale_kernel,
            out_shape=jax.ShapeDtypeStruct((N, C, S_pad), x.dtype),
            grid_spec=pltpu.PrefetchScalarGridSpec(
                num_scalar_prefetch=0,
                grid=(N, T),
                in_specs=[
                    pl.BlockSpec((1, C, 1), lambda n, t: (n, 0, 0)),
                    pl.BlockSpec((1, C, tS), lambda n, t: (n, 0, t)),
                ],
                out_specs=pl.BlockSpec((1, C, tS), lambda n, t: (n, 0, t)),
            ),
            compiler_params=pltpu.CompilerParams(
                dimension_semantics=("parallel", "parallel"),
                vmem_limit_bytes=vmem_limit),
        )(scale, x2)

    if S_pad != S:
        out2 = out2[:, :, :S]
    return out2.reshape(N, C, D, H, W)


# ----------------------------------------------------------------------------
# Pure-JAX reference matching the PyTorch module.
# ----------------------------------------------------------------------------
def _reference(x, fc1_w, fc1_b, fc2_w, fc2_b):
    pooled = jnp.mean(x.astype(jnp.float32), axis=(2, 3, 4))        # (N, C)
    h = jnp.maximum(pooled @ fc1_w.T + fc1_b, 0.0)                  # (N, Cr)
    g = jax.nn.sigmoid(h @ fc2_w.T + fc2_b)                         # (N, C)
    return x * g[:, :, None, None, None].astype(x.dtype)


if __name__ == "__main__":
    key = jax.random.PRNGKey(0)
    kx, k1, kb1, k2, kb2 = jax.random.split(key, 5)

    N, C = 2, 64
    D = H = W = 16
    reduction_ratio = 16
    Cr = max(1, C // reduction_ratio)

    x = jax.random.normal(kx, (N, C, D, H, W), dtype=jnp.float32)
    fc1_w = jax.random.normal(k1, (Cr, C), dtype=jnp.float32) * 0.1
    fc1_b = jax.random.normal(kb1, (Cr,), dtype=jnp.float32) * 0.1
    fc2_w = jax.random.normal(k2, (C, Cr), dtype=jnp.float32) * 0.1
    fc2_b = jax.random.normal(kb2, (C,), dtype=jnp.float32) * 0.1

    ref = _reference(x, fc1_w, fc1_b, fc2_w, fc2_b)

    # Fused single-read path.
    out = jax.block_until_ready(squeeze_excitation(x, fc1_w, fc1_b, fc2_w, fc2_b))
    assert out.shape == (N, C, D, H, W)
    assert jnp.allclose(out, ref, atol=1e-4, rtol=1e-4), "fused path mismatch"

    # Two-pass fallback path (exercised explicitly for coverage).
    out2 = jax.block_until_ready(
        squeeze_excitation(x, fc1_w, fc1_b, fc2_w, fc2_b, force_two_pass=True))
    assert jnp.allclose(out2, ref, atol=1e-4, rtol=1e-4), "two-pass path mismatch"

    # Non-multiple-of-128 spatial extent (exercises the padded tail).
    xs = jax.random.normal(kx, (N, C, 5, 6, 7), dtype=jnp.float32)
    refs = _reference(xs, fc1_w, fc1_b, fc2_w, fc2_b)
    outs = jax.block_until_ready(squeeze_excitation(xs, fc1_w, fc1_b, fc2_w, fc2_b))
    assert jnp.allclose(outs, refs, atol=1e-4, rtol=1e-4), "padded-tail mismatch"

    print("KERNEL_OK")
</pallas_src>

<mosaic_0001>
module attributes {stable_mosaic.version = 11 : i64} {
  func.func @_se_fused_kernel(%arg0: i32, %arg1: i32, %arg2: i32, %arg3: memref<1x64x4096xf32, #tpu.memory_space<vmem>>, %arg4: memref<64x4xf32, #tpu.memory_space<vmem>>, %arg5: memref<1x4xf32, #tpu.memory_space<vmem>>, %arg6: memref<64x4xf32, #tpu.memory_space<vmem>>, %arg7: memref<64x1xf32, #tpu.memory_space<vmem>>, %arg8: memref<1x64x4096xf32, #tpu.memory_space<vmem>>, %arg9: memref<1x64x4096xf32, #tpu.memory_space<vmem>>, %arg10: memref<64x128xf32, #tpu.memory_space<vmem>>, %arg11: memref<64x1xf32, #tpu.memory_space<vmem>>) attributes {dimension_semantics = [#tpu.dimension_semantics<parallel>, #tpu.dimension_semantics<arbitrary>, #tpu.dimension_semantics<arbitrary>], iteration_bounds = array<i64: 2, 2, 1>, scalar_prefetch = 0 : i64, scratch_operands = 3 : i64, tpu.core_type = #tpu.core_type<tc>, window_params = [{transform_indices = @transform_0, window_bounds = array<i64: 1, 64, 4096>}, {pipeline_mode = #tpu.pipeline_mode<synchronous>, transform_indices = @transform_1, window_bounds = array<i64: 64, 4>}, {pipeline_mode = #tpu.pipeline_mode<synchronous>, transform_indices = @transform_2, window_bounds = array<i64: 1, 4>}, {pipeline_mode = #tpu.pipeline_mode<synchronous>, transform_indices = @transform_3, window_bounds = array<i64: 64, 4>}, {pipeline_mode = #tpu.pipeline_mode<synchronous>, transform_indices = @transform_4, window_bounds = array<i64: 64, 1>}, {transform_indices = @transform_5, window_bounds = array<i64: 1, 64, 4096>}]} {
    %c0_i32 = arith.constant 0 : i32
    %0 = arith.cmpi eq, %arg1, %c0_i32 : i32
    %c0_i32_0 = arith.constant 0 : i32
    %1 = arith.cmpi eq, %arg2, %c0_i32_0 : i32
    %2 = arith.andi %0, %1 : i1
    %3 = arith.extui %2 : i1 to i32
    %c0_i32_1 = arith.constant 0 : i32
    %4 = arith.cmpi ne, %3, %c0_i32_1 : i32
    scf.if %4 {
      %cst = arith.constant 0.000000e+00 : f32
      %11 = vector.broadcast %cst : f32 to vector<64x128xf32>
      %c0 = arith.constant 0 : index
      %c0_5 = arith.constant 0 : index
      %12 = vector.load %arg10[%c0, %c0_5] : memref<64x128xf32, #tpu.memory_space<vmem>>, vector<64x128xf32>
      tpu.vector_store %arg10[%c0, %c0_5], %11 {strides = array<i32>} : memref<64x128xf32, #tpu.memory_space<vmem>>, vector<64x128xf32>,
    } else {
    }
    %c0_i32_2 = arith.constant 0 : i32
    %5 = arith.cmpi eq, %arg1, %c0_i32_2 : i32
    %6 = arith.extui %5 : i1 to i32
    %c0_i32_3 = arith.constant 0 : i32
    %7 = arith.cmpi ne, %6, %c0_i32_3 : i32
    scf.if %7 {
      %c0 = arith.constant 0 : index
      %c0_5 = arith.constant 0 : index
      %c0_6 = arith.constant 0 : index
      %11 = vector.load %arg3[%c0, %c0_5, %c0_6] : memref<1x64x4096xf32, #tpu.memory_space<vmem>>, vector<1x64x4096xf32>
      %12 = vector.shape_cast %11 : vector<1x64x4096xf32> to vector<64x4096xf32>
      %13 = arith.index_cast %arg2 : i32 to index
      %c0_7 = arith.constant 0 : index
      %c0_8 = arith.constant 0 : index
      %14 = vector.load %arg9[%13, %c0_7, %c0_8] : memref<1x64x4096xf32, #tpu.memory_space<vmem>>, vector<1x64x4096xf32>
      %15 = vector.shape_cast %14 : vector<1x64x4096xf32> to vector<64x4096xf32>
      %16 = vector.shape_cast %12 : vector<64x4096xf32> to vector<1x64x4096xf32>
      tpu.vector_store %arg9[%13, %c0_7, %c0_8], %16 {strides = array<i32>} : memref<1x64x4096xf32, #tpu.memory_space<vmem>>, vector<1x64x4096xf32>,
      %c0_9 = arith.constant 0 : index
      %c0_10 = arith.constant 0 : index
      %17 = vector.load %arg10[%c0_9, %c0_10] : memref<64x128xf32, #tpu.memory_space<vmem>>, vector<64x128xf32>
      %c0_11 = arith.constant 0 : index
      %c0_12 = arith.constant 0 : index
      %c0_13 = arith.constant 0 : index
      %18 = vector.load %arg3[%c0_11, %c0_12, %c0_13] : memref<1x64x4096xf32, #tpu.memory_space<vmem>>, vector<1x64x128xf32>
      %19 = vector.shape_cast %18 : vector<1x64x128xf32> to vector<64x128xf32>
      %c0_14 = arith.constant 0 : index
      %c0_15 = arith.constant 0 : index
      %c128 = arith.constant 128 : index
      %20 = vector.load %arg3[%c0_14, %c0_15, %c128] : memref<1x64x4096xf32, #tpu.memory_space<vmem>>, vector<1x64x128xf32>
      %21 = vector.shape_cast %20 : vector<1x64x128xf32> to vector<64x128xf32>
      %22 = arith.addf %19, %21 : vector<64x128xf32>
      %c0_16 = arith.constant 0 : index
      %c0_17 = arith.constant 0 : index
      %c256 = arith.constant 256 : index
      %23 = vector.load %arg3[%c0_16, %c0_17, %c256] : memref<1x64x4096xf32, #tpu.memory_space<vmem>>, vector<1x64x128xf32>
      %24 = vector.shape_cast %23 : vector<1x64x128xf32> to vector<64x128xf32>
      %25 = arith.addf %22, %24 : vector<64x128xf32>
      %c0_18 = arith.constant 0 : index
      %c0_19 = arith.constant 0 : index
      %c384 = arith.constant 384 : index
      %26 = vector.load %arg3[%c0_18, %c0_19, %c384] : memref<1x64x4096xf32, #tpu.memory_space<vmem>>, vector<1x64x128xf32>
      %27 = vector.shape_cast %26 : vector<1x64x128xf32> to vector<64x128xf32>
      %28 = arith.addf %25, %27 : vector<64x128xf32>
      %c0_20 = arith.constant 0 : index
      %c0_21 = arith.constant 0 : index
      %c512 = arith.constant 512 : index
      %29 = vector.load %arg3[%c0_20, %c0_21, %c512] : memref<1x64x4096xf32, #tpu.memory_space<vmem>>, vector<1x64x128xf32>
      %30 = vector.shape_cast %29 : vector<1x64x128xf32> to vector<64x128xf32>
      %31 = arith.addf %28, %30 : vector<64x128xf32>
      %c0_22 = arith.constant 0 : index
      %c0_23 = arith.constant 0 : index
      %c640 = arith.constant 640 : index
      %32 = vector.load %arg3[%c0_22, %c0_23, %c640] : memref<1x64x4096xf32, #tpu.memory_space<vmem>>, vector<1x64x128xf32>
      %33 = vector.shape_cast %32 : vector<1x64x128xf32> to vector<64x128xf32>
      %34 = arith.addf %31, %33 : vector<64x128xf32>
      %c0_24 = arith.constant 0 : index
      %c0_25 = arith.constant 0 : index
      %c768 = arith.constant 768 : index
      %35 = vector.load %arg3[%c0_24, %c0_25, %c768] : memref<1x64x4096xf32, #tpu.memory_space<vmem>>, vector<1x64x128xf32>
      %36 = vector.shape_cast %35 : vector<1x64x128xf32> to vector<64x128xf32>
      %37 = arith.addf %34, %36 : vector<64x128xf32>
      %c0_26 = arith.constant 0 : index
      %c0_27 = arith.constant 0 : index
      %c896 = arith.constant 896 : index
      %38 = vector.load %arg3[%c0_26, %c0_27, %c896] : memref<1x64x4096xf32, #tpu.memory_space<vmem>>, vector<1x64x128xf32>
      %39 = vector.shape_cast %38 : vector<1x64x128xf32> to vector<64x128xf32>
      %40 = arith.addf %37, %39 : vector<64x128xf32>
      %c0_28 = arith.constant 0 : index
      %c0_29 = arith.constant 0 : index
      %c1024 = arith.constant 1024 : index
      %41 = vector.load %arg3[%c0_28, %c0_29, %c1024] : memref<1x64x4096xf32, #tpu.memory_space<vmem>>, vector<1x64x128xf32>
      %42 = vector.shape_cast %41 : vector<1x64x128xf32> to vector<64x128xf32>
      %43 = arith.addf %40, %42 : vector<64x128xf32>
      %c0_30 = arith.constant 0 : index
      %c0_31 = arith.constant 0 : index
      %c1152 = arith.constant 1152 : index
      %44 = vector.load %arg3[%c0_30, %c0_31, %c1152] : memref<1x64x4096xf32, #tpu.memory_space<vmem>>, vector<1x64x128xf32>
      %45 = vector.shape_cast %44 : vector<1x64x128xf32> to vector<64x128xf32>
      %46 = arith.addf %43, %45 : vector<64x128xf32>
      %c0_32 = arith.constant 0 : index
      %c0_33 = arith.constant 0 : index
      %c1280 = arith.constant 1280 : index
      %47 = vector.load %arg3[%c0_32, %c0_33, %c1280] : memref<1x64x4096xf32, #tpu.memory_space<vmem>>, vector<1x64x128xf32>
      %48 = vector.shape_cast %47 : vector<1x64x128xf32> to vector<64x128xf32>
      %49 = arith.addf %46, %48 : vector<64x128xf32>
      %c0_34 = arith.constant 0 : index
      %c0_35 = arith.constant 0 : index
      %c1408 = arith.constant 1408 : index
      %50 = vector.load %arg3[%c0_34, %c0_35, %c1408] : memref<1x64x4096xf32, #tpu.memory_space<vmem>>, vector<1x64x128xf32>
      %51 = vector.shape_cast %50 : vector<1x64x128xf32> to vector<64x128xf32>
      %52 = arith.addf %49, %51 : vector<64x128xf32>
      %c0_36 = arith.constant 0 : index
      %c0_37 = arith.constant 0 : index
      %c1536 = arith.constant 1536 : index
      %53 = vector.load %arg3[%c0_36, %c0_37, %c1536] : memref<1x64x4096xf32, #tpu.memory_space<vmem>>, vector<1x64x128xf32>
      %54 = vector.shape_cast %53 : vector<1x64x128xf32> to vector<64x128xf32>
      %55 = arith.addf %52, %54 : vector<64x128xf32>
      %c0_38 = arith.constant 0 : index
      %c0_39 = arith.constant 0 : index
      %c1664 = arith.constant 1664 : index
      %56 = vector.load %arg3[%c0_38, %c0_39, %c1664] : memref<1x64x4096xf32, #tpu.memory_space<vmem>>, vector<1x64x128xf32>
      %57 = vector.shape_cast %56 : vector<1x64x128xf32> to vector<64x128xf32>
      %58 = arith.addf %55, %57 : vector<64x128xf32>
      %c0_40 = arith.constant 0 : index
      %c0_41 = arith.constant 0 : index
      %c1792 = arith.constant 1792 : index
      %59 = vector.load %arg3[%c0_40, %c0_41, %c1792] : memref<1x64x4096xf32, #tpu.memory_space<vmem>>, vector<1x64x128xf32>
      %60 = vector.shape_cast %59 : vector<1x64x128xf32> to vector<64x128xf32>
      %61 = arith.addf %58, %60 : vector<64x128xf32>
      %c0_42 = arith.constant 0 : index
      %c0_43 = arith.constant 0 : index
      %c1920 = arith.constant 1920 : index
      %62 = vector.load %arg3[%c0_42, %c0_43, %c1920] : memref<1x64x4096xf32, #tpu.memory_space<vmem>>, vector<1x64x128xf32>
      %63 = vector.shape_cast %62 : vector<1x64x128xf32> to vector<64x128xf32>
      %64 = arith.addf %61, %63 : vector<64x128xf32>
      %c0_44 = arith.constant 0 : index
      %c0_45 = arith.constant 0 : index
      %c2048 = arith.constant 2048 : index
      %65 = vector.load %arg3[%c0_44, %c0_45, %c2048] : memref<1x64x4096xf32, #tpu.memory_space<vmem>>, vector<1x64x128xf32>
      %66 = vector.shape_cast %65 : vector<1x64x128xf32> to vector<64x128xf32>
      %67 = arith.addf %64, %66 : vector<64x128xf32>
      %c0_46 = arith.constant 0 : index
      %c0_47 = arith.constant 0 : index
      %c2176 = arith.constant 2176 : index
      %68 = vector.load %arg3[%c0_46, %c0_47, %c2176] : memref<1x64x4096xf32, #tpu.memory_space<vmem>>, vector<1x64x128xf32>
      %69 = vector.shape_cast %68 : vector<1x64x128xf32> to vector<64x128xf32>
      %70 = arith.addf %67, %69 : vector<64x128xf32>
      %c0_48 = arith.constant 0 : index
      %c0_49 = arith.constant 0 : index
      %c2304 = arith.constant 2304 : index
      %71 = vector.load %arg3[%c0_48, %c0_49, %c2304] : memref<1x64x4096xf32, #tpu.memory_space<vmem>>, vector<1x64x128xf32>
      %72 = vector.shape_cast %71 : vector<1x64x128xf32> to vector<64x128xf32>
      %73 = arith.addf %70, %72 : vector<64x128xf32>
      %c0_50 = arith.constant 0 : index
      %c0_51 = arith.constant 0 : index
      %c2432 = arith.constant 2432 : index
      %74 = vector.load %arg3[%c0_50, %c0_51, %c2432] : memref<1x64x4096xf32, #tpu.memory_space<vmem>>, vector<1x64x128xf32>
      %75 = vector.shape_cast %74 : vector<1x64x128xf32> to vector<64x128xf32>
      %76 = arith.addf %73, %75 : vector<64x128xf32>
      %c0_52 = arith.constant 0 : index
      %c0_53 = arith.constant 0 : index
      %c2560 = arith.constant 2560 : index
      %77 = vector.load %arg3[%c0_52, %c0_53, %c2560] : memref<1x64x4096xf32, #tpu.memory_space<vmem>>, vector<1x64x128xf32>
      %78 = vector.shape_cast %77 : vector<1x64x128xf32> to vector<64x128xf32>
      %79 = arith.addf %76, %78 : vector<64x128xf32>
      %c0_54 = arith.constant 0 : index
      %c0_55 = arith.constant 0 : index
      %c2688 = arith.constant 2688 : index
      %80 = vector.load %arg3[%c0_54, %c0_55, %c2688] : memref<1x64x4096xf32, #tpu.memory_space<vmem>>, vector<1x64x128xf32>
      %81 = vector.shape_cast %80 : vector<1x64x128xf32> to vector<64x128xf32>
      %82 = arith.addf %79, %81 : vector<64x128xf32>
      %c0_56 = arith.constant 0 : index
      %c0_57 = arith.constant 0 : index
      %c2816 = arith.constant 2816 : index
      %83 = vector.load %arg3[%c0_56, %c0_57, %c2816] : memref<1x64x4096xf32, #tpu.memory_space<vmem>>, vector<1x64x128xf32>
      %84 = vector.shape_cast %83 : vector<1x64x128xf32> to vector<64x128xf32>
      %85 = arith.addf %82, %84 : vector<64x128xf32>
      %c0_58 = arith.constant 0 : index
      %c0_59 = arith.constant 0 : index
      %c2944 = arith.constant 2944 : index
      %86 = vector.load %arg3[%c0_58, %c0_59, %c2944] : memref<1x64x4096xf32, #tpu.memory_space<vmem>>, vector<1x64x128xf32>
      %87 = vector.shape_cast %86 : vector<1x64x128xf32> to vector<64x128xf32>
      %88 = arith.addf %85, %87 : vector<64x128xf32>
      %c0_60 = arith.constant 0 : index
      %c0_61 = arith.constant 0 : index
      %c3072 = arith.constant 3072 : index
      %89 = vector.load %arg3[%c0_60, %c0_61, %c3072] : memref<1x64x4096xf32, #tpu.memory_space<vmem>>, vector<1x64x128xf32>
      %90 = vector.shape_cast %89 : vector<1x64x128xf32> to vector<64x128xf32>
      %91 = arith.addf %88, %90 : vector<64x128xf32>
      %c0_62 = arith.constant 0 : index
      %c0_63 = arith.constant 0 : index
      %c3200 = arith.constant 3200 : index
      %92 = vector.load %arg3[%c0_62, %c0_63, %c3200] : memref<1x64x4096xf32, #tpu.memory_space<vmem>>, vector<1x64x128xf32>
      %93 = vector.shape_cast %92 : vector<1x64x128xf32> to vector<64x128xf32>
      %94 = arith.addf %91, %93 : vector<64x128xf32>
      %c0_64 = arith.constant 0 : index
      %c0_65 = arith.constant 0 : index
      %c3328 = arith.constant 3328 : index
      %95 = vector.load %arg3[%c0_64, %c0_65, %c3328] : memref<1x64x4096xf32, #tpu.memory_space<vmem>>, vector<1x64x128xf32>
      %96 = vector.shape_cast %95 : vector<1x64x128xf32> to vector<64x128xf32>
      %97 = arith.addf %94, %96 : vector<64x128xf32>
      %c0_66 = arith.constant 0 : index
      %c0_67 = arith.constant 0 : index
      %c3456 = arith.constant 3456 : index
      %98 = vector.load %arg3[%c0_66, %c0_67, %c3456] : memref<1x64x4096xf32, #tpu.memory_space<vmem>>, vector<1x64x128xf32>
      %99 = vector.shape_cast %98 : vector<1x64x128xf32> to vector<64x128xf32>
      %100 = arith.addf %97, %99 : vector<64x128xf32>
      %c0_68 = arith.constant 0 : index
      %c0_69 = arith.constant 0 : index
      %c3584 = arith.constant 3584 : index
      %101 = vector.load %arg3[%c0_68, %c0_69, %c3584] : memref<1x64x4096xf32, #tpu.memory_space<vmem>>, vector<1x64x128xf32>
      %102 = vector.shape_cast %101 : vector<1x64x128xf32> to vector<64x128xf32>
      %103 = arith.addf %100, %102 : vector<64x128xf32>
      %c0_70 = arith.constant 0 : index
      %c0_71 = arith.constant 0 : index
      %c3712 = arith.constant 3712 : index
      %104 = vector.load %arg3[%c0_70, %c0_71, %c3712] : memref<1x64x4096xf32, #tpu.memory_space<vmem>>, vector<1x64x128xf32>
      %105 = vector.shape_cast %104 : vector<1x64x128xf32> to vector<64x128xf32>
      %106 = arith.addf %103, %105 : vector<64x128xf32>
      %c0_72 = arith.constant 0 : index
      %c0_73 = arith.constant 0 : index
      %c3840 = arith.constant 3840 : index
      %107 = vector.load %arg3[%c0_72, %c0_73, %c3840] : memref<1x64x4096xf32, #tpu.memory_space<vmem>>, vector<1x64x128xf32>
      %108 = vector.shape_cast %107 : vector<1x64x128xf32> to vector<64x128xf32>
      %109 = arith.addf %106, %108 : vector<64x128xf32>
      %c0_74 = arith.constant 0 : index
      %c0_75 = arith.constant 0 : index
      %c3968 = arith.constant 3968 : index
      %110 = vector.load %arg3[%c0_74, %c0_75, %c3968] : memref<1x64x4096xf32, #tpu.memory_space<vmem>>, vector<1x64x128xf32>
      %111 = vector.shape_cast %110 : vector<1x64x128xf32> to vector<64x128xf32>
      %112 = arith.addf %109, %111 : vector<64x128xf32>
      %113 = arith.addf %17, %112 : vector<64x128xf32>
      %c0_76 = arith.constant 0 : index
      %c0_77 = arith.constant 0 : index
      %114 = vector.load %arg10[%c0_76, %c0_77] : memref<64x128xf32, #tpu.memory_space<vmem>>, vector<64x128xf32>
      tpu.vector_store %arg10[%c0_76, %c0_77], %113 {strides = array<i32>} : memref<64x128xf32, #tpu.memory_space<vmem>>, vector<64x128xf32>,
      %c0_i32_78 = arith.constant 0 : i32
      %115 = arith.cmpi eq, %arg2, %c0_i32_78 : i32
      %116 = arith.extui %115 : i1 to i32
      %c0_i32_79 = arith.constant 0 : i32
      %117 = arith.cmpi ne, %116, %c0_i32_79 : i32
      scf.if %117 {
        %c0_80 = arith.constant 0 : index
        %c0_81 = arith.constant 0 : index
        %118 = vector.load %arg10[%c0_80, %c0_81] : memref<64x128xf32, #tpu.memory_space<vmem>>, vector<64x128xf32>
        %cst = arith.constant dense<0.000000e+00> : vector<64xf32>
        %119 = vector.multi_reduction <add>, %118, %cst [1] : vector<64x128xf32> to vector<64xf32>
        %120 = vector.shape_cast %119 : vector<64xf32> to vector<64x1xf32>
        %cst_82 = arith.constant 2.44140625E-4 : f32
        %121 = vector.broadcast %cst_82 : f32 to vector<64x1xf32>
        %122 = arith.mulf %120, %121 : vector<64x1xf32>
        %c0_83 = arith.constant 0 : index
        %c0_84 = arith.constant 0 : index
        %123 = vector.load %arg4[%c0_83, %c0_84] : memref<64x4xf32, #tpu.memory_space<vmem>>, vector<64x4xf32>
        %124 = vector.broadcast %122 : vector<64x1xf32> to vector<64x4xf32>
        %125 = arith.mulf %123, %124 : vector<64x4xf32>
        %cst_85 = arith.constant dense<0.000000e+00> : vector<4xf32>
        %126 = vector.multi_reduction <add>, %125, %cst_85 [0] : vector<64x4xf32> to vector<4xf32>
        %127 = vector.shape_cast %126 : vector<4xf32> to vector<1x4xf32>
        %c0_86 = arith.constant 0 : index
        %c0_87 = arith.constant 0 : index
        %128 = vector.load %arg5[%c0_86, %c0_87] : memref<1x4xf32, #tpu.memory_space<vmem>>, vector<1x4xf32>
        %129 = arith.addf %127, %128 : vector<1x4xf32>
        %cst_88 = arith.constant 0.000000e+00 : f32
        %130 = vector.broadcast %cst_88 : f32 to vector<1x4xf32>
        %131 = arith.maximumf %129, %130 : vector<1x4xf32>
        %c0_89 = arith.constant 0 : index
        %c0_90 = arith.constant 0 : index
        %132 = vector.load %arg6[%c0_89, %c0_90] : memref<64x4xf32, #tpu.memory_space<vmem>>, vector<64x4xf32>
        %133 = vector.broadcast %131 : vector<1x4xf32> to vector<64x4xf32>
        %134 = arith.mulf %132, %133 : vector<64x4xf32>
        %cst_91 = arith.constant dense<0.000000e+00> : vector<64xf32>
        %135 = vector.multi_reduction <add>, %134, %cst_91 [1] : vector<64x4xf32> to vector<64xf32>
        %136 = vector.shape_cast %135 : vector<64xf32> to vector<64x1xf32>
        %c0_92 = arith.constant 0 : index
        %c0_93 = arith.constant 0 : index
        %137 = vector.load %arg7[%c0_92, %c0_93] : memref<64x1xf32, #tpu.memory_space<vmem>>, vector<64x1xf32>
        %138 = arith.addf %136, %137 : vector<64x1xf32>
        %cst_94 = arith.constant 0.000000e+00 : f32
        %139 = vector.broadcast %cst_94 : f32 to vector<64x1xf32>
        %140 = arith.subf %139, %138 : vector<64x1xf32>
        %141 = math.exp %140 : vector<64x1xf32>
        %cst_95 = arith.constant 1.000000e+00 : f32
        %142 = vector.broadcast %cst_95 : f32 to vector<64x1xf32>
        %143 = arith.addf %142, %141 : vector<64x1xf32>
        %cst_96 = arith.constant 1.000000e+00 : f32
        %144 = vector.broadcast %cst_96 : f32 to vector<64x1xf32>
        %145 = arith.divf %144, %143 : vector<64x1xf32>
        %c0_97 = arith.constant 0 : index
        %c0_98 = arith.constant 0 : index
        %146 = vector.load %arg11[%c0_97, %c0_98] : memref<64x1xf32, #tpu.memory_space<vmem>>, vector<64x1xf32>
        tpu.vector_store %arg11[%c0_97, %c0_98], %145 {strides = array<i32>} : memref<64x1xf32, #tpu.memory_space<vmem>>, vector<64x1xf32>,
      } else {
      }
    } else {
    }
    %c1_i32 = arith.constant 1 : i32
    %8 = arith.cmpi eq, %arg1, %c1_i32 : i32
    %9 = arith.extui %8 : i1 to i32
    %c0_i32_4 = arith.constant 0 : i32
    %10 = arith.cmpi ne, %9, %c0_i32_4 : i32
    scf.if %10 {
      %11 = arith.index_cast %arg2 : i32 to index
      %c0 = arith.constant 0 : index
      %c0_5 = arith.constant 0 : index
      %12 = vector.load %arg9[%11, %c0, %c0_5] : memref<1x64x4096xf32, #tpu.memory_space<vmem>>, vector<1x64x4096xf32>
      %13 = vector.shape_cast %12 : vector<1x64x4096xf32> to vector<64x4096xf32>
      %c0_6 = arith.constant 0 : index
      %c0_7 = arith.constant 0 : index
      %14 = vector.load %arg11[%c0_6, %c0_7] : memref<64x1xf32, #tpu.memory_space<vmem>>, vector<64x1xf32>
      %15 = vector.broadcast %14 : vector<64x1xf32> to vector<64x4096xf32>
      %16 = arith.mulf %13, %15 : vector<64x4096xf32>
      %17 = vector.shape_cast %16 : vector<64x4096xf32> to vector<1x64x4096xf32>
      %c0_8 = arith.constant 0 : index
      %c0_9 = arith.constant 0 : index
      %c0_10 = arith.constant 0 : index
      %18 = vector.load %arg8[%c0_8, %c0_9, %c0_10] : memref<1x64x4096xf32, #tpu.memory_space<vmem>>, vector<1x64x4096xf32>
      tpu.vector_store %arg8[%c0_8, %c0_9, %c0_10], %17 {strides = array<i32>} : memref<1x64x4096xf32, #tpu.memory_space<vmem>>, vector<1x64x4096xf32>,
    } else {
    }
    return
  }
  func.func @transform_0(%arg0: i32, %arg1: i32, %arg2: i32) -> (i32, i32, i32) {
    %c0_i32 = arith.constant 0 : i32
    %0 = arith.cmpi eq, %arg1, %c0_i32 : i32
    %c0_i32_0 = arith.constant 0 : i32
    %1 = arith.select %0, %arg2, %c0_i32_0 : i32
    %c0_i32_1 = arith.constant 0 : i32
    %c0_i32_2 = arith.constant 0 : i32
    return %arg0, %c0_i32_1, %1 : i32, i32, i32
  }
  func.func @transform_1(%arg0: i32, %arg1: i32, %arg2: i32) -> (i32, i32) {
    %c0_i32 = arith.constant 0 : i32
    %c0_i32_0 = arith.constant 0 : i32
    %c0_i32_1 = arith.constant 0 : i32
    return %c0_i32, %c0_i32_0 : i32, i32
  }
  func.func @transform_2(%arg0: i32, %arg1: i32, %arg2: i32) -> (i32, i32) {
    %c0_i32 = arith.constant 0 : i32
    %c0_i32_0 = arith.constant 0 : i32
    %c0_i32_1 = arith.constant 0 : i32
    return %c0_i32, %c0_i32_0 : i32, i32
  }
  func.func @transform_3(%arg0: i32, %arg1: i32, %arg2: i32) -> (i32, i32) {
    %c0_i32 = arith.constant 0 : i32
    %c0_i32_0 = arith.constant 0 : i32
    %c0_i32_1 = arith.constant 0 : i32
    return %c0_i32, %c0_i32_0 : i32, i32
  }
  func.func @transform_4(%arg0: i32, %arg1: i32, %arg2: i32) -> (i32, i32) {
    %c0_i32 = arith.constant 0 : i32
    %c0_i32_0 = arith.constant 0 : i32
    %c0_i32_1 = arith.constant 0 : i32
    return %c0_i32, %c0_i32_0 : i32, i32
  }
  func.func @transform_5(%arg0: i32, %arg1: i32, %arg2: i32) -> (i32, i32, i32) {
    %c0_i32 = arith.constant 0 : i32
    %0 = arith.cmpi eq, %arg1, %c0_i32 : i32
    %c0_i32_0 = arith.constant 0 : i32
    %1 = arith.select %0, %c0_i32_0, %arg2 : i32
    %c0_i32_1 = arith.constant 0 : i32
    %c0_i32_2 = arith.constant 0 : i32
    return %arg0, %c0_i32_1, %1 : i32, i32, i32
  }
}

</mosaic_0001>

<llo_original>
// kernel: tpu_custom_call.1
$region0: #{tpu_custom_call.1}
  #allocation0 [shape = 'u32[]', space=smem, size = 0x4, offset = 0x4, fixed_abs, tag = 'smem constant byte address 0x4 - core index']
  #allocation1 [shape = 'u32[144,128]{1,0:T(1,128)}', space=vmem, size = 0x12000, scoped, tag = 'internal scratch']
  #allocation2 [shape = 'f32[1,64,4096]{2,1,0:T(8,128)}', space=vmem, size = 0x100000, scoped, tag = 'scratch operand']
  #allocation3 [shape = 'f32[64,128]{1,0:T(8,128)}', space=vmem, size = 0x8000, scoped, tag = 'scratch operand']
  #allocation4 [shape = 'f32[64,1]{1,0:T(8,128)}', space=vmem, size = 0x8000, scoped, tag = 'scratch operand']
  %s0 = inlined_call_operand.hbm [shape: f32[2,64,4096], index: 0, kind: input, shape index: {}]
  %s1 = inlined_call_operand.vmem [shape: f32[64,4], index: 1, kind: input, shape index: {}]
  %s2 = inlined_call_operand.hbm [shape: f32[1,4], index: 2, kind: input, shape index: {}]
  %s3 = inlined_call_operand.vmem [shape: f32[64,4], index: 3, kind: input, shape index: {}]
  %s4 = inlined_call_operand.vmem [shape: f32[64,1], index: 4, kind: input, shape index: {}]
  %s5 = inlined_call_operand.hbm [shape: f32[2,64,4096], index: 5, kind: output, shape index: {}]
  %s6 = sld [smem:[#allocation0]]
  $region77: #{tpu_custom_call.1} parent=0
    _
  %s8 = ssub.s32 1, %s6
  %s9 = scalar_select 0, %s8, %s6
  $region1: #{tpu_custom_call.1} parent=0
    #allocation5 [shape = 'u8[2097152]{0}', space=vmem, size = 0x200000, scoped, tag = 'input window, operand 0']
    #allocation6 [shape = 's32[2]{0}', space=sflag, size = 0x8, scoped, tag = 'scoped memory for tpu_custom_call.1']
    #allocation7 [shape = 's32[2]{0}', space=sflag, size = 0x8, scoped, tag = 'scoped memory for tpu_custom_call.1']
    #allocation8 [shape = 'u8[512]{0}', space=vmem, size = 0x400, scoped, tag = 'input window, operand 2, single buffered']
    #allocation9 [shape = 's32[1]{0}', space=sflag, size = 0x4, scoped, tag = 'scoped memory for tpu_custom_call.1']
    #allocation10 [shape = 'u8[2097152]{0}', space=vmem, size = 0x200000, scoped, tag = 'output window, operand 0']
    %10 = vsyncpa [#allocation6], 0
    %s11 = scalar_lea.sflag [#allocation6], 1
    %12 = vsyncpa %s11, 0
    %13 = vsyncpa [#allocation9], 0
    %14 = vsyncpa [#allocation7], 0
    %s15 = scalar_lea.sflag [#allocation7], 1
    %16 = vsyncpa %s15, 0
    loop: start=0, step=1, limit=6
    $region2: #{tpu_custom_call.1} parent=1 // loop_pre_header
      _
    $region3: #{tpu_custom_call.1} parent=1 // loop_header
      %s18 = sphi 0, %s22
      %p19 = scmp.ge.s32.totalorder %s18, 6
      %s25 = sphi 0, %s44
      %s26 = sphi 0, %s40
      %s27 = sphi 0, %s36
      %s28 = sphi 0, %s25
      %s29 = sphi 0, %s26
      %s30 = sphi 0, %s27
      %s31 = sphi 0, %s28
      %s32 = sphi 0, %s29
      %s33 = sphi 0, %s30
      %s53 = sphi 0, %s55
      %s56 = sphi 0, %s53
      %s57 = sphi 0, %s56
      %s73 = sphi 0, %s57
      %s77 = sphi 0, %s77
      %s79 = sphi 0, %s77
      %s80 = sphi 0, %s79
      %s94 = sphi 0, %s80
      %s98 = sphi 0, %s98
      %s100 = sphi 0, %s98
      %s101 = sphi 0, %s100
      %s115 = sphi 0, %s101
      %s119 = sphi 0, %s119
      %s121 = sphi 0, %s119
      %s122 = sphi 0, %s121
      %s136 = sphi 0, %s122
      %s140 = sphi 0, %s140
      %s142 = sphi 0, %s140
      %s143 = sphi 0, %s142
      %s157 = sphi 0, %s143
      %s169 = sphi 0, %s171
      %s172 = sphi 0, %s169
      %s173 = sphi 0, %s172
      %s189 = sphi 0, %s173
    $region4: #{tpu_custom_call.1} parent=1 // loop_header_branch
      %21 = sbr.rel (%p19) target = $region8
    $region5: #{tpu_custom_call.1} parent=1 // loop_body
      %s23 = ssub.s32 %s18, 1
      %s24 = ssub.s32 %s18, 2
      %s34 = sadd.s32 1, %s27
      %p35 = scmp.ge.s32.totalorder %s34, 1
      %s36 = scalar_select %p35, 0, %s34
      %s37 = sadd.s32 1, %s26
      %s38 = scalar_select %p35, %s37, %s26
      %p39 = scmp.ge.s32.totalorder %s38, 2
      %s40 = scalar_select %p39, 0, %s38
      %s41 = sadd.s32 1, %s25
      %s42 = scalar_select %p39, %s41, %s25
      %p43 = scmp.ge.s32.totalorder %s42, 2
      %s44 = scalar_select %p43, 0, %s42
      %p45 = scmp.eq.s32.totalorder %s26, 0
      %s46 = scalar_select %p45, %s27, 0
      %p47 = scmp.eq.s32.totalorder %s40, 0
      %s48 = scalar_select %p47, %s36, 0
      %s49 = ssub.s32 %s25, %s44
      %s50 = ssub.s32 %s46, %s48
      %s51 = sor.u32 %s49, %s50
      %p52 = scmp.eq.s32.totalorder %s51, 0
      %s54 = sadd.s32 %s53, 1
      %s55 = scalar_select %p52, %s53, %s54
      %p58 = pneg %p52
      %p59 = scmp.eq.s32.totalorder %s18, 3
      %p60 = por %p58, %p59
      %p61 = scmp.ne.s32.totalorder %s53, %s56
      %p62 = scmp.eq.s32.totalorder %s18, 0
      %p63 = por %p61, %p62
      %p64 = scmp.ne.s32.totalorder %s53, %s56
      %p65 = scmp.eq.s32.totalorder %s23, 3
      %p66 = por %p64, %p65
      %p67 = scmp.ne.s32.totalorder %s56, %s57
      %p68 = scmp.eq.s32.totalorder %s23, 0
      %p69 = por %p67, %p68
      %p70 = scmp.ne.s32.totalorder %s56, %s57
      %p71 = scmp.eq.s32.totalorder %s24, 3
      %p72 = por %p70, %p71
      %p74 = scmp.ne.s32.totalorder %s57, %s73
      %p75 = scmp.eq.s32.totalorder %s24, 0
      %p76 = por %p74, %p75
      %s78 = sadd.s32 %s77, 1
      %p81 = scmp.eq.s32.totalorder %s18, 3
      %p82 = scmp.ne.s32.totalorder %s77, %s79
      %p83 = scmp.eq.s32.totalorder %s18, 0
      %p84 = por %p82, %p83
      %p85 = scmp.ne.s32.totalorder %s77, %s79
      %p86 = scmp.eq.s32.totalorder %s23, 3
      %p87 = por %p85, %p86
      %p88 = scmp.ne.s32.totalorder %s79, %s80
      %p89 = scmp.eq.s32.totalorder %s23, 0
      %p90 = por %p88, %p89
      %p91 = scmp.ne.s32.totalorder %s79, %s80
      %p92 = scmp.eq.s32.totalorder %s24, 3
      %p93 = por %p91, %p92
      %p95 = scmp.ne.s32.totalorder %s80, %s94
      %p96 = scmp.eq.s32.totalorder %s24, 0
      %p97 = por %p95, %p96
      %s99 = sadd.s32 %s98, 1
      %p102 = scmp.eq.s32.totalorder %s18, 3
      %p103 = scmp.ne.s32.totalorder %s98, %s100
      %p104 = scmp.eq.s32.totalorder %s18, 0
      %p105 = por %p103, %p104
      %p106 = scmp.ne.s32.totalorder %s98, %s100
      %p107 = scmp.eq.s32.totalorder %s23, 3
      %p108 = por %p106, %p107
      %p109 = scmp.ne.s32.totalorder %s100, %s101
      %p110 = scmp.eq.s32.totalorder %s23, 0
      %p111 = por %p109, %p110
      %p112 = scmp.ne.s32.totalorder %s100, %s101
      %p113 = scmp.eq.s32.totalorder %s24, 3
      %p114 = por %p112, %p113
      %p116 = scmp.ne.s32.totalorder %s101, %s115
      %p117 = scmp.eq.s32.totalorder %s24, 0
      %p118 = por %p116, %p117
      %s120 = sadd.s32 %s119, 1
      %p123 = scmp.eq.s32.totalorder %s18, 3
      %p124 = scmp.ne.s32.totalorder %s119, %s121
      %p125 = scmp.eq.s32.totalorder %s18, 0
      %p126 = por %p124, %p125
      %p127 = scmp.ne.s32.totalorder %s119, %s121
      %p128 = scmp.eq.s32.totalorder %s23, 3
      %p129 = por %p127, %p128
      %p130 = scmp.ne.s32.totalorder %s121, %s122
      %p131 = scmp.eq.s32.totalorder %s23, 0
      %p132 = por %p130, %p131
      %p133 = scmp.ne.s32.totalorder %s121, %s122
      %p134 = scmp.eq.s32.totalorder %s24, 3
      %p135 = por %p133, %p134
      %p137 = scmp.ne.s32.totalorder %s122, %s136
      %p138 = scmp.eq.s32.totalorder %s24, 0
      %p139 = por %p137, %p138
      %s141 = sadd.s32 %s140, 1
      %p144 = scmp.eq.s32.totalorder %s18, 3
      %p145 = scmp.ne.s32.totalorder %s140, %s142
      %p146 = scmp.eq.s32.totalorder %s18, 0
      %p147 = por %p145, %p146
      %p148 = scmp.ne.s32.totalorder %s140, %s142
      %p149 = scmp.eq.s32.totalorder %s23, 3
      %p150 = por %p148, %p149
      %p151 = scmp.ne.s32.totalorder %s142, %s143
      %p152 = scmp.eq.s32.totalorder %s23, 0
      %p153 = por %p151, %p152
      %p154 = scmp.ne.s32.totalorder %s142, %s143
      %p155 = scmp.eq.s32.totalorder %s24, 3
      %p156 = por %p154, %p155
      %p158 = scmp.ne.s32.totalorder %s143, %s157
      %p159 = scmp.eq.s32.totalorder %s24, 0
      %p160 = por %p158, %p159
      %p161 = scmp.eq.s32.totalorder %s26, 0
      %s162 = scalar_select %p161, 0, %s27
      %p163 = scmp.eq.s32.totalorder %s40, 0
      %s164 = scalar_select %p163, 0, %s36
      %s165 = ssub.s32 %s25, %s44
      %s166 = ssub.s32 %s162, %s164
      %s167 = sor.u32 %s165, %s166
      %p168 = scmp.eq.s32.totalorder %s167, 0
      %s170 = sadd.s32 %s169, 1
      %s171 = scalar_select %p168, %s169, %s170
      %p174 = pneg %p168
      %p175 = scmp.eq.s32.totalorder %s18, 3
      %p176 = por %p174, %p175
      %p177 = scmp.ne.s32.totalorder %s169, %s172
      %p178 = scmp.eq.s32.totalorder %s18, 0
      %p179 = por %p177, %p178
      %p180 = scmp.ne.s32.totalorder %s169, %s172
      %p181 = scmp.eq.s32.totalorder %s23, 3
      %p182 = por %p180, %p181
      %p183 = scmp.ne.s32.totalorder %s172, %s173
      %p184 = scmp.eq.s32.totalorder %s23, 0
      %p185 = por %p183, %p184
      %p186 = scmp.ne.s32.totalorder %s172, %s173
      %p187 = scmp.eq.s32.totalorder %s24, 3
      %p188 = por %p186, %p187
      %p190 = scmp.ne.s32.totalorder %s173, %s189
      %p191 = scmp.eq.s32.totalorder %s24, 0
      %p192 = por %p190, %p191
      %p193 = scmp.le.s32.totalorder 1, %s18
      %p194 = scmp.lt.s32.totalorder %s18, 5
      %p195 = pnand %p193, %p194
      %p196 = pneg %p195
      // Predicated region
      $region9: #{tpu_custom_call.1} parent=5 // pred_check
        _
      $region10: #{tpu_custom_call.1} parent=5 // pred_check_branch
        %198 = sbr.rel (%p195) target = $region12
      $region11: #{tpu_custom_call.1} parent=5 // pred_region
        %s199 = ssub.s32 %s18, 1
        // Predicated region
        $region13: #{tpu_custom_call.1} parent=11 // pred_check
          %p200 = pneg %p90
        $region14: #{tpu_custom_call.1} parent=11 // pred_check_branch
          %202 = sbr.rel (%p200) target = $region16
        $region15: #{tpu_custom_call.1} parent=11 // pred_region
          _
        $region16: #{tpu_custom_call.1} parent=11 // pred_fallthru
          _
        // Predicated region
        $region17: #{tpu_custom_call.1} parent=11 // pred_check
          %p203 = pneg %p111
        $region18: #{tpu_custom_call.1} parent=11 // pred_check_branch
          %205 = sbr.rel (%p203) target = $region20
        $region19: #{tpu_custom_call.1} parent=11 // pred_region
          %s207 = ssub.s32 16, 16
          %208 = vsyncadd [#allocation9], %s207
          %s210 = sshll.u32 [#allocation8], 4
          %s211 = int_to_ptr.vmem [resolvable:$true] %s210
          %213 = dma.hbm_to_vmem [thread:$0]  %s2, 16, %s211, [#allocation9]
        $region20: #{tpu_custom_call.1} parent=11 // pred_fallthru
          _
        // Predicated region
        $region21: #{tpu_custom_call.1} parent=11 // pred_check
          %p214 = pneg %p132
        $region22: #{tpu_custom_call.1} parent=11 // pred_check_branch
          %216 = sbr.rel (%p214) target = $region24
        $region23: #{tpu_custom_call.1} parent=11 // pred_region
          _
        $region24: #{tpu_custom_call.1} parent=11 // pred_fallthru
          _
        // Predicated region
        $region25: #{tpu_custom_call.1} parent=11 // pred_check
          %p217 = pneg %p153
        $region26: #{tpu_custom_call.1} parent=11 // pred_check_branch
          %219 = sbr.rel (%p217) target = $region28
        $region27: #{tpu_custom_call.1} parent=11 // pred_region
          _
        $region28: #{tpu_custom_call.1} parent=11 // pred_fallthru
          _
      $region12: #{tpu_custom_call.1} parent=5 // pred_fallthru
        _
      %p220 = scmp.lt.s32.totalorder %s18, 4
      // Predicated region
      $region29: #{tpu_custom_call.1} parent=5 // pred_check
        %p221 = pneg %p220
      $region30: #{tpu_custom_call.1} parent=5 // pred_check_branch
        %223 = sbr.rel (%p221) target = $region32
      $region31: #{tpu_custom_call.1} parent=5 // pred_region
        // Predicated region
        $region33: #{tpu_custom_call.1} parent=31 // pred_check
          %p224 = pneg %p63
        $region34: #{tpu_custom_call.1} parent=31 // pred_check_branch
          %226 = sbr.rel (%p224) target = $region36
        $region35: #{tpu_custom_call.1} parent=31 // pred_region
          %s227 = sand.u32 %s53, 1
          %s228 = scalar_lea.sflag [#allocation6], %s227
          %s229 = sand.u32 %s53, 1
          %s230 = smul.addr %s229, 2048
          %s231 = scalar_lea.vmem [#allocation5], %s230
          %p232 = scmp.eq.s32.totalorder %s26, 0
          %s233 = scalar_select %p232, %s27, 0
          %s234 = smul.u32 32, %s233
          %s236 = ssub.s32 32768, 32768
          %237 = vsyncadd %s228, %s236
          %s238 = smul.addr %s25, 256
          %s239 = sadd.s32 %s234, %s238
          %s240 = smul.addr %s239, 128
          %s241 = scalar_lea.hbm %s0, %s240
          %s242 = sshll.u32 %s231, 4
          %s243 = int_to_ptr.vmem [resolvable:$true] %s242
          %248 = dma.hbm_to_vmem [thread:$0]  %s241, 32768, %s243, %s228, 4096, 4096, 256
        $region36: #{tpu_custom_call.1} parent=31 // pred_fallthru
          _
      $region32: #{tpu_custom_call.1} parent=5 // pred_fallthru
        _
      %p249 = scmp.le.s32.totalorder 1, %s18
      %p250 = scmp.lt.s32.totalorder %s18, 5
      %p251 = pnand %p249, %p250
      %p252 = pneg %p251
      // Predicated region
      $region37: #{tpu_custom_call.1} parent=5 // pred_check
        _
      $region38: #{tpu_custom_call.1} parent=5 // pred_check_branch
        %254 = sbr.rel (%p251) target = $region40
      $region39: #{tpu_custom_call.1} parent=5 // pred_region
        %s255 = ssub.s32 %s18, 1
        %s256 = sand.u32 %s56, 1
        %s257 = scalar_lea.sflag [#allocation6], %s256
        %s258 = sand.u32 %s56, 1
        %s259 = smul.addr %s258, 2048
        %s260 = scalar_lea.vmem [#allocation5], %s259
        // Predicated region
        $region41: #{tpu_custom_call.1} parent=39 // pred_check
          %p261 = pneg %p69
        $region42: #{tpu_custom_call.1} parent=39 // pred_check_branch
          %263 = sbr.rel (%p261) target = $region44
        $region43: #{tpu_custom_call.1} parent=39 // pred_region
          %264 = dma.done %s257, 32768
        $region44: #{tpu_custom_call.1} parent=39 // pred_fallthru
          _
        // Predicated region
        $region45: #{tpu_custom_call.1} parent=39 // pred_check
          %p265 = pneg %p111
        $region46: #{tpu_custom_call.1} parent=39 // pred_check_branch
          %267 = sbr.rel (%p265) target = $region48
        $region47: #{tpu_custom_call.1} parent=39 // pred_region
          %268 = dma.done [#allocation9], 16
        $region48: #{tpu_custom_call.1} parent=39 // pred_fallthru
          _
        %s269 = sand.u32 %s56, 1
        %s270 = scalar_lea.sflag [#allocation6], %s269
        %s271 = sand.u32 %s56, 1
        %s272 = smul.addr %s271, 2048
        %s273 = scalar_lea.vmem [#allocation5], %s272
        %p274 = pneg %p69
        %p275 = pneg %p66
        %p276 = pneg %p90
        %p277 = pneg %p87
        %p278 = pneg %p111
        %p279 = pneg %p108
        %p280 = pneg %p132
        %p281 = pneg %p129
        %p282 = pneg %p153
        %p283 = pneg %p150
        %p284 = pneg %p185
        %p285 = pneg %p182
        %s286 = sand.u32 %s172, 1
        %s287 = scalar_lea.sflag [#allocation7], %s286
        %s288 = sand.u32 %s172, 1
        %s289 = smul.addr %s288, 2048
        %s290 = scalar_lea.vmem [#allocation10], %s289
        %p291 = scmp.eq.s32.totalorder %s29, 0
        %s292 = scalar_select %p291, %s30, 0
        %s293 = smul.u32 32, %s292
        %p294 = scmp.eq.s32.totalorder %s29, 0
        %s295 = scalar_select %p294, 0, %s30
        %s296 = smul.u32 32, %s295
        %p297 = scmp.eq.s32.totalorder %s29, 0
        %p298 = scmp.eq.s32.totalorder %s30, 0
        %p299 = pnand %p297, %p298
        %p300 = pneg %p299
        // Predicated region
        $region49: #{tpu_custom_call.1} parent=39 // pred_check
          _
        $region50: #{tpu_custom_call.1} parent=39 // pred_check_branch
          %302 = sbr.rel (%p299) target = $region52
        $region51: #{tpu_custom_call.1} parent=39 // pred_region
          %303 = vst [vmem:[#allocation3] sm:$0xff] 0.0
          %304 = vst [vmem:[#allocation3 + $0x8] sm:$0xff] 0.0
          %305 = vst [vmem:[#allocation3 + $0x10] sm:$0xff] 0.0
          %306 = vst [vmem:[#allocation3 + $0x18] sm:$0xff] 0.0
          %307 = vst [vmem:[#allocation3 + $0x20] sm:$0xff] 0.0
          %308 = vst [vmem:[#allocation3 + $0x28] sm:$0xff] 0.0
          %309 = vst [vmem:[#allocation3 + $0x30] sm:$0xff] 0.0
          %310 = vst [vmem:[#allocation3 + $0x38] sm:$0xff] 0.0
        $region52: #{tpu_custom_call.1} parent=39 // pred_fallthru
          _
        // Predicated region
        $region53: #{tpu_custom_call.1} parent=39 // pred_check
          %p311 = pneg %p297
        $region54: #{tpu_custom_call.1} parent=39 // pred_check_branch
          %313 = sbr.rel (%p311) target = $region56
        $region55: #{tpu_custom_call.1} parent=39 // pred_region
          %v314 = vld [vmem:[%s260] sm:$0xff]
          %v315 = vld [vmem:[%s260 + $0x8] sm:$0xff]
          %v316 = vld [vmem:[%s260 + $0x10] sm:$0xff]
          %v317 = vld [vmem:[%s260 + $0x18] sm:$0xff]
          %v318 = vld [vmem:[%s260 + $0x20] sm:$0xff]
          %v319 = vld [vmem:[%s260 + $0x28] sm:$0xff]
          %v320 = vld [vmem:[%s260 + $0x30] sm:$0xff]
          %v321 = vld [vmem:[%s260 + $0x38] sm:$0xff]
          %v322 = vld [vmem:[%s260 + $0x40] sm:$0xff]
          %v323 = vld [vmem:[%s260 + $0x48] sm:$0xff]
          %v324 = vld [vmem:[%s260 + $0x50] sm:$0xff]
          %v325 = vld [vmem:[%s260 + $0x58] sm:$0xff]
          %v326 = vld [vmem:[%s260 + $0x60] sm:$0xff]
          %v327 = vld [vmem:[%s260 + $0x68] sm:$0xff]
          %v328 = vld [vmem:[%s260 + $0x70] sm:$0xff]
          %v329 = vld [vmem:[%s260 + $0x78] sm:$0xff]
          %v330 = vld [vmem:[%s260 + $0x80] sm:$0xff]
          %v331 = vld [vmem:[%s260 + $0x88] sm:$0xff]
          %v332 = vld [vmem:[%s260 + $0x90] sm:$0xff]
          %v333 = vld [vmem:[%s260 + $0x98] sm:$0xff]
          %v334 = vld [vmem:[%s260 + $0xa0] sm:$0xff]
          %v335 = vld [vmem:[%s260 + $0xa8] sm:$0xff]
          %v336 = vld [vmem:[%s260 + $0xb0] sm:$0xff]
          %v337 = vld [vmem:[%s260 + $0xb8] sm:$0xff]
          %v338 = vld [vmem:[%s260 + $0xc0] sm:$0xff]
          %v339 = vld [vmem:[%s260 + $0xc8] sm:$0xff]
          %v340 = vld [vmem:[%s260 + $0xd0] sm:$0xff]
          %v341 = vld [vmem:[%s260 + $0xd8] sm:$0xff]
          %v342 = vld [vmem:[%s260 + $0xe0] sm:$0xff]
          %v343 = vld [vmem:[%s260 + $0xe8] sm:$0xff]
          %v344 = vld [vmem:[%s260 + $0xf0] sm:$0xff]
          %v345 = vld [vmem:[%s260 + $0xf8] sm:$0xff]
          %v346 = vld [vmem:[%s260 + $0x100] sm:$0xff]
          %v347 = vld [vmem:[%s260 + $0x108] sm:$0xff]
          %v348 = vld [vmem:[%s260 + $0x110] sm:$0xff]
          %v349 = vld [vmem:[%s260 + $0x118] sm:$0xff]
          %v350 = vld [vmem:[%s260 + $0x120] sm:$0xff]
          %v351 = vld [vmem:[%s260 + $0x128] sm:$0xff]
          %v352 = vld [vmem:[%s260 + $0x130] sm:$0xff]
          %v353 = vld [vmem:[%s260 + $0x138] sm:$0xff]
          %v354 = vld [vmem:[%s260 + $0x140] sm:$0xff]
          %v355 = vld [vmem:[%s260 + $0x148] sm:$0xff]
          %v356 = vld [vmem:[%s260 + $0x150] sm:$0xff]
          %v357 = vld [vmem:[%s260 + $0x158] sm:$0xff]
          %v358 = vld [vmem:[%s260 + $0x160] sm:$0xff]
          %v359 = vld [vmem:[%s260 + $0x168] sm:$0xff]
          %v360 = vld [vmem:[%s260 + $0x170] sm:$0xff]
          %v361 = vld [vmem:[%s260 + $0x178] sm:$0xff]
          %v362 = vld [vmem:[%s260 + $0x180] sm:$0xff]
          %v363 = vld [vmem:[%s260 + $0x188] sm:$0xff]
          %v364 = vld [vmem:[%s260 + $0x190] sm:$0xff]
          %v365 = vld [vmem:[%s260 + $0x198] sm:$0xff]
          %v366 = vld [vmem:[%s260 + $0x1a0] sm:$0xff]
          %v367 = vld [vmem:[%s260 + $0x1a8] sm:$0xff]
          %v368 = vld [vmem:[%s260 + $0x1b0] sm:$0xff]
          %v369 = vld [vmem:[%s260 + $0x1b8] sm:$0xff]
          %v370 = vld [vmem:[%s260 + $0x1c0] sm:$0xff]
          %v371 = vld [vmem:[%s260 + $0x1c8] sm:$0xff]
          %v372 = vld [vmem:[%s260 + $0x1d0] sm:$0xff]
          %v373 = vld [vmem:[%s260 + $0x1d8] sm:$0xff]
          %v374 = vld [vmem:[%s260 + $0x1e0] sm:$0xff]
          %v375 = vld [vmem:[%s260 + $0x1e8] sm:$0xff]
          %v376 = vld [vmem:[%s260 + $0x1f0] sm:$0xff]
          %v377 = vld [vmem:[%s260 + $0x1f8] sm:$0xff]
          %v378 = vld [vmem:[%s260 + $0x200] sm:$0xff]
          %v379 = vld [vmem:[%s260 + $0x208] sm:$0xff]
          %v380 = vld [vmem:[%s260 + $0x210] sm:$0xff]
          %v381 = vld [vmem:[%s260 + $0x218] sm:$0xff]
          %v382 = vld [vmem:[%s260 + $0x220] sm:$0xff]
          %v383 = vld [vmem:[%s260 + $0x228] sm:$0xff]
          %v384 = vld [vmem:[%s260 + $0x230] sm:$0xff]
          %v385 = vld [vmem:[%s260 + $0x238] sm:$0xff]
          %v386 = vld [vmem:[%s260 + $0x240] sm:$0xff]
          %v387 = vld [vmem:[%s260 + $0x248] sm:$0xff]
          %v388 = vld [vmem:[%s260 + $0x250] sm:$0xff]
          %v389 = vld [vmem:[%s260 + $0x258] sm:$0xff]
          %v390 = vld [vmem:[%s260 + $0x260] sm:$0xff]
          %v391 = vld [vmem:[%s260 + $0x268] sm:$0xff]
          %v392 = vld [vmem:[%s260 + $0x270] sm:$0xff]
          %v393 = vld [vmem:[%s260 + $0x278] sm:$0xff]
          %v394 = vld [vmem:[%s260 + $0x280] sm:$0xff]
          %v395 = vld [vmem:[%s260 + $0x288] sm:$0xff]
          %v396 = vld [vmem:[%s260 + $0x290] sm:$0xff]
          %v397 = vld [vmem:[%s260 + $0x298] sm:$0xff]
          %v398 = vld [vmem:[%s260 + $0x2a0] sm:$0xff]
          %v399 = vld [vmem:[%s260 + $0x2a8] sm:$0xff]
          %v400 = vld [vmem:[%s260 + $0x2b0] sm:$0xff]
          %v401 = vld [vmem:[%s260 + $0x2b8] sm:$0xff]
          %v402 = vld [vmem:[%s260 + $0x2c0] sm:$0xff]
          %v403 = vld [vmem:[%s260 + $0x2c8] sm:$0xff]
          %v404 = vld [vmem:[%s260 + $0x2d0] sm:$0xff]
          %v405 = vld [vmem:[%s260 + $0x2d8] sm:$0xff]
          %v406 = vld [vmem:[%s260 + $0x2e0] sm:$0xff]
          %v407 = vld [vmem:[%s260 + $0x2e8] sm:$0xff]
          %v408 = vld [vmem:[%s260 + $0x2f0] sm:$0xff]
          %v409 = vld [vmem:[%s260 + $0x2f8] sm:$0xff]
          %v410 = vld [vmem:[%s260 + $0x300] sm:$0xff]
          %v411 = vld [vmem:[%s260 + $0x308] sm:$0xff]
          %v412 = vld [vmem:[%s260 + $0x310] sm:$0xff]
          %v413 = vld [vmem:[%s260 + $0x318] sm:$0xff]
          %v414 = vld [vmem:[%s260 + $0x320] sm:$0xff]
          %v415 = vld [vmem:[%s260 + $0x328] sm:$0xff]
          %v416 = vld [vmem:[%s260 + $0x330] sm:$0xff]
          %v417 = vld [vmem:[%s260 + $0x338] sm:$0xff]
          %v418 = vld [vmem:[%s260 + $0x340] sm:$0xff]
          %v419 = vld [vmem:[%s260 + $0x348] sm:$0xff]
          %v420 = vld [vmem:[%s260 + $0x350] sm:$0xff]
          %v421 = vld [vmem:[%s260 + $0x358] sm:$0xff]
          %v422 = vld [vmem:[%s260 + $0x360] sm:$0xff]
          %v423 = vld [vmem:[%s260 + $0x368] sm:$0xff]
          %v424 = vld [vmem:[%s260 + $0x370] sm:$0xff]
          %v425 = vld [vmem:[%s260 + $0x378] sm:$0xff]
          %v426 = vld [vmem:[%s260 + $0x380] sm:$0xff]
          %v427 = vld [vmem:[%s260 + $0x388] sm:$0xff]
          %v428 = vld [vmem:[%s260 + $0x390] sm:$0xff]
          %v429 = vld [vmem:[%s260 + $0x398] sm:$0xff]
          %v430 = vld [vmem:[%s260 + $0x3a0] sm:$0xff]
          %v431 = vld [vmem:[%s260 + $0x3a8] sm:$0xff]
          %v432 = vld [vmem:[%s260 + $0x3b0] sm:$0xff]
          %v433 = vld [vmem:[%s260 + $0x3b8] sm:$0xff]
          %v434 = vld [vmem:[%s260 + $0x3c0] sm:$0xff]
          %v435 = vld [vmem:[%s260 + $0x3c8] sm:$0xff]
          %v436 = vld [vmem:[%s260 + $0x3d0] sm:$0xff]
          %v437 = vld [vmem:[%s260 + $0x3d8] sm:$0xff]
          %v438 = vld [vmem:[%s260 + $0x3e0] sm:$0xff]
          %v439 = vld [vmem:[%s260 + $0x3e8] sm:$0xff]
          %v440 = vld [vmem:[%s260 + $0x3f0] sm:$0xff]
          %v441 = vld [vmem:[%s260 + $0x3f8] sm:$0xff]
          %v442 = vld [vmem:[%s260 + $0x400] sm:$0xff]
          %v443 = vld [vmem:[%s260 + $0x408] sm:$0xff]
          %v444 = vld [vmem:[%s260 + $0x410] sm:$0xff]
          %v445 = vld [vmem:[%s260 + $0x418] sm:$0xff]
          %v446 = vld [vmem:[%s260 + $0x420] sm:$0xff]
          %v447 = vld [vmem:[%s260 + $0x428] sm:$0xff]
          %v448 = vld [vmem:[%s260 + $0x430] sm:$0xff]
          %v449 = vld [vmem:[%s260 + $0x438] sm:$0xff]
          %v450 = vld [vmem:[%s260 + $0x440] sm:$0xff]
          %v451 = vld [vmem:[%s260 + $0x448] sm:$0xff]
          %v452 = vld [vmem:[%s260 + $0x450] sm:$0xff]
          %v453 = vld [vmem:[%s260 + $0x458] sm:$0xff]
          %v454 = vld [vmem:[%s260 + $0x460] sm:$0xff]
          %v455 = vld [vmem:[%s260 + $0x468] sm:$0xff]
          %v456 = vld [vmem:[%s260 + $0x470] sm:$0xff]
          %v457 = vld [vmem:[%s260 + $0x478] sm:$0xff]
          %v458 = vld [vmem:[%s260 + $0x480] sm:$0xff]
          %v459 = vld [vmem:[%s260 + $0x488] sm:$0xff]
          %v460 = vld [vmem:[%s260 + $0x490] sm:$0xff]
          %v461 = vld [vmem:[%s260 + $0x498] sm:$0xff]
          %v462 = vld [vmem:[%s260 + $0x4a0] sm:$0xff]
          %v463 = vld [vmem:[%s260 + $0x4a8] sm:$0xff]
          %v464 = vld [vmem:[%s260 + $0x4b0] sm:$0xff]
          %v465 = vld [vmem:[%s260 + $0x4b8] sm:$0xff]
          %v466 = vld [vmem:[%s260 + $0x4c0] sm:$0xff]
          %v467 = vld [vmem:[%s260 + $0x4c8] sm:$0xff]
          %v468 = vld [vmem:[%s260 + $0x4d0] sm:$0xff]
          %v469 = vld [vmem:[%s260 + $0x4d8] sm:$0xff]
          %v470 = vld [vmem:[%s260 + $0x4e0] sm:$0xff]
          %v471 = vld [vmem:[%s260 + $0x4e8] sm:$0xff]
          %v472 = vld [vmem:[%s260 + $0x4f0] sm:$0xff]
          %v473 = vld [vmem:[%s260 + $0x4f8] sm:$0xff]
          %v474 = vld [vmem:[%s260 + $0x500] sm:$0xff]
          %v475 = vld [vmem:[%s260 + $0x508] sm:$0xff]
          %v476 = vld [vmem:[%s260 + $0x510] sm:$0xff]
          %v477 = vld [vmem:[%s260 + $0x518] sm:$0xff]
          %v478 = vld [vmem:[%s260 + $0x520] sm:$0xff]
          %v479 = vld [vmem:[%s260 + $0x528] sm:$0xff]
          %v480 = vld [vmem:[%s260 + $0x530] sm:$0xff]
          %v481 = vld [vmem:[%s260 + $0x538] sm:$0xff]
          %v482 = vld [vmem:[%s260 + $0x540] sm:$0xff]
          %v483 = vld [vmem:[%s260 + $0x548] sm:$0xff]
          %v484 = vld [vmem:[%s260 + $0x550] sm:$0xff]
          %v485 = vld [vmem:[%s260 + $0x558] sm:$0xff]
          %v486 = vld [vmem:[%s260 + $0x560] sm:$0xff]
          %v487 = vld [vmem:[%s260 + $0x568] sm:$0xff]
          %v488 = vld [vmem:[%s260 + $0x570] sm:$0xff]
          %v489 = vld [vmem:[%s260 + $0x578] sm:$0xff]
          %v490 = vld [vmem:[%s260 + $0x580] sm:$0xff]
          %v491 = vld [vmem:[%s260 + $0x588] sm:$0xff]
          %v492 = vld [vmem:[%s260 + $0x590] sm:$0xff]
          %v493 = vld [vmem:[%s260 + $0x598] sm:$0xff]
          %v494 = vld [vmem:[%s260 + $0x5a0] sm:$0xff]
          %v495 = vld [vmem:[%s260 + $0x5a8] sm:$0xff]
          %v496 = vld [vmem:[%s260 + $0x5b0] sm:$0xff]
          %v497 = vld [vmem:[%s260 + $0x5b8] sm:$0xff]
          %v498 = vld [vmem:[%s260 + $0x5c0] sm:$0xff]
          %v499 = vld [vmem:[%s260 + $0x5c8] sm:$0xff]
          %v500 = vld [vmem:[%s260 + $0x5d0] sm:$0xff]
          %v501 = vld [vmem:[%s260 + $0x5d8] sm:$0xff]
          %v502 = vld [vmem:[%s260 + $0x5e0] sm:$0xff]
          %v503 = vld [vmem:[%s260 + $0x5e8] sm:$0xff]
          %v504 = vld [vmem:[%s260 + $0x5f0] sm:$0xff]
          %v505 = vld [vmem:[%s260 + $0x5f8] sm:$0xff]
          %v506 = vld [vmem:[%s260 + $0x600] sm:$0xff]
          %v507 = vld [vmem:[%s260 + $0x608] sm:$0xff]
          %v508 = vld [vmem:[%s260 + $0x610] sm:$0xff]
          %v509 = vld [vmem:[%s260 + $0x618] sm:$0xff]
          %v510 = vld [vmem:[%s260 + $0x620] sm:$0xff]
          %v511 = vld [vmem:[%s260 + $0x628] sm:$0xff]
          %v512 = vld [vmem:[%s260 + $0x630] sm:$0xff]
          %v513 = vld [vmem:[%s260 + $0x638] sm:$0xff]
          %v514 = vld [vmem:[%s260 + $0x640] sm:$0xff]
          %v515 = vld [vmem:[%s260 + $0x648] sm:$0xff]
          %v516 = vld [vmem:[%s260 + $0x650] sm:$0xff]
          %v517 = vld [vmem:[%s260 + $0x658] sm:$0xff]
          %v518 = vld [vmem:[%s260 + $0x660] sm:$0xff]
          %v519 = vld [vmem:[%s260 + $0x668] sm:$0xff]
          %v520 = vld [vmem:[%s260 + $0x670] sm:$0xff]
          %v521 = vld [vmem:[%s260 + $0x678] sm:$0xff]
          %v522 = vld [vmem:[%s260 + $0x680] sm:$0xff]
          %v523 = vld [vmem:[%s260 + $0x688] sm:$0xff]
          %v524 = vld [vmem:[%s260 + $0x690] sm:$0xff]
          %v525 = vld [vmem:[%s260 + $0x698] sm:$0xff]
          %v526 = vld [vmem:[%s260 + $0x6a0] sm:$0xff]
          %v527 = vld [vmem:[%s260 + $0x6a8] sm:$0xff]
          %v528 = vld [vmem:[%s260 + $0x6b0] sm:$0xff]
          %v529 = vld [vmem:[%s260 + $0x6b8] sm:$0xff]
          %v530 = vld [vmem:[%s260 + $0x6c0] sm:$0xff]
          %v531 = vld [vmem:[%s260 + $0x6c8] sm:$0xff]
          %v532 = vld [vmem:[%s260 + $0x6d0] sm:$0xff]
          %v533 = vld [vmem:[%s260 + $0x6d8] sm:$0xff]
          %v534 = vld [vmem:[%s260 + $0x6e0] sm:$0xff]
          %v535 = vld [vmem:[%s260 + $0x6e8] sm:$0xff]
          %v536 = vld [vmem:[%s260 + $0x6f0] sm:$0xff]
          %v537 = vld [vmem:[%s260 + $0x6f8] sm:$0xff]
          %v538 = vld [vmem:[%s260 + $0x700] sm:$0xff]
          %v539 = vld [vmem:[%s260 + $0x708] sm:$0xff]
          %v540 = vld [vmem:[%s260 + $0x710] sm:$0xff]
          %v541 = vld [vmem:[%s260 + $0x718] sm:$0xff]
          %v542 = vld [vmem:[%s260 + $0x720] sm:$0xff]
          %v543 = vld [vmem:[%s260 + $0x728] sm:$0xff]
          %v544 = vld [vmem:[%s260 + $0x730] sm:$0xff]
          %v545 = vld [vmem:[%s260 + $0x738] sm:$0xff]
          %v546 = vld [vmem:[%s260 + $0x740] sm:$0xff]
          %v547 = vld [vmem:[%s260 + $0x748] sm:$0xff]
          %v548 = vld [vmem:[%s260 + $0x750] sm:$0xff]
          %v549 = vld [vmem:[%s260 + $0x758] sm:$0xff]
          %v550 = vld [vmem:[%s260 + $0x760] sm:$0xff]
          %v551 = vld [vmem:[%s260 + $0x768] sm:$0xff]
          %v552 = vld [vmem:[%s260 + $0x770] sm:$0xff]
          %v553 = vld [vmem:[%s260 + $0x778] sm:$0xff]
          %v554 = vld [vmem:[%s260 + $0x780] sm:$0xff]
          %v555 = vld [vmem:[%s260 + $0x788] sm:$0xff]
          %v556 = vld [vmem:[%s260 + $0x790] sm:$0xff]
          %v557 = vld [vmem:[%s260 + $0x798] sm:$0xff]
          %v558 = vld [vmem:[%s260 + $0x7a0] sm:$0xff]
          %v559 = vld [vmem:[%s260 + $0x7a8] sm:$0xff]
          %v560 = vld [vmem:[%s260 + $0x7b0] sm:$0xff]
          %v561 = vld [vmem:[%s260 + $0x7b8] sm:$0xff]
          %v562 = vld [vmem:[%s260 + $0x7c0] sm:$0xff]
          %v563 = vld [vmem:[%s260 + $0x7c8] sm:$0xff]
          %v564 = vld [vmem:[%s260 + $0x7d0] sm:$0xff]
          %v565 = vld [vmem:[%s260 + $0x7d8] sm:$0xff]
          %v566 = vld [vmem:[%s260 + $0x7e0] sm:$0xff]
          %v567 = vld [vmem:[%s260 + $0x7e8] sm:$0xff]
          %v568 = vld [vmem:[%s260 + $0x7f0] sm:$0xff]
          %v569 = vld [vmem:[%s260 + $0x7f8] sm:$0xff]
          %s570 = smul.u32 %s30, 256
          %s571 = smul.addr %s570, 8
          %s572 = scalar_lea.vmem [#allocation2], %s571
          %573 = vst [vmem:[%s572] sm:$0xff] %v314
          %574 = vst [vmem:[%s572 + $0x8] sm:$0xff] %v315
          %575 = vst [vmem:[%s572 + $0x10] sm:$0xff] %v316
          %576 = vst [vmem:[%s572 + $0x18] sm:$0xff] %v317
          %577 = vst [vmem:[%s572 + $0x20] sm:$0xff] %v318
          %578 = vst [vmem:[%s572 + $0x28] sm:$0xff] %v319
          %579 = vst [vmem:[%s572 + $0x30] sm:$0xff] %v320
          %580 = vst [vmem:[%s572 + $0x38] sm:$0xff] %v321
          %581 = vst [vmem:[%s572 + $0x40] sm:$0xff] %v322
          %582 = vst [vmem:[%s572 + $0x48] sm:$0xff] %v323
          %583 = vst [vmem:[%s572 + $0x50] sm:$0xff] %v324
          %584 = vst [vmem:[%s572 + $0x58] sm:$0xff] %v325
          %585 = vst [vmem:[%s572 + $0x60] sm:$0xff] %v326
          %586 = vst [vmem:[%s572 + $0x68] sm:$0xff] %v327
          %587 = vst [vmem:[%s572 + $0x70] sm:$0xff] %v328
          %588 = vst [vmem:[%s572 + $0x78] sm:$0xff] %v329
          %589 = vst [vmem:[%s572 + $0x80] sm:$0xff] %v330
          %590 = vst [vmem:[%s572 + $0x88] sm:$0xff] %v331
          %591 = vst [vmem:[%s572 + $0x90] sm:$0xff] %v332
          %592 = vst [vmem:[%s572 + $0x98] sm:$0xff] %v333
          %593 = vst [vmem:[%s572 + $0xa0] sm:$0xff] %v334
          %594 = vst [vmem:[%s572 + $0xa8] sm:$0xff] %v335
          %595 = vst [vmem:[%s572 + $0xb0] sm:$0xff] %v336
          %596 = vst [vmem:[%s572 + $0xb8] sm:$0xff] %v337
          %597 = vst [vmem:[%s572 + $0xc0] sm:$0xff] %v338
          %598 = vst [vmem:[%s572 + $0xc8] sm:$0xff] %v339
          %599 = vst [vmem:[%s572 + $0xd0] sm:$0xff] %v340
          %600 = vst [vmem:[%s572 + $0xd8] sm:$0xff] %v341
          %601 = vst [vmem:[%s572 + $0xe0] sm:$0xff] %v342
          %602 = vst [vmem:[%s572 + $0xe8] sm:$0xff] %v343
          %603 = vst [vmem:[%s572 + $0xf0] sm:$0xff] %v344
          %604 = vst [vmem:[%s572 + $0xf8] sm:$0xff] %v345
          %605 = vst [vmem:[%s572 + $0x100] sm:$0xff] %v346
          %606 = vst [vmem:[%s572 + $0x108] sm:$0xff] %v347
          %607 = vst [vmem:[%s572 + $0x110] sm:$0xff] %v348
          %608 = vst [vmem:[%s572 + $0x118] sm:$0xff] %v349
          %609 = vst [vmem:[%s572 + $0x120] sm:$0xff] %v350
          %610 = vst [vmem:[%s572 + $0x128] sm:$0xff] %v351
          %611 = vst [vmem:[%s572 + $0x130] sm:$0xff] %v352
          %612 = vst [vmem:[%s572 + $0x138] sm:$0xff] %v353
          %613 = vst [vmem:[%s572 + $0x140] sm:$0xff] %v354
          %614 = vst [vmem:[%s572 + $0x148] sm:$0xff] %v355
          %615 = vst [vmem:[%s572 + $0x150] sm:$0xff] %v356
          %616 = vst [vmem:[%s572 + $0x158] sm:$0xff] %v357
          %617 = vst [vmem:[%s572 + $0x160] sm:$0xff] %v358
          %618 = vst [vmem:[%s572 + $0x168] sm:$0xff] %v359
          %619 = vst [vmem:[%s572 + $0x170] sm:$0xff] %v360
          %620 = vst [vmem:[%s572 + $0x178] sm:$0xff] %v361
          %621 = vst [vmem:[%s572 + $0x180] sm:$0xff] %v362
          %622 = vst [vmem:[%s572 + $0x188] sm:$0xff] %v363
          %623 = vst [vmem:[%s572 + $0x190] sm:$0xff] %v364
          %624 = vst [vmem:[%s572 + $0x198] sm:$0xff] %v365
          %625 = vst [vmem:[%s572 + $0x1a0] sm:$0xff] %v366
          %626 = vst [vmem:[%s572 + $0x1a8] sm:$0xff] %v367
          %627 = vst [vmem:[%s572 + $0x1b0] sm:$0xff] %v368
          %628 = vst [vmem:[%s572 + $0x1b8] sm:$0xff] %v369
          %629 = vst [vmem:[%s572 + $0x1c0] sm:$0xff] %v370
          %630 = vst [vmem:[%s572 + $0x1c8] sm:$0xff] %v371
          %631 = vst [vmem:[%s572 + $0x1d0] sm:$0xff] %v372
          %632 = vst [vmem:[%s572 + $0x1d8] sm:$0xff] %v373
          %633 = vst [vmem:[%s572 + $0x1e0] sm:$0xff] %v374
          %634 = vst [vmem:[%s572 + $0x1e8] sm:$0xff] %v375
          %635 = vst [vmem:[%s572 + $0x1f0] sm:$0xff] %v376
          %636 = vst [vmem:[%s572 + $0x1f8] sm:$0xff] %v377
          %637 = vst [vmem:[%s572 + $0x200] sm:$0xff] %v378
          %638 = vst [vmem:[%s572 + $0x208] sm:$0xff] %v379
          %639 = vst [vmem:[%s572 + $0x210] sm:$0xff] %v380
          %640 = vst [vmem:[%s572 + $0x218] sm:$0xff] %v381
          %641 = vst [vmem:[%s572 + $0x220] sm:$0xff] %v382
          %642 = vst [vmem:[%s572 + $0x228] sm:$0xff] %v383
          %643 = vst [vmem:[%s572 + $0x230] sm:$0xff] %v384
          %644 = vst [vmem:[%s572 + $0x238] sm:$0xff] %v385
          %645 = vst [vmem:[%s572 + $0x240] sm:$0xff] %v386
          %646 = vst [vmem:[%s572 + $0x248] sm:$0xff] %v387
          %647 = vst [vmem:[%s572 + $0x250] sm:$0xff] %v388
          %648 = vst [vmem:[%s572 + $0x258] sm:$0xff] %v389
          %649 = vst [vmem:[%s572 + $0x260] sm:$0xff] %v390
          %650 = vst [vmem:[%s572 + $0x268] sm:$0xff] %v391
          %651 = vst [vmem:[%s572 + $0x270] sm:$0xff] %v392
          %652 = vst [vmem:[%s572 + $0x278] sm:$0xff] %v393
          %653 = vst [vmem:[%s572 + $0x280] sm:$0xff] %v394
          %654 = vst [vmem:[%s572 + $0x288] sm:$0xff] %v395
          %655 = vst [vmem:[%s572 + $0x290] sm:$0xff] %v396
          %656 = vst [vmem:[%s572 + $0x298] sm:$0xff] %v397
          %657 = vst [vmem:[%s572 + $0x2a0] sm:$0xff] %v398
          %658 = vst [vmem:[%s572 + $0x2a8] sm:$0xff] %v399
          %659 = vst [vmem:[%s572 + $0x2b0] sm:$0xff] %v400
          %660 = vst [vmem:[%s572 + $0x2b8] sm:$0xff] %v401
          %661 = vst [vmem:[%s572 + $0x2c0] sm:$0xff] %v402
          %662 = vst [vmem:[%s572 + $0x2c8] sm:$0xff] %v403
          %663 = vst [vmem:[%s572 + $0x2d0] sm:$0xff] %v404
          %664 = vst [vmem:[%s572 + $0x2d8] sm:$0xff] %v405
          %665 = vst [vmem:[%s572 + $0x2e0] sm:$0xff] %v406
          %666 = vst [vmem:[%s572 + $0x2e8] sm:$0xff] %v407
          %667 = vst [vmem:[%s572 + $0x2f0] sm:$0xff] %v408
          %668 = vst [vmem:[%s572 + $0x2f8] sm:$0xff] %v409
          %669 = vst [vmem:[%s572 + $0x300] sm:$0xff] %v410
          %670 = vst [vmem:[%s572 + $0x308] sm:$0xff] %v411
          %671 = vst [vmem:[%s572 + $0x310] sm:$0xff] %v412
          %672 = vst [vmem:[%s572 + $0x318] sm:$0xff] %v413
          %673 = vst [vmem:[%s572 + $0x320] sm:$0xff] %v414
          %674 = vst [vmem:[%s572 + $0x328] sm:$0xff] %v415
          %675 = vst [vmem:[%s572 + $0x330] sm:$0xff] %v416
          %676 = vst [vmem:[%s572 + $0x338] sm:$0xff] %v417
          %677 = vst [vmem:[%s572 + $0x340] sm:$0xff] %v418
          %678 = vst [vmem:[%s572 + $0x348] sm:$0xff] %v419
          %679 = vst [vmem:[%s572 + $0x350] sm:$0xff] %v420
          %680 = vst [vmem:[%s572 + $0x358] sm:$0xff] %v421
          %681 = vst [vmem:[%s572 + $0x360] sm:$0xff] %v422
          %682 = vst [vmem:[%s572 + $0x368] sm:$0xff] %v423
          %683 = vst [vmem:[%s572 + $0x370] sm:$0xff] %v424
          %684 = vst [vmem:[%s572 + $0x378] sm:$0xff] %v425
          %685 = vst [vmem:[%s572 + $0x380] sm:$0xff] %v426
          %686 = vst [vmem:[%s572 + $0x388] sm:$0xff] %v427
          %687 = vst [vmem:[%s572 + $0x390] sm:$0xff] %v428
          %688 = vst [vmem:[%s572 + $0x398] sm:$0xff] %v429
          %689 = vst [vmem:[%s572 + $0x3a0] sm:$0xff] %v430
          %690 = vst [vmem:[%s572 + $0x3a8] sm:$0xff] %v431
          %691 = vst [vmem:[%s572 + $0x3b0] sm:$0xff] %v432
          %692 = vst [vmem:[%s572 + $0x3b8] sm:$0xff] %v433
          %693 = vst [vmem:[%s572 + $0x3c0] sm:$0xff] %v434
          %694 = vst [vmem:[%s572 + $0x3c8] sm:$0xff] %v435
          %695 = vst [vmem:[%s572 + $0x3d0] sm:$0xff] %v436
          %696 = vst [vmem:[%s572 + $0x3d8] sm:$0xff] %v437
          %697 = vst [vmem:[%s572 + $0x3e0] sm:$0xff] %v438
          %698 = vst [vmem:[%s572 + $0x3e8] sm:$0xff] %v439
          %699 = vst [vmem:[%s572 + $0x3f0] sm:$0xff] %v440
          %700 = vst [vmem:[%s572 + $0x3f8] sm:$0xff] %v441
          %701 = vst [vmem:[%s572 + $0x400] sm:$0xff] %v442
          %702 = vst [vmem:[%s572 + $0x408] sm:$0xff] %v443
          %703 = vst [vmem:[%s572 + $0x410] sm:$0xff] %v444
          %704 = vst [vmem:[%s572 + $0x418] sm:$0xff] %v445
          %705 = vst [vmem:[%s572 + $0x420] sm:$0xff] %v446
          %706 = vst [vmem:[%s572 + $0x428] sm:$0xff] %v447
          %707 = vst [vmem:[%s572 + $0x430] sm:$0xff] %v448
          %708 = vst [vmem:[%s572 + $0x438] sm:$0xff] %v449
          %709 = vst [vmem:[%s572 + $0x440] sm:$0xff] %v450
          %710 = vst [vmem:[%s572 + $0x448] sm:$0xff] %v451
          %711 = vst [vmem:[%s572 + $0x450] sm:$0xff] %v452
          %712 = vst [vmem:[%s572 + $0x458] sm:$0xff] %v453
          %713 = vst [vmem:[%s572 + $0x460] sm:$0xff] %v454
          %714 = vst [vmem:[%s572 + $0x468] sm:$0xff] %v455
          %715 = vst [vmem:[%s572 + $0x470] sm:$0xff] %v456
          %716 = vst [vmem:[%s572 + $0x478] sm:$0xff] %v457
          %717 = vst [vmem:[%s572 + $0x480] sm:$0xff] %v458
          %718 = vst [vmem:[%s572 + $0x488] sm:$0xff] %v459
          %719 = vst [vmem:[%s572 + $0x490] sm:$0xff] %v460
          %720 = vst [vmem:[%s572 + $0x498] sm:$0xff] %v461
          %721 = vst [vmem:[%s572 + $0x4a0] sm:$0xff] %v462
          %722 = vst [vmem:[%s572 + $0x4a8] sm:$0xff] %v463
          %723 = vst [vmem:[%s572 + $0x4b0] sm:$0xff] %v464
          %724 = vst [vmem:[%s572 + $0x4b8] sm:$0xff] %v465
          %725 = vst [vmem:[%s572 + $0x4c0] sm:$0xff] %v466
          %726 = vst [vmem:[%s572 + $0x4c8] sm:$0xff] %v467
          %727 = vst [vmem:[%s572 + $0x4d0] sm:$0xff] %v468
          %728 = vst [vmem:[%s572 + $0x4d8] sm:$0xff] %v469
          %729 = vst [vmem:[%s572 + $0x4e0] sm:$0xff] %v470
          %730 = vst [vmem:[%s572 + $0x4e8] sm:$0xff] %v471
          %731 = vst [vmem:[%s572 + $0x4f0] sm:$0xff] %v472
          %732 = vst [vmem:[%s572 + $0x4f8] sm:$0xff] %v473
          %733 = vst [vmem:[%s572 + $0x500] sm:$0xff] %v474
          %734 = vst [vmem:[%s572 + $0x508] sm:$0xff] %v475
          %735 = vst [vmem:[%s572 + $0x510] sm:$0xff] %v476
          %736 = vst [vmem:[%s572 + $0x518] sm:$0xff] %v477
          %737 = vst [vmem:[%s572 + $0x520] sm:$0xff] %v478
          %738 = vst [vmem:[%s572 + $0x528] sm:$0xff] %v479
          %739 = vst [vmem:[%s572 + $0x530] sm:$0xff] %v480
          %740 = vst [vmem:[%s572 + $0x538] sm:$0xff] %v481
          %741 = vst [vmem:[%s572 + $0x540] sm:$0xff] %v482
          %742 = vst [vmem:[%s572 + $0x548] sm:$0xff] %v483
          %743 = vst [vmem:[%s572 + $0x550] sm:$0xff] %v484
          %744 = vst [vmem:[%s572 + $0x558] sm:$0xff] %v485
          %745 = vst [vmem:[%s572 + $0x560] sm:$0xff] %v486
          %746 = vst [vmem:[%s572 + $0x568] sm:$0xff] %v487
          %747 = vst [vmem:[%s572 + $0x570] sm:$0xff] %v488
          %748 = vst [vmem:[%s572 + $0x578] sm:$0xff] %v489
          %749 = vst [vmem:[%s572 + $0x580] sm:$0xff] %v490
          %750 = vst [vmem:[%s572 + $0x588] sm:$0xff] %v491
          %751 = vst [vmem:[%s572 + $0x590] sm:$0xff] %v492
          %752 = vst [vmem:[%s572 + $0x598] sm:$0xff] %v493
          %753 = vst [vmem:[%s572 + $0x5a0] sm:$0xff] %v494
          %754 = vst [vmem:[%s572 + $0x5a8] sm:$0xff] %v495
          %755 = vst [vmem:[%s572 + $0x5b0] sm:$0xff] %v496
          %756 = vst [vmem:[%s572 + $0x5b8] sm:$0xff] %v497
          %757 = vst [vmem:[%s572 + $0x5c0] sm:$0xff] %v498
          %758 = vst [vmem:[%s572 + $0x5c8] sm:$0xff] %v499
          %759 = vst [vmem:[%s572 + $0x5d0] sm:$0xff] %v500
          %760 = vst [vmem:[%s572 + $0x5d8] sm:$0xff] %v501
          %761 = vst [vmem:[%s572 + $0x5e0] sm:$0xff] %v502
          %762 = vst [vmem:[%s572 + $0x5e8] sm:$0xff] %v503
          %763 = vst [vmem:[%s572 + $0x5f0] sm:$0xff] %v504
          %764 = vst [vmem:[%s572 + $0x5f8] sm:$0xff] %v505
          %765 = vst [vmem:[%s572 + $0x600] sm:$0xff] %v506
          %766 = vst [vmem:[%s572 + $0x608] sm:$0xff] %v507
          %767 = vst [vmem:[%s572 + $0x610] sm:$0xff] %v508
          %768 = vst [vmem:[%s572 + $0x618] sm:$0xff] %v509
          %769 = vst [vmem:[%s572 + $0x620] sm:$0xff] %v510
          %770 = vst [vmem:[%s572 + $0x628] sm:$0xff] %v511
          %771 = vst [vmem:[%s572 + $0x630] sm:$0xff] %v512
          %772 = vst [vmem:[%s572 + $0x638] sm:$0xff] %v513
          %773 = vst [vmem:[%s572 + $0x640] sm:$0xff] %v514
          %774 = vst [vmem:[%s572 + $0x648] sm:$0xff] %v515
          %775 = vst [vmem:[%s572 + $0x650] sm:$0xff] %v516
          %776 = vst [vmem:[%s572 + $0x658] sm:$0xff] %v517
          %777 = vst [vmem:[%s572 + $0x660] sm:$0xff] %v518
          %778 = vst [vmem:[%s572 + $0x668] sm:$0xff] %v519
          %779 = vst [vmem:[%s572 + $0x670] sm:$0xff] %v520
          %780 = vst [vmem:[%s572 + $0x678] sm:$0xff] %v521
          %781 = vst [vmem:[%s572 + $0x680] sm:$0xff] %v522
          %782 = vst [vmem:[%s572 + $0x688] sm:$0xff] %v523
          %783 = vst [vmem:[%s572 + $0x690] sm:$0xff] %v524
          %784 = vst [vmem:[%s572 + $0x698] sm:$0xff] %v525
          %785 = vst [vmem:[%s572 + $0x6a0] sm:$0xff] %v526
          %786 = vst [vmem:[%s572 + $0x6a8] sm:$0xff] %v527
          %787 = vst [vmem:[%s572 + $0x6b0] sm:$0xff] %v528
          %788 = vst [vmem:[%s572 + $0x6b8] sm:$0xff] %v529
          %789 = vst [vmem:[%s572 + $0x6c0] sm:$0xff] %v530
          %790 = vst [vmem:[%s572 + $0x6c8] sm:$0xff] %v531
          %791 = vst [vmem:[%s572 + $0x6d0] sm:$0xff] %v532
          %792 = vst [vmem:[%s572 + $0x6d8] sm:$0xff] %v533
          %793 = vst [vmem:[%s572 + $0x6e0] sm:$0xff] %v534
          %794 = vst [vmem:[%s572 + $0x6e8] sm:$0xff] %v535
          %795 = vst [vmem:[%s572 + $0x6f0] sm:$0xff] %v536
          %796 = vst [vmem:[%s572 + $0x6f8] sm:$0xff] %v537
          %797 = vst [vmem:[%s572 + $0x700] sm:$0xff] %v538
          %798 = vst [vmem:[%s572 + $0x708] sm:$0xff] %v539
          %799 = vst [vmem:[%s572 + $0x710] sm:$0xff] %v540
          %800 = vst [vmem:[%s572 + $0x718] sm:$0xff] %v541
          %801 = vst [vmem:[%s572 + $0x720] sm:$0xff] %v542
          %802 = vst [vmem:[%s572 + $0x728] sm:$0xff] %v543
          %803 = vst [vmem:[%s572 + $0x730] sm:$0xff] %v544
          %804 = vst [vmem:[%s572 + $0x738] sm:$0xff] %v545
          %805 = vst [vmem:[%s572 + $0x740] sm:$0xff] %v546
          %806 = vst [vmem:[%s572 + $0x748] sm:$0xff] %v547
          %807 = vst [vmem:[%s572 + $0x750] sm:$0xff] %v548
          %808 = vst [vmem:[%s572 + $0x758] sm:$0xff] %v549
          %809 = vst [vmem:[%s572 + $0x760] sm:$0xff] %v550
          %810 = vst [vmem:[%s572 + $0x768] sm:$0xff] %v551
          %811 = vst [vmem:[%s572 + $0x770] sm:$0xff] %v552
          %812 = vst [vmem:[%s572 + $0x778] sm:$0xff] %v553
          %813 = vst [vmem:[%s572 + $0x780] sm:$0xff] %v554
          %814 = vst [vmem:[%s572 + $0x788] sm:$0xff] %v555
          %815 = vst [vmem:[%s572 + $0x790] sm:$0xff] %v556
          %816 = vst [vmem:[%s572 + $0x798] sm:$0xff] %v557
          %817 = vst [vmem:[%s572 + $0x7a0] sm:$0xff] %v558
          %818 = vst [vmem:[%s572 + $0x7a8] sm:$0xff] %v559
          %819 = vst [vmem:[%s572 + $0x7b0] sm:$0xff] %v560
          %820 = vst [vmem:[%s572 + $0x7b8] sm:$0xff] %v561
          %821 = vst [vmem:[%s572 + $0x7c0] sm:$0xff] %v562
          %822 = vst [vmem:[%s572 + $0x7c8] sm:$0xff] %v563
          %823 = vst [vmem:[%s572 + $0x7d0] sm:$0xff] %v564
          %824 = vst [vmem:[%s572 + $0x7d8] sm:$0xff] %v565
          %825 = vst [vmem:[%s572 + $0x7e0] sm:$0xff] %v566
          %826 = vst [vmem:[%s572 + $0x7e8] sm:$0xff] %v567
          %827 = vst [vmem:[%s572 + $0x7f0] sm:$0xff] %v568
          %828 = vst [vmem:[%s572 + $0x7f8] sm:$0xff] %v569
          %v829 = vld [vmem:[#allocation3] sm:$0xff]
          %v830 = vld [vmem:[#allocation3 + $0x8] sm:$0xff]
          %v831 = vld [vmem:[#allocation3 + $0x10] sm:$0xff]
          %v832 = vld [vmem:[#allocation3 + $0x18] sm:$0xff]
          %v833 = vld [vmem:[#allocation3 + $0x20] sm:$0xff]
          %v834 = vld [vmem:[#allocation3 + $0x28] sm:$0xff]
          %v835 = vld [vmem:[#allocation3 + $0x30] sm:$0xff]
          %v836 = vld [vmem:[#allocation3 + $0x38] sm:$0xff]
          %v837 = vld [vmem:[%s260] sm:$0xff]
          %v838 = vld [vmem:[%s260 + $0x100] sm:$0xff]
          %v839 = vld [vmem:[%s260 + $0x200] sm:$0xff]
          %v840 = vld [vmem:[%s260 + $0x300] sm:$0xff]
          %v841 = vld [vmem:[%s260 + $0x400] sm:$0xff]
          %v842 = vld [vmem:[%s260 + $0x500] sm:$0xff]
          %v843 = vld [vmem:[%s260 + $0x600] sm:$0xff]
          %v844 = vld [vmem:[%s260 + $0x700] sm:$0xff]
          %v845 = vld [vmem:[%s260 + $0x8] sm:$0xff]
          %v846 = vld [vmem:[%s260 + $0x108] sm:$0xff]
          %v847 = vld [vmem:[%s260 + $0x208] sm:$0xff]
          %v848 = vld [vmem:[%s260 + $0x308] sm:$0xff]
          %v849 = vld [vmem:[%s260 + $0x408] sm:$0xff]
          %v850 = vld [vmem:[%s260 + $0x508] sm:$0xff]
          %v851 = vld [vmem:[%s260 + $0x608] sm:$0xff]
          %v852 = vld [vmem:[%s260 + $0x708] sm:$0xff]
          %v853 = vadd.f32 %v837, %v845
          %v854 = vadd.f32 %v838, %v846
          %v855 = vadd.f32 %v839, %v847
          %v856 = vadd.f32 %v840, %v848
          %v857 = vadd.f32 %v841, %v849
          %v858 = vadd.f32 %v842, %v850
          %v859 = vadd.f32 %v843, %v851
          %v860 = vadd.f32 %v844, %v852
          %v861 = vld [vmem:[%s260 + $0x10] sm:$0xff]
          %v862 = vld [vmem:[%s260 + $0x110] sm:$0xff]
          %v863 = vld [vmem:[%s260 + $0x210] sm:$0xff]
          %v864 = vld [vmem:[%s260 + $0x310] sm:$0xff]
          %v865 = vld [vmem:[%s260 + $0x410] sm:$0xff]
          %v866 = vld [vmem:[%s260 + $0x510] sm:$0xff]
          %v867 = vld [vmem:[%s260 + $0x610] sm:$0xff]
          %v868 = vld [vmem:[%s260 + $0x710] sm:$0xff]
          %v869 = vadd.f32 %v853, %v861
          %v870 = vadd.f32 %v854, %v862
          %v871 = vadd.f32 %v855, %v863
          %v872 = vadd.f32 %v856, %v864
          %v873 = vadd.f32 %v857, %v865
          %v874 = vadd.f32 %v858, %v866
          %v875 = vadd.f32 %v859, %v867
          %v876 = vadd.f32 %v860, %v868
          %v877 = vld [vmem:[%s260 + $0x18] sm:$0xff]
          %v878 = vld [vmem:[%s260 + $0x118] sm:$0xff]
          %v879 = vld [vmem:[%s260 + $0x218] sm:$0xff]
          %v880 = vld [vmem:[%s260 + $0x318] sm:$0xff]
          %v881 = vld [vmem:[%s260 + $0x418] sm:$0xff]
          %v882 = vld [vmem:[%s260 + $0x518] sm:$0xff]
          %v883 = vld [vmem:[%s260 + $0x618] sm:$0xff]
          %v884 = vld [vmem:[%s260 + $0x718] sm:$0xff]
          %v885 = vadd.f32 %v869, %v877
          %v886 = vadd.f32 %v870, %v878
          %v887 = vadd.f32 %v871, %v879
          %v888 = vadd.f32 %v872, %v880
          %v889 = vadd.f32 %v873, %v881
          %v890 = vadd.f32 %v874, %v882
          %v891 = vadd.f32 %v875, %v883
          %v892 = vadd.f32 %v876, %v884
          %v893 = vld [vmem:[%s260 + $0x20] sm:$0xff]
          %v894 = vld [vmem:[%s260 + $0x120] sm:$0xff]
          %v895 = vld [vmem:[%s260 + $0x220] sm:$0xff]
          %v896 = vld [vmem:[%s260 + $0x320] sm:$0xff]
          %v897 = vld [vmem:[%s260 + $0x420] sm:$0xff]
          %v898 = vld [vmem:[%s260 + $0x520] sm:$0xff]
          %v899 = vld [vmem:[%s260 + $0x620] sm:$0xff]
          %v900 = vld [vmem:[%s260 + $0x720] sm:$0xff]
          %v901 = vadd.f32 %v885, %v893
          %v902 = vadd.f32 %v886, %v894
          %v903 = vadd.f32 %v887, %v895
          %v904 = vadd.f32 %v888, %v896
          %v905 = vadd.f32 %v889, %v897
          %v906 = vadd.f32 %v890, %v898
          %v907 = vadd.f32 %v891, %v899
          %v908 = vadd.f32 %v892, %v900
          %v909 = vld [vmem:[%s260 + $0x28] sm:$0xff]
          %v910 = vld [vmem:[%s260 + $0x128] sm:$0xff]
          %v911 = vld [vmem:[%s260 + $0x228] sm:$0xff]
          %v912 = vld [vmem:[%s260 + $0x328] sm:$0xff]
          %v913 = vld [vmem:[%s260 + $0x428] sm:$0xff]
          %v914 = vld [vmem:[%s260 + $0x528] sm:$0xff]
          %v915 = vld [vmem:[%s260 + $0x628] sm:$0xff]
          %v916 = vld [vmem:[%s260 + $0x728] sm:$0xff]
          %v917 = vadd.f32 %v901, %v909
          %v918 = vadd.f32 %v902, %v910
          %v919 = vadd.f32 %v903, %v911
          %v920 = vadd.f32 %v904, %v912
          %v921 = vadd.f32 %v905, %v913
          %v922 = vadd.f32 %v906, %v914
          %v923 = vadd.f32 %v907, %v915
          %v924 = vadd.f32 %v908, %v916
          %v925 = vld [vmem:[%s260 + $0x30] sm:$0xff]
          %v926 = vld [vmem:[%s260 + $0x130] sm:$0xff]
          %v927 = vld [vmem:[%s260 + $0x230] sm:$0xff]
          %v928 = vld [vmem:[%s260 + $0x330] sm:$0xff]
          %v929 = vld [vmem:[%s260 + $0x430] sm:$0xff]
          %v930 = vld [vmem:[%s260 + $0x530] sm:$0xff]
          %v931 = vld [vmem:[%s260 + $0x630] sm:$0xff]
          %v932 = vld [vmem:[%s260 + $0x730] sm:$0xff]
          %v933 = vadd.f32 %v917, %v925
          %v934 = vadd.f32 %v918, %v926
          %v935 = vadd.f32 %v919, %v927
          %v936 = vadd.f32 %v920, %v928
          %v937 = vadd.f32 %v921, %v929
          %v938 = vadd.f32 %v922, %v930
          %v939 = vadd.f32 %v923, %v931
          %v940 = vadd.f32 %v924, %v932
          %v941 = vld [vmem:[%s260 + $0x38] sm:$0xff]
          %v942 = vld [vmem:[%s260 + $0x138] sm:$0xff]
          %v943 = vld [vmem:[%s260 + $0x238] sm:$0xff]
          %v944 = vld [vmem:[%s260 + $0x338] sm:$0xff]
          %v945 = vld [vmem:[%s260 + $0x438] sm:$0xff]
          %v946 = vld [vmem:[%s260 + $0x538] sm:$0xff]
          %v947 = vld [vmem:[%s260 + $0x638] sm:$0xff]
          %v948 = vld [vmem:[%s260 + $0x738] sm:$0xff]
          %v949 = vadd.f32 %v933, %v941
          %v950 = vadd.f32 %v934, %v942
          %v951 = vadd.f32 %v935, %v943
          %v952 = vadd.f32 %v936, %v944
          %v953 = vadd.f32 %v937, %v945
          %v954 = vadd.f32 %v938, %v946
          %v955 = vadd.f32 %v939, %v947
          %v956 = vadd.f32 %v940, %v948
          %v957 = vld [vmem:[%s260 + $0x40] sm:$0xff]
          %v958 = vld [vmem:[%s260 + $0x140] sm:$0xff]
          %v959 = vld [vmem:[%s260 + $0x240] sm:$0xff]
          %v960 = vld [vmem:[%s260 + $0x340] sm:$0xff]
          %v961 = vld [vmem:[%s260 + $0x440] sm:$0xff]
          %v962 = vld [vmem:[%s260 + $0x540] sm:$0xff]
          %v963 = vld [vmem:[%s260 + $0x640] sm:$0xff]
          %v964 = vld [vmem:[%s260 + $0x740] sm:$0xff]
          %v965 = vadd.f32 %v949, %v957
          %v966 = vadd.f32 %v950, %v958
          %v967 = vadd.f32 %v951, %v959
          %v968 = vadd.f32 %v952, %v960
          %v969 = vadd.f32 %v953, %v961
          %v970 = vadd.f32 %v954, %v962
          %v971 = vadd.f32 %v955, %v963
          %v972 = vadd.f32 %v956, %v964
          %v973 = vld [vmem:[%s260 + $0x48] sm:$0xff]
          %v974 = vld [vmem:[%s260 + $0x148] sm:$0xff]
          %v975 = vld [vmem:[%s260 + $0x248] sm:$0xff]
          %v976 = vld [vmem:[%s260 + $0x348] sm:$0xff]
          %v977 = vld [vmem:[%s260 + $0x448] sm:$0xff]
          %v978 = vld [vmem:[%s260 + $0x548] sm:$0xff]
          %v979 = vld [vmem:[%s260 + $0x648] sm:$0xff]
          %v980 = vld [vmem:[%s260 + $0x748] sm:$0xff]
          %v981 = vadd.f32 %v965, %v973
          %v982 = vadd.f32 %v966, %v974
          %v983 = vadd.f32 %v967, %v975
          %v984 = vadd.f32 %v968, %v976
          %v985 = vadd.f32 %v969, %v977
          %v986 = vadd.f32 %v970, %v978
          %v987 = vadd.f32 %v971, %v979
          %v988 = vadd.f32 %v972, %v980
          %v989 = vld [vmem:[%s260 + $0x50] sm:$0xff]
          %v990 = vld [vmem:[%s260 + $0x150] sm:$0xff]
          %v991 = vld [vmem:[%s260 + $0x250] sm:$0xff]
          %v992 = vld [vmem:[%s260 + $0x350] sm:$0xff]
          %v993 = vld [vmem:[%s260 + $0x450] sm:$0xff]
          %v994 = vld [vmem:[%s260 + $0x550] sm:$0xff]
          %v995 = vld [vmem:[%s260 + $0x650] sm:$0xff]
          %v996 = vld [vmem:[%s260 + $0x750] sm:$0xff]
          %v997 = vadd.f32 %v981, %v989
          %v998 = vadd.f32 %v982, %v990
          %v999 = vadd.f32 %v983, %v991
          %v1000 = vadd.f32 %v984, %v992
          %v1001 = vadd.f32 %v985, %v993
          %v1002 = vadd.f32 %v986, %v994
          %v1003 = vadd.f32 %v987, %v995
          %v1004 = vadd.f32 %v988, %v996
          %v1005 = vld [vmem:[%s260 + $0x58] sm:$0xff]
          %v1006 = vld [vmem:[%s260 + $0x158] sm:$0xff]
          %v1007 = vld [vmem:[%s260 + $0x258] sm:$0xff]
          %v1008 = vld [vmem:[%s260 + $0x358] sm:$0xff]
          %v1009 = vld [vmem:[%s260 + $0x458] sm:$0xff]
          %v1010 = vld [vmem:[%s260 + $0x558] sm:$0xff]
          %v1011 = vld [vmem:[%s260 + $0x658] sm:$0xff]
          %v1012 = vld [vmem:[%s260 + $0x758] sm:$0xff]
          %v1013 = vadd.f32 %v997, %v1005
          %v1014 = vadd.f32 %v998, %v1006
          %v1015 = vadd.f32 %v999, %v1007
          %v1016 = vadd.f32 %v1000, %v1008
          %v1017 = vadd.f32 %v1001, %v1009
          %v1018 = vadd.f32 %v1002, %v1010
          %v1019 = vadd.f32 %v1003, %v1011
          %v1020 = vadd.f32 %v1004, %v1012
          %v1021 = vld [vmem:[%s260 + $0x60] sm:$0xff]
          %v1022 = vld [vmem:[%s260 + $0x160] sm:$0xff]
          %v1023 = vld [vmem:[%s260 + $0x260] sm:$0xff]
          %v1024 = vld [vmem:[%s260 + $0x360] sm:$0xff]
          %v1025 = vld [vmem:[%s260 + $0x460] sm:$0xff]
          %v1026 = vld [vmem:[%s260 + $0x560] sm:$0xff]
          %v1027 = vld [vmem:[%s260 + $0x660] sm:$0xff]
          %v1028 = vld [vmem:[%s260 + $0x760] sm:$0xff]
          %v1029 = vadd.f32 %v1013, %v1021
          %v1030 = vadd.f32 %v1014, %v1022
          %v1031 = vadd.f32 %v1015, %v1023
          %v1032 = vadd.f32 %v1016, %v1024
          %v1033 = vadd.f32 %v1017, %v1025
          %v1034 = vadd.f32 %v1018, %v1026
          %v1035 = vadd.f32 %v1019, %v1027
          %v1036 = vadd.f32 %v1020, %v1028
          %v1037 = vld [vmem:[%s260 + $0x68] sm:$0xff]
          %v1038 = vld [vmem:[%s260 + $0x168] sm:$0xff]
          %v1039 = vld [vmem:[%s260 + $0x268] sm:$0xff]
          %v1040 = vld [vmem:[%s260 + $0x368] sm:$0xff]
          %v1041 = vld [vmem:[%s260 + $0x468] sm:$0xff]
          %v1042 = vld [vmem:[%s260 + $0x568] sm:$0xff]
          %v1043 = vld [vmem:[%s260 + $0x668] sm:$0xff]
          %v1044 = vld [vmem:[%s260 + $0x768] sm:$0xff]
          %v1045 = vadd.f32 %v1029, %v1037
          %v1046 = vadd.f32 %v1030, %v1038
          %v1047 = vadd.f32 %v1031, %v1039
          %v1048 = vadd.f32 %v1032, %v1040
          %v1049 = vadd.f32 %v1033, %v1041
          %v1050 = vadd.f32 %v1034, %v1042
          %v1051 = vadd.f32 %v1035, %v1043
          %v1052 = vadd.f32 %v1036, %v1044
          %v1053 = vld [vmem:[%s260 + $0x70] sm:$0xff]
          %v1054 = vld [vmem:[%s260 + $0x170] sm:$0xff]
          %v1055 = vld [vmem:[%s260 + $0x270] sm:$0xff]
          %v1056 = vld [vmem:[%s260 + $0x370] sm:$0xff]
          %v1057 = vld [vmem:[%s260 + $0x470] sm:$0xff]
          %v1058 = vld [vmem:[%s260 + $0x570] sm:$0xff]
          %v1059 = vld [vmem:[%s260 + $0x670] sm:$0xff]
          %v1060 = vld [vmem:[%s260 + $0x770] sm:$0xff]
          %v1061 = vadd.f32 %v1045, %v1053
          %v1062 = vadd.f32 %v1046, %v1054
          %v1063 = vadd.f32 %v1047, %v1055
          %v1064 = vadd.f32 %v1048, %v1056
          %v1065 = vadd.f32 %v1049, %v1057
          %v1066 = vadd.f32 %v1050, %v1058
          %v1067 = vadd.f32 %v1051, %v1059
          %v1068 = vadd.f32 %v1052, %v1060
          %v1069 = vld [vmem:[%s260 + $0x78] sm:$0xff]
          %v1070 = vld [vmem:[%s260 + $0x178] sm:$0xff]
          %v1071 = vld [vmem:[%s260 + $0x278] sm:$0xff]
          %v1072 = vld [vmem:[%s260 + $0x378] sm:$0xff]
          %v1073 = vld [vmem:[%s260 + $0x478] sm:$0xff]
          %v1074 = vld [vmem:[%s260 + $0x578] sm:$0xff]
          %v1075 = vld [vmem:[%s260 + $0x678] sm:$0xff]
          %v1076 = vld [vmem:[%s260 + $0x778] sm:$0xff]
          %v1077 = vadd.f32 %v1061, %v1069
          %v1078 = vadd.f32 %v1062, %v1070
          %v1079 = vadd.f32 %v1063, %v1071
          %v1080 = vadd.f32 %v1064, %v1072
          %v1081 = vadd.f32 %v1065, %v1073
          %v1082 = vadd.f32 %v1066, %v1074
          %v1083 = vadd.f32 %v1067, %v1075
          %v1084 = vadd.f32 %v1068, %v1076
          %v1085 = vld [vmem:[%s260 + $0x80] sm:$0xff]
          %v1086 = vld [vmem:[%s260 + $0x180] sm:$0xff]
          %v1087 = vld [vmem:[%s260 + $0x280] sm:$0xff]
          %v1088 = vld [vmem:[%s260 + $0x380] sm:$0xff]
          %v1089 = vld [vmem:[%s260 + $0x480] sm:$0xff]
          %v1090 = vld [vmem:[%s260 + $0x580] sm:$0xff]
          %v1091 = vld [vmem:[%s260 + $0x680] sm:$0xff]
          %v1092 = vld [vmem:[%s260 + $0x780] sm:$0xff]
          %v1093 = vadd.f32 %v1077, %v1085
          %v1094 = vadd.f32 %v1078, %v1086
          %v1095 = vadd.f32 %v1079, %v1087
          %v1096 = vadd.f32 %v1080, %v1088
          %v1097 = vadd.f32 %v1081, %v1089
          %v1098 = vadd.f32 %v1082, %v1090
          %v1099 = vadd.f32 %v1083, %v1091
          %v1100 = vadd.f32 %v1084, %v1092
          %v1101 = vld [vmem:[%s260 + $0x88] sm:$0xff]
          %v1102 = vld [vmem:[%s260 + $0x188] sm:$0xff]
          %v1103 = vld [vmem:[%s260 + $0x288] sm:$0xff]
          %v1104 = vld [vmem:[%s260 + $0x388] sm:$0xff]
          %v1105 = vld [vmem:[%s260 + $0x488] sm:$0xff]
          %v1106 = vld [vmem:[%s260 + $0x588] sm:$0xff]
          %v1107 = vld [vmem:[%s260 + $0x688] sm:$0xff]
          %v1108 = vld [vmem:[%s260 + $0x788] sm:$0xff]
          %v1109 = vadd.f32 %v1093, %v1101
          %v1110 = vadd.f32 %v1094, %v1102
          %v1111 = vadd.f32 %v1095, %v1103
          %v1112 = vadd.f32 %v1096, %v1104
          %v1113 = vadd.f32 %v1097, %v1105
          %v1114 = vadd.f32 %v1098, %v1106
          %v1115 = vadd.f32 %v1099, %v1107
          %v1116 = vadd.f32 %v1100, %v1108
          %v1117 = vld [vmem:[%s260 + $0x90] sm:$0xff]
          %v1118 = vld [vmem:[%s260 + $0x190] sm:$0xff]
          %v1119 = vld [vmem:[%s260 + $0x290] sm:$0xff]
          %v1120 = vld [vmem:[%s260 + $0x390] sm:$0xff]
          %v1121 = vld [vmem:[%s260 + $0x490] sm:$0xff]
          %v1122 = vld [vmem:[%s260 + $0x590] sm:$0xff]
          %v1123 = vld [vmem:[%s260 + $0x690] sm:$0xff]
          %v1124 = vld [vmem:[%s260 + $0x790] sm:$0xff]
          %v1125 = vadd.f32 %v1109, %v1117
          %v1126 = vadd.f32 %v1110, %v1118
          %v1127 = vadd.f32 %v1111, %v1119
          %v1128 = vadd.f32 %v1112, %v1120
          %v1129 = vadd.f32 %v1113, %v1121
          %v1130 = vadd.f32 %v1114, %v1122
          %v1131 = vadd.f32 %v1115, %v1123
          %v1132 = vadd.f32 %v1116, %v1124
          %v1133 = vld [vmem:[%s260 + $0x98] sm:$0xff]
          %v1134 = vld [vmem:[%s260 + $0x198] sm:$0xff]
          %v1135 = vld [vmem:[%s260 + $0x298] sm:$0xff]
          %v1136 = vld [vmem:[%s260 + $0x398] sm:$0xff]
          %v1137 = vld [vmem:[%s260 + $0x498] sm:$0xff]
          %v1138 = vld [vmem:[%s260 + $0x598] sm:$0xff]
          %v1139 = vld [vmem:[%s260 + $0x698] sm:$0xff]
          %v1140 = vld [vmem:[%s260 + $0x798] sm:$0xff]
          %v1141 = vadd.f32 %v1125, %v1133
          %v1142 = vadd.f32 %v1126, %v1134
          %v1143 = vadd.f32 %v1127, %v1135
          %v1144 = vadd.f32 %v1128, %v1136
          %v1145 = vadd.f32 %v1129, %v1137
          %v1146 = vadd.f32 %v1130, %v1138
          %v1147 = vadd.f32 %v1131, %v1139
          %v1148 = vadd.f32 %v1132, %v1140
          %v1149 = vld [vmem:[%s260 + $0xa0] sm:$0xff]
          %v1150 = vld [vmem:[%s260 + $0x1a0] sm:$0xff]
          %v1151 = vld [vmem:[%s260 + $0x2a0] sm:$0xff]
          %v1152 = vld [vmem:[%s260 + $0x3a0] sm:$0xff]
          %v1153 = vld [vmem:[%s260 + $0x4a0] sm:$0xff]
          %v1154 = vld [vmem:[%s260 + $0x5a0] sm:$0xff]
          %v1155 = vld [vmem:[%s260 + $0x6a0] sm:$0xff]
          %v1156 = vld [vmem:[%s260 + $0x7a0] sm:$0xff]
          %v1157 = vadd.f32 %v1141, %v1149
          %v1158 = vadd.f32 %v1142, %v1150
          %v1159 = vadd.f32 %v1143, %v1151
          %v1160 = vadd.f32 %v1144, %v1152
          %v1161 = vadd.f32 %v1145, %v1153
          %v1162 = vadd.f32 %v1146, %v1154
          %v1163 = vadd.f32 %v1147, %v1155
          %v1164 = vadd.f32 %v1148, %v1156
          %v1165 = vld [vmem:[%s260 + $0xa8] sm:$0xff]
          %v1166 = vld [vmem:[%s260 + $0x1a8] sm:$0xff]
          %v1167 = vld [vmem:[%s260 + $0x2a8] sm:$0xff]
          %v1168 = vld [vmem:[%s260 + $0x3a8] sm:$0xff]
          %v1169 = vld [vmem:[%s260 + $0x4a8] sm:$0xff]
          %v1170 = vld [vmem:[%s260 + $0x5a8] sm:$0xff]
          %v1171 = vld [vmem:[%s260 + $0x6a8] sm:$0xff]
          %v1172 = vld [vmem:[%s260 + $0x7a8] sm:$0xff]
          %v1173 = vadd.f32 %v1157, %v1165
          %v1174 = vadd.f32 %v1158, %v1166
          %v1175 = vadd.f32 %v1159, %v1167
          %v1176 = vadd.f32 %v1160, %v1168
          %v1177 = vadd.f32 %v1161, %v1169
          %v1178 = vadd.f32 %v1162, %v1170
          %v1179 = vadd.f32 %v1163, %v1171
          %v1180 = vadd.f32 %v1164, %v1172
          %v1181 = vld [vmem:[%s260 + $0xb0] sm:$0xff]
          %v1182 = vld [vmem:[%s260 + $0x1b0] sm:$0xff]
          %v1183 = vld [vmem:[%s260 + $0x2b0] sm:$0xff]
          %v1184 = vld [vmem:[%s260 + $0x3b0] sm:$0xff]
          %v1185 = vld [vmem:[%s260 + $0x4b0] sm:$0xff]
          %v1186 = vld [vmem:[%s260 + $0x5b0] sm:$0xff]
          %v1187 = vld [vmem:[%s260 + $0x6b0] sm:$0xff]
          %v1188 = vld [vmem:[%s260 + $0x7b0] sm:$0xff]
          %v1189 = vadd.f32 %v1173, %v1181
          %v1190 = vadd.f32 %v1174, %v1182
          %v1191 = vadd.f32 %v1175, %v1183
          %v1192 = vadd.f32 %v1176, %v1184
          %v1193 = vadd.f32 %v1177, %v1185
          %v1194 = vadd.f32 %v1178, %v1186
          %v1195 = vadd.f32 %v1179, %v1187
          %v1196 = vadd.f32 %v1180, %v1188
          %v1197 = vld [vmem:[%s260 + $0xb8] sm:$0xff]
          %v1198 = vld [vmem:[%s260 + $0x1b8] sm:$0xff]
          %v1199 = vld [vmem:[%s260 + $0x2b8] sm:$0xff]
          %v1200 = vld [vmem:[%s260 + $0x3b8] sm:$0xff]
          %v1201 = vld [vmem:[%s260 + $0x4b8] sm:$0xff]
          %v1202 = vld [vmem:[%s260 + $0x5b8] sm:$0xff]
          %v1203 = vld [vmem:[%s260 + $0x6b8] sm:$0xff]
          %v1204 = vld [vmem:[%s260 + $0x7b8] sm:$0xff]
          %v1205 = vadd.f32 %v1189, %v1197
          %v1206 = vadd.f32 %v1190, %v1198
          %v1207 = vadd.f32 %v1191, %v1199
          %v1208 = vadd.f32 %v1192, %v1200
          %v1209 = vadd.f32 %v1193, %v1201
          %v1210 = vadd.f32 %v1194, %v1202
          %v1211 = vadd.f32 %v1195, %v1203
          %v1212 = vadd.f32 %v1196, %v1204
          %v1213 = vld [vmem:[%s260 + $0xc0] sm:$0xff]
          %v1214 = vld [vmem:[%s260 + $0x1c0] sm:$0xff]
          %v1215 = vld [vmem:[%s260 + $0x2c0] sm:$0xff]
          %v1216 = vld [vmem:[%s260 + $0x3c0] sm:$0xff]
          %v1217 = vld [vmem:[%s260 + $0x4c0] sm:$0xff]
          %v1218 = vld [vmem:[%s260 + $0x5c0] sm:$0xff]
          %v1219 = vld [vmem:[%s260 + $0x6c0] sm:$0xff]
          %v1220 = vld [vmem:[%s260 + $0x7c0] sm:$0xff]
          %v1221 = vadd.f32 %v1205, %v1213
          %v1222 = vadd.f32 %v1206, %v1214
          %v1223 = vadd.f32 %v1207, %v1215
          %v1224 = vadd.f32 %v1208, %v1216
          %v1225 = vadd.f32 %v1209, %v1217
          %v1226 = vadd.f32 %v1210, %v1218
          %v1227 = vadd.f32 %v1211, %v1219
          %v1228 = vadd.f32 %v1212, %v1220
          %v1229 = vld [vmem:[%s260 + $0xc8] sm:$0xff]
          %v1230 = vld [vmem:[%s260 + $0x1c8] sm:$0xff]
          %v1231 = vld [vmem:[%s260 + $0x2c8] sm:$0xff]
          %v1232 = vld [vmem:[%s260 + $0x3c8] sm:$0xff]
          %v1233 = vld [vmem:[%s260 + $0x4c8] sm:$0xff]
          %v1234 = vld [vmem:[%s260 + $0x5c8] sm:$0xff]
          %v1235 = vld [vmem:[%s260 + $0x6c8] sm:$0xff]
          %v1236 = vld [vmem:[%s260 + $0x7c8] sm:$0xff]
          %v1237 = vadd.f32 %v1221, %v1229
          %v1238 = vadd.f32 %v1222, %v1230
          %v1239 = vadd.f32 %v1223, %v1231
          %v1240 = vadd.f32 %v1224, %v1232
          %v1241 = vadd.f32 %v1225, %v1233
          %v1242 = vadd.f32 %v1226, %v1234
          %v1243 = vadd.f32 %v1227, %v1235
          %v1244 = vadd.f32 %v1228, %v1236
          %v1245 = vld [vmem:[%s260 + $0xd0] sm:$0xff]
          %v1246 = vld [vmem:[%s260 + $0x1d0] sm:$0xff]
          %v1247 = vld [vmem:[%s260 + $0x2d0] sm:$0xff]
          %v1248 = vld [vmem:[%s260 + $0x3d0] sm:$0xff]
          %v1249 = vld [vmem:[%s260 + $0x4d0] sm:$0xff]
          %v1250 = vld [vmem:[%s260 + $0x5d0] sm:$0xff]
          %v1251 = vld [vmem:[%s260 + $0x6d0] sm:$0xff]
          %v1252 = vld [vmem:[%s260 + $0x7d0] sm:$0xff]
          %v1253 = vadd.f32 %v1237, %v1245
          %v1254 = vadd.f32 %v1238, %v1246
          %v1255 = vadd.f32 %v1239, %v1247
          %v1256 = vadd.f32 %v1240, %v1248
          %v1257 = vadd.f32 %v1241, %v1249
          %v1258 = vadd.f32 %v1242, %v1250
          %v1259 = vadd.f32 %v1243, %v1251
          %v1260 = vadd.f32 %v1244, %v1252
          %v1261 = vld [vmem:[%s260 + $0xd8] sm:$0xff]
          %v1262 = vld [vmem:[%s260 + $0x1d8] sm:$0xff]
          %v1263 = vld [vmem:[%s260 + $0x2d8] sm:$0xff]
          %v1264 = vld [vmem:[%s260 + $0x3d8] sm:$0xff]
          %v1265 = vld [vmem:[%s260 + $0x4d8] sm:$0xff]
          %v1266 = vld [vmem:[%s260 + $0x5d8] sm:$0xff]
          %v1267 = vld [vmem:[%s260 + $0x6d8] sm:$0xff]
          %v1268 = vld [vmem:[%s260 + $0x7d8] sm:$0xff]
          %v1269 = vadd.f32 %v1253, %v1261
          %v1270 = vadd.f32 %v1254, %v1262
          %v1271 = vadd.f32 %v1255, %v1263
          %v1272 = vadd.f32 %v1256, %v1264
          %v1273 = vadd.f32 %v1257, %v1265
          %v1274 = vadd.f32 %v1258, %v1266
          %v1275 = vadd.f32 %v1259, %v1267
          %v1276 = vadd.f32 %v1260, %v1268
          %v1277 = vld [vmem:[%s260 + $0xe0] sm:$0xff]
          %v1278 = vld [vmem:[%s260 + $0x1e0] sm:$0xff]
          %v1279 = vld [vmem:[%s260 + $0x2e0] sm:$0xff]
          %v1280 = vld [vmem:[%s260 + $0x3e0] sm:$0xff]
          %v1281 = vld [vmem:[%s260 + $0x4e0] sm:$0xff]
          %v1282 = vld [vmem:[%s260 + $0x5e0] sm:$0xff]
          %v1283 = vld [vmem:[%s260 + $0x6e0] sm:$0xff]
          %v1284 = vld [vmem:[%s260 + $0x7e0] sm:$0xff]
          %v1285 = vadd.f32 %v1269, %v1277
          %v1286 = vadd.f32 %v1270, %v1278
          %v1287 = vadd.f32 %v1271, %v1279
          %v1288 = vadd.f32 %v1272, %v1280
          %v1289 = vadd.f32 %v1273, %v1281
          %v1290 = vadd.f32 %v1274, %v1282
          %v1291 = vadd.f32 %v1275, %v1283
          %v1292 = vadd.f32 %v1276, %v1284
          %v1293 = vld [vmem:[%s260 + $0xe8] sm:$0xff]
          %v1294 = vld [vmem:[%s260 + $0x1e8] sm:$0xff]
          %v1295 = vld [vmem:[%s260 + $0x2e8] sm:$0xff]
          %v1296 = vld [vmem:[%s260 + $0x3e8] sm:$0xff]
          %v1297 = vld [vmem:[%s260 + $0x4e8] sm:$0xff]
          %v1298 = vld [vmem:[%s260 + $0x5e8] sm:$0xff]
          %v1299 = vld [vmem:[%s260 + $0x6e8] sm:$0xff]
          %v1300 = vld [vmem:[%s260 + $0x7e8] sm:$0xff]
          %v1301 = vadd.f32 %v1285, %v1293
          %v1302 = vadd.f32 %v1286, %v1294
          %v1303 = vadd.f32 %v1287, %v1295
          %v1304 = vadd.f32 %v1288, %v1296
          %v1305 = vadd.f32 %v1289, %v1297
          %v1306 = vadd.f32 %v1290, %v1298
          %v1307 = vadd.f32 %v1291, %v1299
          %v1308 = vadd.f32 %v1292, %v1300
          %v1309 = vld [vmem:[%s260 + $0xf0] sm:$0xff]
          %v1310 = vld [vmem:[%s260 + $0x1f0] sm:$0xff]
          %v1311 = vld [vmem:[%s260 + $0x2f0] sm:$0xff]
          %v1312 = vld [vmem:[%s260 + $0x3f0] sm:$0xff]
          %v1313 = vld [vmem:[%s260 + $0x4f0] sm:$0xff]
          %v1314 = vld [vmem:[%s260 + $0x5f0] sm:$0xff]
          %v1315 = vld [vmem:[%s260 + $0x6f0] sm:$0xff]
          %v1316 = vld [vmem:[%s260 + $0x7f0] sm:$0xff]
          %v1317 = vadd.f32 %v1301, %v1309
          %v1318 = vadd.f32 %v1302, %v1310
          %v1319 = vadd.f32 %v1303, %v1311
          %v1320 = vadd.f32 %v1304, %v1312
          %v1321 = vadd.f32 %v1305, %v1313
          %v1322 = vadd.f32 %v1306, %v1314
          %v1323 = vadd.f32 %v1307, %v1315
          %v1324 = vadd.f32 %v1308, %v1316
          %v1325 = vld [vmem:[%s260 + $0xf8] sm:$0xff]
          %v1326 = vld [vmem:[%s260 + $0x1f8] sm:$0xff]
          %v1327 = vld [vmem:[%s260 + $0x2f8] sm:$0xff]
          %v1328 = vld [vmem:[%s260 + $0x3f8] sm:$0xff]
          %v1329 = vld [vmem:[%s260 + $0x4f8] sm:$0xff]
          %v1330 = vld [vmem:[%s260 + $0x5f8] sm:$0xff]
          %v1331 = vld [vmem:[%s260 + $0x6f8] sm:$0xff]
          %v1332 = vld [vmem:[%s260 + $0x7f8] sm:$0xff]
          %v1333 = vadd.f32 %v1317, %v1325
          %v1334 = vadd.f32 %v1318, %v1326
          %v1335 = vadd.f32 %v1319, %v1327
          %v1336 = vadd.f32 %v1320, %v1328
          %v1337 = vadd.f32 %v1321, %v1329
          %v1338 = vadd.f32 %v1322, %v1330
          %v1339 = vadd.f32 %v1323, %v1331
          %v1340 = vadd.f32 %v1324, %v1332
          %v1341 = vadd.f32 %v829, %v1333
          %v1342 = vadd.f32 %v830, %v1334
          %v1343 = vadd.f32 %v831, %v1335
          %v1344 = vadd.f32 %v832, %v1336
          %v1345 = vadd.f32 %v833, %v1337
          %v1346 = vadd.f32 %v834, %v1338
          %v1347 = vadd.f32 %v835, %v1339
          %v1348 = vadd.f32 %v836, %v1340
          %1349 = vst [vmem:[#allocation3] sm:$0xff] %v1341
          %1350 = vst [vmem:[#allocation3 + $0x8] sm:$0xff] %v1342
          %1351 = vst [vmem:[#allocation3 + $0x10] sm:$0xff] %v1343
          %1352 = vst [vmem:[#allocation3 + $0x18] sm:$0xff] %v1344
          %1353 = vst [vmem:[#allocation3 + $0x20] sm:$0xff] %v1345
          %1354 = vst [vmem:[#allocation3 + $0x28] sm:$0xff] %v1346
          %1355 = vst [vmem:[#allocation3 + $0x30] sm:$0xff] %v1347
          %1356 = vst [vmem:[#allocation3 + $0x38] sm:$0xff] %v1348
          // Predicated region
          $region57: #{tpu_custom_call.1} parent=55 // pred_check
            %p1357 = pneg %p298
          $region58: #{tpu_custom_call.1} parent=55 // pred_check_branch
            %1359 = sbr.rel (%p1357) target = $region60
          $region59: #{tpu_custom_call.1} parent=55 // pred_region
            %v1360 = vld [vmem:[#allocation3] sm:$0xff]
            %v1361 = vld [vmem:[#allocation3 + $0x8] sm:$0xff]
            %v1362 = vld [vmem:[#allocation3 + $0x10] sm:$0xff]
            %v1363 = vld [vmem:[#allocation3 + $0x18] sm:$0xff]
            %v1364 = vld [vmem:[#allocation3 + $0x20] sm:$0xff]
            %v1365 = vld [vmem:[#allocation3 + $0x28] sm:$0xff]
            %v1366 = vld [vmem:[#allocation3 + $0x30] sm:$0xff]
            %v1367 = vld [vmem:[#allocation3 + $0x38] sm:$0xff]
            %1368 = vadd.xlane.f32.xlu0 %v1360
            %v1369 = vpop.xlane.xlu0 %1368
            %1370 = vadd.xlane.f32.xlu0 %v1361
            %v1371 = vpop.xlane.xlu0 %1370
            %1372 = vadd.xlane.f32.xlu0 %v1362
            %v1373 = vpop.xlane.xlu0 %1372
            %1374 = vadd.xlane.f32.xlu0 %v1363
            %v1375 = vpop.xlane.xlu0 %1374
            %1376 = vadd.xlane.f32.xlu0 %v1364
            %v1377 = vpop.xlane.xlu0 %1376
            %1378 = vadd.xlane.f32.xlu0 %v1365
            %v1379 = vpop.xlane.xlu0 %1378
            %1380 = vadd.xlane.f32.xlu0 %v1366
            %v1381 = vpop.xlane.xlu0 %1380
            %1382 = vadd.xlane.f32.xlu0 %v1367
            %v1383 = vpop.xlane.xlu0 %1382
            %v1384 = vmul.f32 %v1369, 0.00024414063
            %v1385 = vmul.f32 %v1371, 0.00024414063
            %v1386 = vmul.f32 %v1373, 0.00024414063
            %v1387 = vmul.f32 %v1375, 0.00024414063
            %v1388 = vmul.f32 %v1377, 0.00024414063
            %v1389 = vmul.f32 %v1379, 0.00024414063
            %v1390 = vmul.f32 %v1381, 0.00024414063
            %v1391 = vmul.f32 %v1383, 0.00024414063
            %v1392 = vld [vmem:[%s1] sm:$0xff]
            %v1393 = vld [vmem:[%s1 + $0x8] sm:$0xff]
            %v1394 = vld [vmem:[%s1 + $0x10] sm:$0xff]
            %v1395 = vld [vmem:[%s1 + $0x18] sm:$0xff]
            %v1396 = vld [vmem:[%s1 + $0x20] sm:$0xff]
            %v1397 = vld [vmem:[%s1 + $0x28] sm:$0xff]
            %v1398 = vld [vmem:[%s1 + $0x30] sm:$0xff]
            %v1399 = vld [vmem:[%s1 + $0x38] sm:$0xff]
            %v1400 = vmul.f32 %v1392, %v1384
            %v1401 = vmul.f32 %v1393, %v1385
            %v1402 = vmul.f32 %v1394, %v1386
            %v1403 = vmul.f32 %v1395, %v1387
            %v1404 = vmul.f32 %v1396, %v1388
            %v1405 = vmul.f32 %v1397, %v1389
            %v1406 = vmul.f32 %v1398, %v1390
            %v1407 = vmul.f32 %v1399, %v1391
            %vm1408 = vcmask 31744
            %v1409 = vsel %vm1408, %v1400, 0.0
            %v1410 = vsel %vm1408, %v1401, 0.0
            %v1411 = vadd.f32 %v1409, %v1410
            %v1412 = vsel %vm1408, %v1402, 0.0
            %v1413 = vadd.f32 %v1411, %v1412
            %v1414 = vsel %vm1408, %v1403, 0.0
            %v1415 = vadd.f32 %v1413, %v1414
            %v1416 = vsel %vm1408, %v1404, 0.0
            %v1417 = vadd.f32 %v1415, %v1416
            %v1418 = vsel %vm1408, %v1405, 0.0
            %v1419 = vadd.f32 %v1417, %v1418
            %v1420 = vsel %vm1408, %v1406, 0.0
            %v1421 = vadd.f32 %v1419, %v1420
            %v1422 = vsel %vm1408, %v1407, 0.0
            %v1423 = vadd.f32 %v1421, %v1422
            %v1424 = vrot.slane %v1423, 4
            %v1425 = vadd.f32 %v1423, %v1424
            %v1426 = vrot.slane %v1425, 2
            %v1427 = vadd.f32 %v1425, %v1426
            %v1428 = vrot.slane %v1427, 1
            %v1429 = vadd.f32 %v1427, %v1428
            %v1430 = vld [vmem:[#allocation8] sm:$0x1]
            %v1431 = vadd.f32 %v1429, %v1430
            %v1432 = vmax.f32 %v1431, 0.0
            %v1433 = vld [vmem:[%s3] sm:$0xff]
            %v1434 = vld [vmem:[%s3 + $0x8] sm:$0xff]
            %v1435 = vld [vmem:[%s3 + $0x10] sm:$0xff]
            %v1436 = vld [vmem:[%s3 + $0x18] sm:$0xff]
            %v1437 = vld [vmem:[%s3 + $0x20] sm:$0xff]
            %v1438 = vld [vmem:[%s3 + $0x28] sm:$0xff]
            %v1439 = vld [vmem:[%s3 + $0x30] sm:$0xff]
            %v1440 = vld [vmem:[%s3 + $0x38] sm:$0xff]
            %v1441 = vlaneseq
            %v1442 = vshrl.u32 %v1441, 7
            %v1443 = vsub.s32 0, %v1442
            %v1444 = vrot.slane %v1432, %v1443
            %v1445 = vmul.f32 %v1433, %v1444
            %v1446 = vmul.f32 %v1434, %v1444
            %v1447 = vmul.f32 %v1435, %v1444
            %v1448 = vmul.f32 %v1436, %v1444
            %v1449 = vmul.f32 %v1437, %v1444
            %v1450 = vmul.f32 %v1438, %v1444
            %v1451 = vmul.f32 %v1439, %v1444
            %v1452 = vmul.f32 %v1440, %v1444
            %v1453 = vsel %vm1408, %v1445, 0.0
            %1454 = vadd.xlane.f32.xlu0 %v1453
            %v1455 = vpop.xlane.xlu0 %1454
            %v1456 = vsel %vm1408, %v1446, 0.0
            %1457 = vadd.xlane.f32.xlu0 %v1456
            %v1458 = vpop.xlane.xlu0 %1457
            %v1459 = vsel %vm1408, %v1447, 0.0
            %1460 = vadd.xlane.f32.xlu0 %v1459
            %v1461 = vpop.xlane.xlu0 %1460
            %v1462 = vsel %vm1408, %v1448, 0.0
            %1463 = vadd.xlane.f32.xlu0 %v1462
            %v1464 = vpop.xlane.xlu0 %1463
            %v1465 = vsel %vm1408, %v1449, 0.0
            %1466 = vadd.xlane.f32.xlu0 %v1465
            %v1467 = vpop.xlane.xlu0 %1466
            %v1468 = vsel %vm1408, %v1450, 0.0
            %1469 = vadd.xlane.f32.xlu0 %v1468
            %v1470 = vpop.xlane.xlu0 %1469
            %v1471 = vsel %vm1408, %v1451, 0.0
            %1472 = vadd.xlane.f32.xlu0 %v1471
            %v1473 = vpop.xlane.xlu0 %1472
            %v1474 = vsel %vm1408, %v1452, 0.0
            %1475 = vadd.xlane.f32.xlu0 %v1474
            %v1476 = vpop.xlane.xlu0 %1475
            %v1477 = vld [vmem:[%s4] sm:$0xff]
            %v1478 = vld [vmem:[%s4 + $0x8] sm:$0xff]
            %v1479 = vld [vmem:[%s4 + $0x10] sm:$0xff]
            %v1480 = vld [vmem:[%s4 + $0x18] sm:$0xff]
            %v1481 = vld [vmem:[%s4 + $0x20] sm:$0xff]
            %v1482 = vld [vmem:[%s4 + $0x28] sm:$0xff]
            %v1483 = vld [vmem:[%s4 + $0x30] sm:$0xff]
            %v1484 = vld [vmem:[%s4 + $0x38] sm:$0xff]
            %v1485 = vadd.f32 %v1455, %v1477
            %v1486 = vadd.f32 %v1458, %v1478
            %v1487 = vadd.f32 %v1461, %v1479
            %v1488 = vadd.f32 %v1464, %v1480
            %v1489 = vadd.f32 %v1467, %v1481
            %v1490 = vadd.f32 %v1470, %v1482
            %v1491 = vadd.f32 %v1473, %v1483
            %v1492 = vadd.f32 %v1476, %v1484
            %v1493 = vsub.f32 0.0, %v1485
            %v1494 = vsub.f32 0.0, %v1486
            %v1495 = vsub.f32 0.0, %v1487
            %v1496 = vsub.f32 0.0, %v1488
            %v1497 = vsub.f32 0.0, %v1489
            %v1498 = vsub.f32 0.0, %v1490
            %v1499 = vsub.f32 0.0, %v1491
            %v1500 = vsub.f32 0.0, %v1492
            %v1501 = vmul.f32 %v1493, 1.442695
            %v1502 = vpow.pop %v1501
            %v1503 = vmul.f32 %v1494, 1.442695
            %v1504 = vpow.pop %v1503
            %v1505 = vmul.f32 %v1495, 1.442695
            %v1506 = vpow.pop %v1505
            %v1507 = vmul.f32 %v1496, 1.442695
            %v1508 = vpow.pop %v1507
            %v1509 = vmul.f32 %v1497, 1.442695
            %v1510 = vpow.pop %v1509
            %v1511 = vmul.f32 %v1498, 1.442695
            %v1512 = vpow.pop %v1511
            %v1513 = vmul.f32 %v1499, 1.442695
            %v1514 = vpow.pop %v1513
            %v1515 = vmul.f32 %v1500, 1.442695
            %v1516 = vpow.pop %v1515
            %v1517 = vadd.f32 %v1502, 1.0
            %v1518 = vadd.f32 %v1504, 1.0
            %v1519 = vadd.f32 %v1506, 1.0
            %v1520 = vadd.f32 %v1508, 1.0
            %v1521 = vadd.f32 %v1510, 1.0
            %v1522 = vadd.f32 %v1512, 1.0
            %v1523 = vadd.f32 %v1514, 1.0
            %v1524 = vadd.f32 %v1516, 1.0
            %v1525 = vrcp.pop %v1517
            %v1526 = vmul.f32 1.0, %v1525
            %v1527 = vrcp.pop %v1518
            %v1528 = vmul.f32 1.0, %v1527
            %v1529 = vrcp.pop %v1519
            %v1530 = vmul.f32 1.0, %v1529
            %v1531 = vrcp.pop %v1520
            %v1532 = vmul.f32 1.0, %v1531
            %v1533 = vrcp.pop %v1521
            %v1534 = vmul.f32 1.0, %v1533
            %v1535 = vrcp.pop %v1522
            %v1536 = vmul.f32 1.0, %v1535
            %v1537 = vrcp.pop %v1523
            %v1538 = vmul.f32 1.0, %v1537
            %v1539 = vrcp.pop %v1524
            %v1540 = vmul.f32 1.0, %v1539
            %vm1541 = vcmask 7168
            %1542 = vst.msk [vmem:[#allocation4] sm:$0xff] %vm1541, %v1526
            %1543 = vst.msk [vmem:[#allocation4 + $0x8] sm:$0xff] %vm1541, %v1528
            %1544 = vst.msk [vmem:[#allocation4 + $0x10] sm:$0xff] %vm1541, %v1530
            %1545 = vst.msk [vmem:[#allocation4 + $0x18] sm:$0xff] %vm1541, %v1532
            %1546 = vst.msk [vmem:[#allocation4 + $0x20] sm:$0xff] %vm1541, %v1534
            %1547 = vst.msk [vmem:[#allocation4 + $0x28] sm:$0xff] %vm1541, %v1536
            %1548 = vst.msk [vmem:[#allocation4 + $0x30] sm:$0xff] %vm1541, %v1538
            %1549 = vst.msk [vmem:[#allocation4 + $0x38] sm:$0xff] %vm1541, %v1540
          $region60: #{tpu_custom_call.1} parent=55 // pred_fallthru
            _
        $region56: #{tpu_custom_call.1} parent=39 // pred_fallthru
          _
        %p1550 = scmp.eq.s32.totalorder %s29, 1
        // Predicated region
        $region61: #{tpu_custom_call.1} parent=39 // pred_check
          %p1551 = pneg %p1550
        $region62: #{tpu_custom_call.1} parent=39 // pred_check_branch
          %1553 = sbr.rel (%p1551) target = $region64
        $region63: #{tpu_custom_call.1} parent=39 // pred_region
          %s1554 = smul.u32 %s30, 256
          %s1555 = smul.addr %s1554, 8
          %s1556 = scalar_lea.vmem [#allocation2], %s1555
          %v1557 = vld [vmem:[%s1556] sm:$0xff]
          %v1558 = vld [vmem:[%s1556 + $0x8] sm:$0xff]
          %v1559 = vld [vmem:[%s1556 + $0x10] sm:$0xff]
          %v1560 = vld [vmem:[%s1556 + $0x18] sm:$0xff]
          %v1561 = vld [vmem:[%s1556 + $0x20] sm:$0xff]
          %v1562 = vld [vmem:[%s1556 + $0x28] sm:$0xff]
          %v1563 = vld [vmem:[%s1556 + $0x30] sm:$0xff]
          %v1564 = vld [vmem:[%s1556 + $0x38] sm:$0xff]
          %v1565 = vld [vmem:[%s1556 + $0x40] sm:$0xff]
          %v1566 = vld [vmem:[%s1556 + $0x48] sm:$0xff]
          %v1567 = vld [vmem:[%s1556 + $0x50] sm:$0xff]
          %v1568 = vld [vmem:[%s1556 + $0x58] sm:$0xff]
          %v1569 = vld [vmem:[%s1556 + $0x60] sm:$0xff]
          %v1570 = vld [vmem:[%s1556 + $0x68] sm:$0xff]
          %v1571 = vld [vmem:[%s1556 + $0x70] sm:$0xff]
          %v1572 = vld [vmem:[%s1556 + $0x78] sm:$0xff]
          %v1573 = vld [vmem:[%s1556 + $0x80] sm:$0xff]
          %v1574 = vld [vmem:[%s1556 + $0x88] sm:$0xff]
          %v1575 = vld [vmem:[%s1556 + $0x90] sm:$0xff]
          %v1576 = vld [vmem:[%s1556 + $0x98] sm:$0xff]
          %v1577 = vld [vmem:[%s1556 + $0xa0] sm:$0xff]
          %v1578 = vld [vmem:[%s1556 + $0xa8] sm:$0xff]
          %v1579 = vld [vmem:[%s1556 + $0xb0] sm:$0xff]
          %v1580 = vld [vmem:[%s1556 + $0xb8] sm:$0xff]
          %v1581 = vld [vmem:[%s1556 + $0xc0] sm:$0xff]
          %v1582 = vld [vmem:[%s1556 + $0xc8] sm:$0xff]
          %v1583 = vld [vmem:[%s1556 + $0xd0] sm:$0xff]
          %v1584 = vld [vmem:[%s1556 + $0xd8] sm:$0xff]
          %v1585 = vld [vmem:[%s1556 + $0xe0] sm:$0xff]
          %v1586 = vld [vmem:[%s1556 + $0xe8] sm:$0xff]
          %v1587 = vld [vmem:[%s1556 + $0xf0] sm:$0xff]
          %v1588 = vld [vmem:[%s1556 + $0xf8] sm:$0xff]
          %v1589 = vld [vmem:[%s1556 + $0x100] sm:$0xff]
          %v1590 = vld [vmem:[%s1556 + $0x108] sm:$0xff]
          %v1591 = vld [vmem:[%s1556 + $0x110] sm:$0xff]
          %v1592 = vld [vmem:[%s1556 + $0x118] sm:$0xff]
          %v1593 = vld [vmem:[%s1556 + $0x120] sm:$0xff]
          %v1594 = vld [vmem:[%s1556 + $0x128] sm:$0xff]
          %v1595 = vld [vmem:[%s1556 + $0x130] sm:$0xff]
          %v1596 = vld [vmem:[%s1556 + $0x138] sm:$0xff]
          %v1597 = vld [vmem:[%s1556 + $0x140] sm:$0xff]
          %v1598 = vld [vmem:[%s1556 + $0x148] sm:$0xff]
          %v1599 = vld [vmem:[%s1556 + $0x150] sm:$0xff]
          %v1600 = vld [vmem:[%s1556 + $0x158] sm:$0xff]
          %v1601 = vld [vmem:[%s1556 + $0x160] sm:$0xff]
          %v1602 = vld [vmem:[%s1556 + $0x168] sm:$0xff]
          %v1603 = vld [vmem:[%s1556 + $0x170] sm:$0xff]
          %v1604 = vld [vmem:[%s1556 + $0x178] sm:$0xff]
          %v1605 = vld [vmem:[%s1556 + $0x180] sm:$0xff]
          %v1606 = vld [vmem:[%s1556 + $0x188] sm:$0xff]
          %v1607 = vld [vmem:[%s1556 + $0x190] sm:$0xff]
          %v1608 = vld [vmem:[%s1556 + $0x198] sm:$0xff]
          %v1609 = vld [vmem:[%s1556 + $0x1a0] sm:$0xff]
          %v1610 = vld [vmem:[%s1556 + $0x1a8] sm:$0xff]
          %v1611 = vld [vmem:[%s1556 + $0x1b0] sm:$0xff]
          %v1612 = vld [vmem:[%s1556 + $0x1b8] sm:$0xff]
          %v1613 = vld [vmem:[%s1556 + $0x1c0] sm:$0xff]
          %v1614 = vld [vmem:[%s1556 + $0x1c8] sm:$0xff]
          %v1615 = vld [vmem:[%s1556 + $0x1d0] sm:$0xff]
          %v1616 = vld [vmem:[%s1556 + $0x1d8] sm:$0xff]
          %v1617 = vld [vmem:[%s1556 + $0x1e0] sm:$0xff]
          %v1618 = vld [vmem:[%s1556 + $0x1e8] sm:$0xff]
          %v1619 = vld [vmem:[%s1556 + $0x1f0] sm:$0xff]
          %v1620 = vld [vmem:[%s1556 + $0x1f8] sm:$0xff]
          %v1621 = vld [vmem:[%s1556 + $0x200] sm:$0xff]
          %v1622 = vld [vmem:[%s1556 + $0x208] sm:$0xff]
          %v1623 = vld [vmem:[%s1556 + $0x210] sm:$0xff]
          %v1624 = vld [vmem:[%s1556 + $0x218] sm:$0xff]
          %v1625 = vld [vmem:[%s1556 + $0x220] sm:$0xff]
          %v1626 = vld [vmem:[%s1556 + $0x228] sm:$0xff]
          %v1627 = vld [vmem:[%s1556 + $0x230] sm:$0xff]
          %v1628 = vld [vmem:[%s1556 + $0x238] sm:$0xff]
          %v1629 = vld [vmem:[%s1556 + $0x240] sm:$0xff]
          %v1630 = vld [vmem:[%s1556 + $0x248] sm:$0xff]
          %v1631 = vld [vmem:[%s1556 + $0x250] sm:$0xff]
          %v1632 = vld [vmem:[%s1556 + $0x258] sm:$0xff]
          %v1633 = vld [vmem:[%s1556 + $0x260] sm:$0xff]
          %v1634 = vld [vmem:[%s1556 + $0x268] sm:$0xff]
          %v1635 = vld [vmem:[%s1556 + $0x270] sm:$0xff]
          %v1636 = vld [vmem:[%s1556 + $0x278] sm:$0xff]
          %v1637 = vld [vmem:[%s1556 + $0x280] sm:$0xff]
          %v1638 = vld [vmem:[%s1556 + $0x288] sm:$0xff]
          %v1639 = vld [vmem:[%s1556 + $0x290] sm:$0xff]
          %v1640 = vld [vmem:[%s1556 + $0x298] sm:$0xff]
          %v1641 = vld [vmem:[%s1556 + $0x2a0] sm:$0xff]
          %v1642 = vld [vmem:[%s1556 + $0x2a8] sm:$0xff]
          %v1643 = vld [vmem:[%s1556 + $0x2b0] sm:$0xff]
          %v1644 = vld [vmem:[%s1556 + $0x2b8] sm:$0xff]
          %v1645 = vld [vmem:[%s1556 + $0x2c0] sm:$0xff]
          %v1646 = vld [vmem:[%s1556 + $0x2c8] sm:$0xff]
          %v1647 = vld [vmem:[%s1556 + $0x2d0] sm:$0xff]
          %v1648 = vld [vmem:[%s1556 + $0x2d8] sm:$0xff]
          %v1649 = vld [vmem:[%s1556 + $0x2e0] sm:$0xff]
          %v1650 = vld [vmem:[%s1556 + $0x2e8] sm:$0xff]
          %v1651 = vld [vmem:[%s1556 + $0x2f0] sm:$0xff]
          %v1652 = vld [vmem:[%s1556 + $0x2f8] sm:$0xff]
          %v1653 = vld [vmem:[%s1556 + $0x300] sm:$0xff]
          %v1654 = vld [vmem:[%s1556 + $0x308] sm:$0xff]
          %v1655 = vld [vmem:[%s1556 + $0x310] sm:$0xff]
          %v1656 = vld [vmem:[%s1556 + $0x318] sm:$0xff]
          %v1657 = vld [vmem:[%s1556 + $0x320] sm:$0xff]
          %v1658 = vld [vmem:[%s1556 + $0x328] sm:$0xff]
          %v1659 = vld [vmem:[%s1556 + $0x330] sm:$0xff]
          %v1660 = vld [vmem:[%s1556 + $0x338] sm:$0xff]
          %v1661 = vld [vmem:[%s1556 + $0x340] sm:$0xff]
          %v1662 = vld [vmem:[%s1556 + $0x348] sm:$0xff]
          %v1663 = vld [vmem:[%s1556 + $0x350] sm:$0xff]
          %v1664 = vld [vmem:[%s1556 + $0x358] sm:$0xff]
          %v1665 = vld [vmem:[%s1556 + $0x360] sm:$0xff]
          %v1666 = vld [vmem:[%s1556 + $0x368] sm:$0xff]
          %v1667 = vld [vmem:[%s1556 + $0x370] sm:$0xff]
          %v1668 = vld [vmem:[%s1556 + $0x378] sm:$0xff]
          %v1669 = vld [vmem:[%s1556 + $0x380] sm:$0xff]
          %v1670 = vld [vmem:[%s1556 + $0x388] sm:$0xff]
          %v1671 = vld [vmem:[%s1556 + $0x390] sm:$0xff]
          %v1672 = vld [vmem:[%s1556 + $0x398] sm:$0xff]
          %v1673 = vld [vmem:[%s1556 + $0x3a0] sm:$0xff]
          %v1674 = vld [vmem:[%s1556 + $0x3a8] sm:$0xff]
          %v1675 = vld [vmem:[%s1556 + $0x3b0] sm:$0xff]
          %v1676 = vld [vmem:[%s1556 + $0x3b8] sm:$0xff]
          %v1677 = vld [vmem:[%s1556 + $0x3c0] sm:$0xff]
          %v1678 = vld [vmem:[%s1556 + $0x3c8] sm:$0xff]
          %v1679 = vld [vmem:[%s1556 + $0x3d0] sm:$0xff]
          %v1680 = vld [vmem:[%s1556 + $0x3d8] sm:$0xff]
          %v1681 = vld [vmem:[%s1556 + $0x3e0] sm:$0xff]
          %v1682 = vld [vmem:[%s1556 + $0x3e8] sm:$0xff]
          %v1683 = vld [vmem:[%s1556 + $0x3f0] sm:$0xff]
          %v1684 = vld [vmem:[%s1556 + $0x3f8] sm:$0xff]
          %v1685 = vld [vmem:[%s1556 + $0x400] sm:$0xff]
          %v1686 = vld [vmem:[%s1556 + $0x408] sm:$0xff]
          %v1687 = vld [vmem:[%s1556 + $0x410] sm:$0xff]
          %v1688 = vld [vmem:[%s1556 + $0x418] sm:$0xff]
          %v1689 = vld [vmem:[%s1556 + $0x420] sm:$0xff]
          %v1690 = vld [vmem:[%s1556 + $0x428] sm:$0xff]
          %v1691 = vld [vmem:[%s1556 + $0x430] sm:$0xff]
          %v1692 = vld [vmem:[%s1556 + $0x438] sm:$0xff]
          %v1693 = vld [vmem:[%s1556 + $0x440] sm:$0xff]
          %v1694 = vld [vmem:[%s1556 + $0x448] sm:$0xff]
          %v1695 = vld [vmem:[%s1556 + $0x450] sm:$0xff]
          %v1696 = vld [vmem:[%s1556 + $0x458] sm:$0xff]
          %v1697 = vld [vmem:[%s1556 + $0x460] sm:$0xff]
          %v1698 = vld [vmem:[%s1556 + $0x468] sm:$0xff]
          %v1699 = vld [vmem:[%s1556 + $0x470] sm:$0xff]
          %v1700 = vld [vmem:[%s1556 + $0x478] sm:$0xff]
          %v1701 = vld [vmem:[%s1556 + $0x480] sm:$0xff]
          %v1702 = vld [vmem:[%s1556 + $0x488] sm:$0xff]
          %v1703 = vld [vmem:[%s1556 + $0x490] sm:$0xff]
          %v1704 = vld [vmem:[%s1556 + $0x498] sm:$0xff]
          %v1705 = vld [vmem:[%s1556 + $0x4a0] sm:$0xff]
          %v1706 = vld [vmem:[%s1556 + $0x4a8] sm:$0xff]
          %v1707 = vld [vmem:[%s1556 + $0x4b0] sm:$0xff]
          %v1708 = vld [vmem:[%s1556 + $0x4b8] sm:$0xff]
          %v1709 = vld [vmem:[%s1556 + $0x4c0] sm:$0xff]
          %v1710 = vld [vmem:[%s1556 + $0x4c8] sm:$0xff]
          %v1711 = vld [vmem:[%s1556 + $0x4d0] sm:$0xff]
          %v1712 = vld [vmem:[%s1556 + $0x4d8] sm:$0xff]
          %v1713 = vld [vmem:[%s1556 + $0x4e0] sm:$0xff]
          %v1714 = vld [vmem:[%s1556 + $0x4e8] sm:$0xff]
          %v1715 = vld [vmem:[%s1556 + $0x4f0] sm:$0xff]
          %v1716 = vld [vmem:[%s1556 + $0x4f8] sm:$0xff]
          %v1717 = vld [vmem:[%s1556 + $0x500] sm:$0xff]
          %v1718 = vld [vmem:[%s1556 + $0x508] sm:$0xff]
          %v1719 = vld [vmem:[%s1556 + $0x510] sm:$0xff]
          %v1720 = vld [vmem:[%s1556 + $0x518] sm:$0xff]
          %v1721 = vld [vmem:[%s1556 + $0x520] sm:$0xff]
          %v1722 = vld [vmem:[%s1556 + $0x528] sm:$0xff]
          %v1723 = vld [vmem:[%s1556 + $0x530] sm:$0xff]
          %v1724 = vld [vmem:[%s1556 + $0x538] sm:$0xff]
          %v1725 = vld [vmem:[%s1556 + $0x540] sm:$0xff]
          %v1726 = vld [vmem:[%s1556 + $0x548] sm:$0xff]
          %v1727 = vld [vmem:[%s1556 + $0x550] sm:$0xff]
          %v1728 = vld [vmem:[%s1556 + $0x558] sm:$0xff]
          %v1729 = vld [vmem:[%s1556 + $0x560] sm:$0xff]
          %v1730 = vld [vmem:[%s1556 + $0x568] sm:$0xff]
          %v1731 = vld [vmem:[%s1556 + $0x570] sm:$0xff]
          %v1732 = vld [vmem:[%s1556 + $0x578] sm:$0xff]
          %v1733 = vld [vmem:[%s1556 + $0x580] sm:$0xff]
          %v1734 = vld [vmem:[%s1556 + $0x588] sm:$0xff]
          %v1735 = vld [vmem:[%s1556 + $0x590] sm:$0xff]
          %v1736 = vld [vmem:[%s1556 + $0x598] sm:$0xff]
          %v1737 = vld [vmem:[%s1556 + $0x5a0] sm:$0xff]
          %v1738 = vld [vmem:[%s1556 + $0x5a8] sm:$0xff]
          %v1739 = vld [vmem:[%s1556 + $0x5b0] sm:$0xff]
          %v1740 = vld [vmem:[%s1556 + $0x5b8] sm:$0xff]
          %v1741 = vld [vmem:[%s1556 + $0x5c0] sm:$0xff]
          %v1742 = vld [vmem:[%s1556 + $0x5c8] sm:$0xff]
          %v1743 = vld [vmem:[%s1556 + $0x5d0] sm:$0xff]
          %v1744 = vld [vmem:[%s1556 + $0x5d8] sm:$0xff]
          %v1745 = vld [vmem:[%s1556 + $0x5e0] sm:$0xff]
          %v1746 = vld [vmem:[%s1556 + $0x5e8] sm:$0xff]
          %v1747 = vld [vmem:[%s1556 + $0x5f0] sm:$0xff]
          %v1748 = vld [vmem:[%s1556 + $0x5f8] sm:$0xff]
          %v1749 = vld [vmem:[%s1556 + $0x600] sm:$0xff]
          %v1750 = vld [vmem:[%s1556 + $0x608] sm:$0xff]
          %v1751 = vld [vmem:[%s1556 + $0x610] sm:$0xff]
          %v1752 = vld [vmem:[%s1556 + $0x618] sm:$0xff]
          %v1753 = vld [vmem:[%s1556 + $0x620] sm:$0xff]
          %v1754 = vld [vmem:[%s1556 + $0x628] sm:$0xff]
          %v1755 = vld [vmem:[%s1556 + $0x630] sm:$0xff]
          %v1756 = vld [vmem:[%s1556 + $0x638] sm:$0xff]
          %v1757 = vld [vmem:[%s1556 + $0x640] sm:$0xff]
          %v1758 = vld [vmem:[%s1556 + $0x648] sm:$0xff]
          %v1759 = vld [vmem:[%s1556 + $0x650] sm:$0xff]
          %v1760 = vld [vmem:[%s1556 + $0x658] sm:$0xff]
          %v1761 = vld [vmem:[%s1556 + $0x660] sm:$0xff]
          %v1762 = vld [vmem:[%s1556 + $0x668] sm:$0xff]
          %v1763 = vld [vmem:[%s1556 + $0x670] sm:$0xff]
          %v1764 = vld [vmem:[%s1556 + $0x678] sm:$0xff]
          %v1765 = vld [vmem:[%s1556 + $0x680] sm:$0xff]
          %v1766 = vld [vmem:[%s1556 + $0x688] sm:$0xff]
          %v1767 = vld [vmem:[%s1556 + $0x690] sm:$0xff]
          %v1768 = vld [vmem:[%s1556 + $0x698] sm:$0xff]
          %v1769 = vld [vmem:[%s1556 + $0x6a0] sm:$0xff]
          %v1770 = vld [vmem:[%s1556 + $0x6a8] sm:$0xff]
          %v1771 = vld [vmem:[%s1556 + $0x6b0] sm:$0xff]
          %v1772 = vld [vmem:[%s1556 + $0x6b8] sm:$0xff]
          %v1773 = vld [vmem:[%s1556 + $0x6c0] sm:$0xff]
          %v1774 = vld [vmem:[%s1556 + $0x6c8] sm:$0xff]
          %v1775 = vld [vmem:[%s1556 + $0x6d0] sm:$0xff]
          %v1776 = vld [vmem:[%s1556 + $0x6d8] sm:$0xff]
          %v1777 = vld [vmem:[%s1556 + $0x6e0] sm:$0xff]
          %v1778 = vld [vmem:[%s1556 + $0x6e8] sm:$0xff]
          %v1779 = vld [vmem:[%s1556 + $0x6f0] sm:$0xff]
          %v1780 = vld [vmem:[%s1556 + $0x6f8] sm:$0xff]
          %v1781 = vld [vmem:[%s1556 + $0x700] sm:$0xff]
          %v1782 = vld [vmem:[%s1556 + $0x708] sm:$0xff]
          %v1783 = vld [vmem:[%s1556 + $0x710] sm:$0xff]
          %v1784 = vld [vmem:[%s1556 + $0x718] sm:$0xff]
          %v1785 = vld [vmem:[%s1556 + $0x720] sm:$0xff]
          %v1786 = vld [vmem:[%s1556 + $0x728] sm:$0xff]
          %v1787 = vld [vmem:[%s1556 + $0x730] sm:$0xff]
          %v1788 = vld [vmem:[%s1556 + $0x738] sm:$0xff]
          %v1789 = vld [vmem:[%s1556 + $0x740] sm:$0xff]
          %v1790 = vld [vmem:[%s1556 + $0x748] sm:$0xff]
          %v1791 = vld [vmem:[%s1556 + $0x750] sm:$0xff]
          %v1792 = vld [vmem:[%s1556 + $0x758] sm:$0xff]
          %v1793 = vld [vmem:[%s1556 + $0x760] sm:$0xff]
          %v1794 = vld [vmem:[%s1556 + $0x768] sm:$0xff]
          %v1795 = vld [vmem:[%s1556 + $0x770] sm:$0xff]
          %v1796 = vld [vmem:[%s1556 + $0x778] sm:$0xff]
          %v1797 = vld [vmem:[%s1556 + $0x780] sm:$0xff]
          %v1798 = vld [vmem:[%s1556 + $0x788] sm:$0xff]
          %v1799 = vld [vmem:[%s1556 + $0x790] sm:$0xff]
          %v1800 = vld [vmem:[%s1556 + $0x798] sm:$0xff]
          %v1801 = vld [vmem:[%s1556 + $0x7a0] sm:$0xff]
          %v1802 = vld [vmem:[%s1556 + $0x7a8] sm:$0xff]
          %v1803 = vld [vmem:[%s1556 + $0x7b0] sm:$0xff]
          %v1804 = vld [vmem:[%s1556 + $0x7b8] sm:$0xff]
          %v1805 = vld [vmem:[%s1556 + $0x7c0] sm:$0xff]
          %v1806 = vld [vmem:[%s1556 + $0x7c8] sm:$0xff]
          %v1807 = vld [vmem:[%s1556 + $0x7d0] sm:$0xff]
          %v1808 = vld [vmem:[%s1556 + $0x7d8] sm:$0xff]
          %v1809 = vld [vmem:[%s1556 + $0x7e0] sm:$0xff]
          %v1810 = vld [vmem:[%s1556 + $0x7e8] sm:$0xff]
          %v1811 = vld [vmem:[%s1556 + $0x7f0] sm:$0xff]
          %v1812 = vld [vmem:[%s1556 + $0x7f8] sm:$0xff]
          %v1813 = vld [vmem:[#allocation4] sm:$0xff]
          %v1814 = vld [vmem:[#allocation4 + $0x8] sm:$0xff]
          %v1815 = vld [vmem:[#allocation4 + $0x10] sm:$0xff]
          %v1816 = vld [vmem:[#allocation4 + $0x18] sm:$0xff]
          %v1817 = vld [vmem:[#allocation4 + $0x20] sm:$0xff]
          %v1818 = vld [vmem:[#allocation4 + $0x28] sm:$0xff]
          %v1819 = vld [vmem:[#allocation4 + $0x30] sm:$0xff]
          %v1820 = vld [vmem:[#allocation4 + $0x38] sm:$0xff]
          %1822 = vset.pattern.permute.xlu0 0
          %1823 = vperm.xlu0 %1822, %v1813
          %v1824 = vpop.permute.xlu0 %1823
          %1827 = vset.pattern.permute.xlu0 0
          %1828 = vperm.xlu0 %1827, %v1814
          %v1829 = vpop.permute.xlu0 %1828
          %1832 = vset.pattern.permute.xlu0 0
          %1833 = vperm.xlu0 %1832, %v1815
          %v1834 = vpop.permute.xlu0 %1833
          %1837 = vset.pattern.permute.xlu0 0
          %1838 = vperm.xlu0 %1837, %v1816
          %v1839 = vpop.permute.xlu0 %1838
          %1842 = vset.pattern.permute.xlu0 0
          %1843 = vperm.xlu0 %1842, %v1817
          %v1844 = vpop.permute.xlu0 %1843
          %1847 = vset.pattern.permute.xlu0 0
          %1848 = vperm.xlu0 %1847, %v1818
          %v1849 = vpop.permute.xlu0 %1848
          %1852 = vset.pattern.permute.xlu0 0
          %1853 = vperm.xlu0 %1852, %v1819
          %v1854 = vpop.permute.xlu0 %1853
          %1857 = vset.pattern.permute.xlu0 0
          %1858 = vperm.xlu0 %1857, %v1820
          %v1859 = vpop.permute.xlu0 %1858
          %v1861 = vmul.f32 %v1557, %v1824
          %v1862 = vmul.f32 %v1558, %v1824
          %v1863 = vmul.f32 %v1559, %v1824
          %v1864 = vmul.f32 %v1560, %v1824
          %v1865 = vmul.f32 %v1561, %v1824
          %v1866 = vmul.f32 %v1562, %v1824
          %v1867 = vmul.f32 %v1563, %v1824
          %v1868 = vmul.f32 %v1564, %v1824
          %v1869 = vmul.f32 %v1565, %v1824
          %v1870 = vmul.f32 %v1566, %v1824
          %v1871 = vmul.f32 %v1567, %v1824
          %v1872 = vmul.f32 %v1568, %v1824
          %v1873 = vmul.f32 %v1569, %v1824
          %v1874 = vmul.f32 %v1570, %v1824
          %v1875 = vmul.f32 %v1571, %v1824
          %v1876 = vmul.f32 %v1572, %v1824
          %v1877 = vmul.f32 %v1573, %v1824
          %v1878 = vmul.f32 %v1574, %v1824
          %v1879 = vmul.f32 %v1575, %v1824
          %v1880 = vmul.f32 %v1576, %v1824
          %v1881 = vmul.f32 %v1577, %v1824
          %v1882 = vmul.f32 %v1578, %v1824
          %v1883 = vmul.f32 %v1579, %v1824
          %v1884 = vmul.f32 %v1580, %v1824
          %v1885 = vmul.f32 %v1581, %v1824
          %v1886 = vmul.f32 %v1582, %v1824
          %v1887 = vmul.f32 %v1583, %v1824
          %v1888 = vmul.f32 %v1584, %v1824
          %v1889 = vmul.f32 %v1585, %v1824
          %v1890 = vmul.f32 %v1586, %v1824
          %v1891 = vmul.f32 %v1587, %v1824
          %v1892 = vmul.f32 %v1588, %v1824
          %v1893 = vmul.f32 %v1589, %v1829
          %v1894 = vmul.f32 %v1590, %v1829
          %v1895 = vmul.f32 %v1591, %v1829
          %v1896 = vmul.f32 %v1592, %v1829
          %v1897 = vmul.f32 %v1593, %v1829
          %v1898 = vmul.f32 %v1594, %v1829
          %v1899 = vmul.f32 %v1595, %v1829
          %v1900 = vmul.f32 %v1596, %v1829
          %v1901 = vmul.f32 %v1597, %v1829
          %v1902 = vmul.f32 %v1598, %v1829
          %v1903 = vmul.f32 %v1599, %v1829
          %v1904 = vmul.f32 %v1600, %v1829
          %v1905 = vmul.f32 %v1601, %v1829
          %v1906 = vmul.f32 %v1602, %v1829
          %v1907 = vmul.f32 %v1603, %v1829
          %v1908 = vmul.f32 %v1604, %v1829
          %v1909 = vmul.f32 %v1605, %v1829
          %v1910 = vmul.f32 %v1606, %v1829
          %v1911 = vmul.f32 %v1607, %v1829
          %v1912 = vmul.f32 %v1608, %v1829
          %v1913 = vmul.f32 %v1609, %v1829
          %v1914 = vmul.f32 %v1610, %v1829
          %v1915 = vmul.f32 %v1611, %v1829
          %v1916 = vmul.f32 %v1612, %v1829
          %v1917 = vmul.f32 %v1613, %v1829
          %v1918 = vmul.f32 %v1614, %v1829
          %v1919 = vmul.f32 %v1615, %v1829
          %v1920 = vmul.f32 %v1616, %v1829
          %v1921 = vmul.f32 %v1617, %v1829
          %v1922 = vmul.f32 %v1618, %v1829
          %v1923 = vmul.f32 %v1619, %v1829
          %v1924 = vmul.f32 %v1620, %v1829
          %v1925 = vmul.f32 %v1621, %v1834
          %v1926 = vmul.f32 %v1622, %v1834
          %v1927 = vmul.f32 %v1623, %v1834
          %v1928 = vmul.f32 %v1624, %v1834
          %v1929 = vmul.f32 %v1625, %v1834
          %v1930 = vmul.f32 %v1626, %v1834
          %v1931 = vmul.f32 %v1627, %v1834
          %v1932 = vmul.f32 %v1628, %v1834
          %v1933 = vmul.f32 %v1629, %v1834
          %v1934 = vmul.f32 %v1630, %v1834
          %v1935 = vmul.f32 %v1631, %v1834
          %v1936 = vmul.f32 %v1632, %v1834
          %v1937 = vmul.f32 %v1633, %v1834
          %v1938 = vmul.f32 %v1634, %v1834
          %v1939 = vmul.f32 %v1635, %v1834
          %v1940 = vmul.f32 %v1636, %v1834
          %v1941 = vmul.f32 %v1637, %v1834
          %v1942 = vmul.f32 %v1638, %v1834
          %v1943 = vmul.f32 %v1639, %v1834
          %v1944 = vmul.f32 %v1640, %v1834
          %v1945 = vmul.f32 %v1641, %v1834
          %v1946 = vmul.f32 %v1642, %v1834
          %v1947 = vmul.f32 %v1643, %v1834
          %v1948 = vmul.f32 %v1644, %v1834
          %v1949 = vmul.f32 %v1645, %v1834
          %v1950 = vmul.f32 %v1646, %v1834
          %v1951 = vmul.f32 %v1647, %v1834
          %v1952 = vmul.f32 %v1648, %v1834
          %v1953 = vmul.f32 %v1649, %v1834
          %v1954 = vmul.f32 %v1650, %v1834
          %v1955 = vmul.f32 %v1651, %v1834
          %v1956 = vmul.f32 %v1652, %v1834
          %v1957 = vmul.f32 %v1653, %v1839
          %v1958 = vmul.f32 %v1654, %v1839
          %v1959 = vmul.f32 %v1655, %v1839
          %v1960 = vmul.f32 %v1656, %v1839
          %v1961 = vmul.f32 %v1657, %v1839
          %v1962 = vmul.f32 %v1658, %v1839
          %v1963 = vmul.f32 %v1659, %v1839
          %v1964 = vmul.f32 %v1660, %v1839
          %v1965 = vmul.f32 %v1661, %v1839
          %v1966 = vmul.f32 %v1662, %v1839
          %v1967 = vmul.f32 %v1663, %v1839
          %v1968 = vmul.f32 %v1664, %v1839
          %v1969 = vmul.f32 %v1665, %v1839
          %v1970 = vmul.f32 %v1666, %v1839
          %v1971 = vmul.f32 %v1667, %v1839
          %v1972 = vmul.f32 %v1668, %v1839
          %v1973 = vmul.f32 %v1669, %v1839
          %v1974 = vmul.f32 %v1670, %v1839
          %v1975 = vmul.f32 %v1671, %v1839
          %v1976 = vmul.f32 %v1672, %v1839
          %v1977 = vmul.f32 %v1673, %v1839
          %v1978 = vmul.f32 %v1674, %v1839
          %v1979 = vmul.f32 %v1675, %v1839
          %v1980 = vmul.f32 %v1676, %v1839
          %v1981 = vmul.f32 %v1677, %v1839
          %v1982 = vmul.f32 %v1678, %v1839
          %v1983 = vmul.f32 %v1679, %v1839
          %v1984 = vmul.f32 %v1680, %v1839
          %v1985 = vmul.f32 %v1681, %v1839
          %v1986 = vmul.f32 %v1682, %v1839
          %v1987 = vmul.f32 %v1683, %v1839
          %v1988 = vmul.f32 %v1684, %v1839
          %v1989 = vmul.f32 %v1685, %v1844
          %v1990 = vmul.f32 %v1686, %v1844
          %v1991 = vmul.f32 %v1687, %v1844
          %v1992 = vmul.f32 %v1688, %v1844
          %v1993 = vmul.f32 %v1689, %v1844
          %v1994 = vmul.f32 %v1690, %v1844
          %v1995 = vmul.f32 %v1691, %v1844
          %v1996 = vmul.f32 %v1692, %v1844
          %v1997 = vmul.f32 %v1693, %v1844
          %v1998 = vmul.f32 %v1694, %v1844
          %v1999 = vmul.f32 %v1695, %v1844
          %v2000 = vmul.f32 %v1696, %v1844
          %v2001 = vmul.f32 %v1697, %v1844
          %v2002 = vmul.f32 %v1698, %v1844
          %v2003 = vmul.f32 %v1699, %v1844
          %v2004 = vmul.f32 %v1700, %v1844
          %v2005 = vmul.f32 %v1701, %v1844
          %v2006 = vmul.f32 %v1702, %v1844
          %v2007 = vmul.f32 %v1703, %v1844
          %v2008 = vmul.f32 %v1704, %v1844
          %v2009 = vmul.f32 %v1705, %v1844
          %v2010 = vmul.f32 %v1706, %v1844
          %v2011 = vmul.f32 %v1707, %v1844
          %v2012 = vmul.f32 %v1708, %v1844
          %v2013 = vmul.f32 %v1709, %v1844
          %v2014 = vmul.f32 %v1710, %v1844
          %v2015 = vmul.f32 %v1711, %v1844
          %v2016 = vmul.f32 %v1712, %v1844
          %v2017 = vmul.f32 %v1713, %v1844
          %v2018 = vmul.f32 %v1714, %v1844
          %v2019 = vmul.f32 %v1715, %v1844
          %v2020 = vmul.f32 %v1716, %v1844
          %v2021 = vmul.f32 %v1717, %v1849
          %v2022 = vmul.f32 %v1718, %v1849
          %v2023 = vmul.f32 %v1719, %v1849
          %v2024 = vmul.f32 %v1720, %v1849
          %v2025 = vmul.f32 %v1721, %v1849
          %v2026 = vmul.f32 %v1722, %v1849
          %v2027 = vmul.f32 %v1723, %v1849
          %v2028 = vmul.f32 %v1724, %v1849
          %v2029 = vmul.f32 %v1725, %v1849
          %v2030 = vmul.f32 %v1726, %v1849
          %v2031 = vmul.f32 %v1727, %v1849
          %v2032 = vmul.f32 %v1728, %v1849
          %v2033 = vmul.f32 %v1729, %v1849
          %v2034 = vmul.f32 %v1730, %v1849
          %v2035 = vmul.f32 %v1731, %v1849
          %v2036 = vmul.f32 %v1732, %v1849
          %v2037 = vmul.f32 %v1733, %v1849
          %v2038 = vmul.f32 %v1734, %v1849
          %v2039 = vmul.f32 %v1735, %v1849
          %v2040 = vmul.f32 %v1736, %v1849
          %v2041 = vmul.f32 %v1737, %v1849
          %v2042 = vmul.f32 %v1738, %v1849
          %v2043 = vmul.f32 %v1739, %v1849
          %v2044 = vmul.f32 %v1740, %v1849
          %v2045 = vmul.f32 %v1741, %v1849
          %v2046 = vmul.f32 %v1742, %v1849
          %v2047 = vmul.f32 %v1743, %v1849
          %v2048 = vmul.f32 %v1744, %v1849
          %v2049 = vmul.f32 %v1745, %v1849
          %v2050 = vmul.f32 %v1746, %v1849
          %v2051 = vmul.f32 %v1747, %v1849
          %v2052 = vmul.f32 %v1748, %v1849
          %v2053 = vmul.f32 %v1749, %v1854
          %v2054 = vmul.f32 %v1750, %v1854
          %v2055 = vmul.f32 %v1751, %v1854
          %v2056 = vmul.f32 %v1752, %v1854
          %v2057 = vmul.f32 %v1753, %v1854
          %v2058 = vmul.f32 %v1754, %v1854
          %v2059 = vmul.f32 %v1755, %v1854
          %v2060 = vmul.f32 %v1756, %v1854
          %v2061 = vmul.f32 %v1757, %v1854
          %v2062 = vmul.f32 %v1758, %v1854
          %v2063 = vmul.f32 %v1759, %v1854
          %v2064 = vmul.f32 %v1760, %v1854
          %v2065 = vmul.f32 %v1761, %v1854
          %v2066 = vmul.f32 %v1762, %v1854
          %v2067 = vmul.f32 %v1763, %v1854
          %v2068 = vmul.f32 %v1764, %v1854
          %v2069 = vmul.f32 %v1765, %v1854
          %v2070 = vmul.f32 %v1766, %v1854
          %v2071 = vmul.f32 %v1767, %v1854
          %v2072 = vmul.f32 %v1768, %v1854
          %v2073 = vmul.f32 %v1769, %v1854
          %v2074 = vmul.f32 %v1770, %v1854
          %v2075 = vmul.f32 %v1771, %v1854
          %v2076 = vmul.f32 %v1772, %v1854
          %v2077 = vmul.f32 %v1773, %v1854
          %v2078 = vmul.f32 %v1774, %v1854
          %v2079 = vmul.f32 %v1775, %v1854
          %v2080 = vmul.f32 %v1776, %v1854
          %v2081 = vmul.f32 %v1777, %v1854
          %v2082 = vmul.f32 %v1778, %v1854
          %v2083 = vmul.f32 %v1779, %v1854
          %v2084 = vmul.f32 %v1780, %v1854
          %v2085 = vmul.f32 %v1781, %v1859
          %v2086 = vmul.f32 %v1782, %v1859
          %v2087 = vmul.f32 %v1783, %v1859
          %v2088 = vmul.f32 %v1784, %v1859
          %v2089 = vmul.f32 %v1785, %v1859
          %v2090 = vmul.f32 %v1786, %v1859
          %v2091 = vmul.f32 %v1787, %v1859
          %v2092 = vmul.f32 %v1788, %v1859
          %v2093 = vmul.f32 %v1789, %v1859
          %v2094 = vmul.f32 %v1790, %v1859
          %v2095 = vmul.f32 %v1791, %v1859
          %v2096 = vmul.f32 %v1792, %v1859
          %v2097 = vmul.f32 %v1793, %v1859
          %v2098 = vmul.f32 %v1794, %v1859
          %v2099 = vmul.f32 %v1795, %v1859
          %v2100 = vmul.f32 %v1796, %v1859
          %v2101 = vmul.f32 %v1797, %v1859
          %v2102 = vmul.f32 %v1798, %v1859
          %v2103 = vmul.f32 %v1799, %v1859
          %v2104 = vmul.f32 %v1800, %v1859
          %v2105 = vmul.f32 %v1801, %v1859
          %v2106 = vmul.f32 %v1802, %v1859
          %v2107 = vmul.f32 %v1803, %v1859
          %v2108 = vmul.f32 %v1804, %v1859
          %v2109 = vmul.f32 %v1805, %v1859
          %v2110 = vmul.f32 %v1806, %v1859
          %v2111 = vmul.f32 %v1807, %v1859
          %v2112 = vmul.f32 %v1808, %v1859
          %v2113 = vmul.f32 %v1809, %v1859
          %v2114 = vmul.f32 %v1810, %v1859
          %v2115 = vmul.f32 %v1811, %v1859
          %v2116 = vmul.f32 %v1812, %v1859
          %2117 = vst [vmem:[%s290] sm:$0xff] %v1861
          %2118 = vst [vmem:[%s290 + $0x8] sm:$0xff] %v1862
          %2119 = vst [vmem:[%s290 + $0x10] sm:$0xff] %v1863
          %2120 = vst [vmem:[%s290 + $0x18] sm:$0xff] %v1864
          %2121 = vst [vmem:[%s290 + $0x20] sm:$0xff] %v1865
          %2122 = vst [vmem:[%s290 + $0x28] sm:$0xff] %v1866
          %2123 = vst [vmem:[%s290 + $0x30] sm:$0xff] %v1867
          %2124 = vst [vmem:[%s290 + $0x38] sm:$0xff] %v1868
          %2125 = vst [vmem:[%s290 + $0x40] sm:$0xff] %v1869
          %2126 = vst [vmem:[%s290 + $0x48] sm:$0xff] %v1870
          %2127 = vst [vmem:[%s290 + $0x50] sm:$0xff] %v1871
          %2128 = vst [vmem:[%s290 + $0x58] sm:$0xff] %v1872
          %2129 = vst [vmem:[%s290 + $0x60] sm:$0xff] %v1873
          %2130 = vst [vmem:[%s290 + $0x68] sm:$0xff] %v1874
          %2131 = vst [vmem:[%s290 + $0x70] sm:$0xff] %v1875
          %2132 = vst [vmem:[%s290 + $0x78] sm:$0xff] %v1876
          %2133 = vst [vmem:[%s290 + $0x80] sm:$0xff] %v1877
          %2134 = vst [vmem:[%s290 + $0x88] sm:$0xff] %v1878
          %2135 = vst [vmem:[%s290 + $0x90] sm:$0xff] %v1879
          %2136 = vst [vmem:[%s290 + $0x98] sm:$0xff] %v1880
          %2137 = vst [vmem:[%s290 + $0xa0] sm:$0xff] %v1881
          %2138 = vst [vmem:[%s290 + $0xa8] sm:$0xff] %v1882
          %2139 = vst [vmem:[%s290 + $0xb0] sm:$0xff] %v1883
          %2140 = vst [vmem:[%s290 + $0xb8] sm:$0xff] %v1884
          %2141 = vst [vmem:[%s290 + $0xc0] sm:$0xff] %v1885
          %2142 = vst [vmem:[%s290 + $0xc8] sm:$0xff] %v1886
          %2143 = vst [vmem:[%s290 + $0xd0] sm:$0xff] %v1887
          %2144 = vst [vmem:[%s290 + $0xd8] sm:$0xff] %v1888
          %2145 = vst [vmem:[%s290 + $0xe0] sm:$0xff] %v1889
          %2146 = vst [vmem:[%s290 + $0xe8] sm:$0xff] %v1890
          %2147 = vst [vmem:[%s290 + $0xf0] sm:$0xff] %v1891
          %2148 = vst [vmem:[%s290 + $0xf8] sm:$0xff] %v1892
          %2149 = vst [vmem:[%s290 + $0x100] sm:$0xff] %v1893
          %2150 = vst [vmem:[%s290 + $0x108] sm:$0xff] %v1894
          %2151 = vst [vmem:[%s290 + $0x110] sm:$0xff] %v1895
          %2152 = vst [vmem:[%s290 + $0x118] sm:$0xff] %v1896
          %2153 = vst [vmem:[%s290 + $0x120] sm:$0xff] %v1897
          %2154 = vst [vmem:[%s290 + $0x128] sm:$0xff] %v1898
          %2155 = vst [vmem:[%s290 + $0x130] sm:$0xff] %v1899
          %2156 = vst [vmem:[%s290 + $0x138] sm:$0xff] %v1900
          %2157 = vst [vmem:[%s290 + $0x140] sm:$0xff] %v1901
          %2158 = vst [vmem:[%s290 + $0x148] sm:$0xff] %v1902
          %2159 = vst [vmem:[%s290 + $0x150] sm:$0xff] %v1903
          %2160 = vst [vmem:[%s290 + $0x158] sm:$0xff] %v1904
          %2161 = vst [vmem:[%s290 + $0x160] sm:$0xff] %v1905
          %2162 = vst [vmem:[%s290 + $0x168] sm:$0xff] %v1906
          %2163 = vst [vmem:[%s290 + $0x170] sm:$0xff] %v1907
          %2164 = vst [vmem:[%s290 + $0x178] sm:$0xff] %v1908
          %2165 = vst [vmem:[%s290 + $0x180] sm:$0xff] %v1909
          %2166 = vst [vmem:[%s290 + $0x188] sm:$0xff] %v1910
          %2167 = vst [vmem:[%s290 + $0x190] sm:$0xff] %v1911
          %2168 = vst [vmem:[%s290 + $0x198] sm:$0xff] %v1912
          %2169 = vst [vmem:[%s290 + $0x1a0] sm:$0xff] %v1913
          %2170 = vst [vmem:[%s290 + $0x1a8] sm:$0xff] %v1914
          %2171 = vst [vmem:[%s290 + $0x1b0] sm:$0xff] %v1915
          %2172 = vst [vmem:[%s290 + $0x1b8] sm:$0xff] %v1916
          %2173 = vst [vmem:[%s290 + $0x1c0] sm:$0xff] %v1917
          %2174 = vst [vmem:[%s290 + $0x1c8] sm:$0xff] %v1918
          %2175 = vst [vmem:[%s290 + $0x1d0] sm:$0xff] %v1919
          %2176 = vst [vmem:[%s290 + $0x1d8] sm:$0xff] %v1920
          %2177 = vst [vmem:[%s290 + $0x1e0] sm:$0xff] %v1921
          %2178 = vst [vmem:[%s290 + $0x1e8] sm:$0xff] %v1922
          %2179 = vst [vmem:[%s290 + $0x1f0] sm:$0xff] %v1923
          %2180 = vst [vmem:[%s290 + $0x1f8] sm:$0xff] %v1924
          %2181 = vst [vmem:[%s290 + $0x200] sm:$0xff] %v1925
          %2182 = vst [vmem:[%s290 + $0x208] sm:$0xff] %v1926
          %2183 = vst [vmem:[%s290 + $0x210] sm:$0xff] %v1927
          %2184 = vst [vmem:[%s290 + $0x218] sm:$0xff] %v1928
          %2185 = vst [vmem:[%s290 + $0x220] sm:$0xff] %v1929
          %2186 = vst [vmem:[%s290 + $0x228] sm:$0xff] %v1930
          %2187 = vst [vmem:[%s290 + $0x230] sm:$0xff] %v1931
          %2188 = vst [vmem:[%s290 + $0x238] sm:$0xff] %v1932
          %2189 = vst [vmem:[%s290 + $0x240] sm:$0xff] %v1933
          %2190 = vst [vmem:[%s290 + $0x248] sm:$0xff] %v1934
          %2191 = vst [vmem:[%s290 + $0x250] sm:$0xff] %v1935
          %2192 = vst [vmem:[%s290 + $0x258] sm:$0xff] %v1936
          %2193 = vst [vmem:[%s290 + $0x260] sm:$0xff] %v1937
          %2194 = vst [vmem:[%s290 + $0x268] sm:$0xff] %v1938
          %2195 = vst [vmem:[%s290 + $0x270] sm:$0xff] %v1939
          %2196 = vst [vmem:[%s290 + $0x278] sm:$0xff] %v1940
          %2197 = vst [vmem:[%s290 + $0x280] sm:$0xff] %v1941
          %2198 = vst [vmem:[%s290 + $0x288] sm:$0xff] %v1942
          %2199 = vst [vmem:[%s290 + $0x290] sm:$0xff] %v1943
          %2200 = vst [vmem:[%s290 + $0x298] sm:$0xff] %v1944
          %2201 = vst [vmem:[%s290 + $0x2a0] sm:$0xff] %v1945
          %2202 = vst [vmem:[%s290 + $0x2a8] sm:$0xff] %v1946
          %2203 = vst [vmem:[%s290 + $0x2b0] sm:$0xff] %v1947
          %2204 = vst [vmem:[%s290 + $0x2b8] sm:$0xff] %v1948
          %2205 = vst [vmem:[%s290 + $0x2c0] sm:$0xff] %v1949
          %2206 = vst [vmem:[%s290 + $0x2c8] sm:$0xff] %v1950
          %2207 = vst [vmem:[%s290 + $0x2d0] sm:$0xff] %v1951
          %2208 = vst [vmem:[%s290 + $0x2d8] sm:$0xff] %v1952
          %2209 = vst [vmem:[%s290 + $0x2e0] sm:$0xff] %v1953
          %2210 = vst [vmem:[%s290 + $0x2e8] sm:$0xff] %v1954
          %2211 = vst [vmem:[%s290 + $0x2f0] sm:$0xff] %v1955
          %2212 = vst [vmem:[%s290 + $0x2f8] sm:$0xff] %v1956
          %2213 = vst [vmem:[%s290 + $0x300] sm:$0xff] %v1957
          %2214 = vst [vmem:[%s290 + $0x308] sm:$0xff] %v1958
          %2215 = vst [vmem:[%s290 + $0x310] sm:$0xff] %v1959
          %2216 = vst [vmem:[%s290 + $0x318] sm:$0xff] %v1960
          %2217 = vst [vmem:[%s290 + $0x320] sm:$0xff] %v1961
          %2218 = vst [vmem:[%s290 + $0x328] sm:$0xff] %v1962
          %2219 = vst [vmem:[%s290 + $0x330] sm:$0xff] %v1963
          %2220 = vst [vmem:[%s290 + $0x338] sm:$0xff] %v1964
          %2221 = vst [vmem:[%s290 + $0x340] sm:$0xff] %v1965
          %2222 = vst [vmem:[%s290 + $0x348] sm:$0xff] %v1966
          %2223 = vst [vmem:[%s290 + $0x350] sm:$0xff] %v1967
          %2224 = vst [vmem:[%s290 + $0x358] sm:$0xff] %v1968
          %2225 = vst [vmem:[%s290 + $0x360] sm:$0xff] %v1969
          %2226 = vst [vmem:[%s290 + $0x368] sm:$0xff] %v1970
          %2227 = vst [vmem:[%s290 + $0x370] sm:$0xff] %v1971
          %2228 = vst [vmem:[%s290 + $0x378] sm:$0xff] %v1972
          %2229 = vst [vmem:[%s290 + $0x380] sm:$0xff] %v1973
          %2230 = vst [vmem:[%s290 + $0x388] sm:$0xff] %v1974
          %2231 = vst [vmem:[%s290 + $0x390] sm:$0xff] %v1975
          %2232 = vst [vmem:[%s290 + $0x398] sm:$0xff] %v1976
          %2233 = vst [vmem:[%s290 + $0x3a0] sm:$0xff] %v1977
          %2234 = vst [vmem:[%s290 + $0x3a8] sm:$0xff] %v1978
          %2235 = vst [vmem:[%s290 + $0x3b0] sm:$0xff] %v1979
          %2236 = vst [vmem:[%s290 + $0x3b8] sm:$0xff] %v1980
          %2237 = vst [vmem:[%s290 + $0x3c0] sm:$0xff] %v1981
          %2238 = vst [vmem:[%s290 + $0x3c8] sm:$0xff] %v1982
          %2239 = vst [vmem:[%s290 + $0x3d0] sm:$0xff] %v1983
          %2240 = vst [vmem:[%s290 + $0x3d8] sm:$0xff] %v1984
          %2241 = vst [vmem:[%s290 + $0x3e0] sm:$0xff] %v1985
          %2242 = vst [vmem:[%s290 + $0x3e8] sm:$0xff] %v1986
          %2243 = vst [vmem:[%s290 + $0x3f0] sm:$0xff] %v1987
          %2244 = vst [vmem:[%s290 + $0x3f8] sm:$0xff] %v1988
          %2245 = vst [vmem:[%s290 + $0x400] sm:$0xff] %v1989
          %2246 = vst [vmem:[%s290 + $0x408] sm:$0xff] %v1990
          %2247 = vst [vmem:[%s290 + $0x410] sm:$0xff] %v1991
          %2248 = vst [vmem:[%s290 + $0x418] sm:$0xff] %v1992
          %2249 = vst [vmem:[%s290 + $0x420] sm:$0xff] %v1993
          %2250 = vst [vmem:[%s290 + $0x428] sm:$0xff] %v1994
          %2251 = vst [vmem:[%s290 + $0x430] sm:$0xff] %v1995
          %2252 = vst [vmem:[%s290 + $0x438] sm:$0xff] %v1996
          %2253 = vst [vmem:[%s290 + $0x440] sm:$0xff] %v1997
          %2254 = vst [vmem:[%s290 + $0x448] sm:$0xff] %v1998
          %2255 = vst [vmem:[%s290 + $0x450] sm:$0xff] %v1999
          %2256 = vst [vmem:[%s290 + $0x458] sm:$0xff] %v2000
          %2257 = vst [vmem:[%s290 + $0x460] sm:$0xff] %v2001
          %2258 = vst [vmem:[%s290 + $0x468] sm:$0xff] %v2002
          %2259 = vst [vmem:[%s290 + $0x470] sm:$0xff] %v2003
          %2260 = vst [vmem:[%s290 + $0x478] sm:$0xff] %v2004
          %2261 = vst [vmem:[%s290 + $0x480] sm:$0xff] %v2005
          %2262 = vst [vmem:[%s290 + $0x488] sm:$0xff] %v2006
          %2263 = vst [vmem:[%s290 + $0x490] sm:$0xff] %v2007
          %2264 = vst [vmem:[%s290 + $0x498] sm:$0xff] %v2008
          %2265 = vst [vmem:[%s290 + $0x4a0] sm:$0xff] %v2009
          %2266 = vst [vmem:[%s290 + $0x4a8] sm:$0xff] %v2010
          %2267 = vst [vmem:[%s290 + $0x4b0] sm:$0xff] %v2011
          %2268 = vst [vmem:[%s290 + $0x4b8] sm:$0xff] %v2012
          %2269 = vst [vmem:[%s290 + $0x4c0] sm:$0xff] %v2013
          %2270 = vst [vmem:[%s290 + $0x4c8] sm:$0xff] %v2014
          %2271 = vst [vmem:[%s290 + $0x4d0] sm:$0xff] %v2015
          %2272 = vst [vmem:[%s290 + $0x4d8] sm:$0xff] %v2016
          %2273 = vst [vmem:[%s290 + $0x4e0] sm:$0xff] %v2017
          %2274 = vst [vmem:[%s290 + $0x4e8] sm:$0xff] %v2018
          %2275 = vst [vmem:[%s290 + $0x4f0] sm:$0xff] %v2019
          %2276 = vst [vmem:[%s290 + $0x4f8] sm:$0xff] %v2020
          %2277 = vst [vmem:[%s290 + $0x500] sm:$0xff] %v2021
          %2278 = vst [vmem:[%s290 + $0x508] sm:$0xff] %v2022
          %2279 = vst [vmem:[%s290 + $0x510] sm:$0xff] %v2023
          %2280 = vst [vmem:[%s290 + $0x518] sm:$0xff] %v2024
          %2281 = vst [vmem:[%s290 + $0x520] sm:$0xff] %v2025
          %2282 = vst [vmem:[%s290 + $0x528] sm:$0xff] %v2026
          %2283 = vst [vmem:[%s290 + $0x530] sm:$0xff] %v2027
          %2284 = vst [vmem:[%s290 + $0x538] sm:$0xff] %v2028
          %2285 = vst [vmem:[%s290 + $0x540] sm:$0xff] %v2029
          %2286 = vst [vmem:[%s290 + $0x548] sm:$0xff] %v2030
          %2287 = vst [vmem:[%s290 + $0x550] sm:$0xff] %v2031
          %2288 = vst [vmem:[%s290 + $0x558] sm:$0xff] %v2032
          %2289 = vst [vmem:[%s290 + $0x560] sm:$0xff] %v2033
          %2290 = vst [vmem:[%s290 + $0x568] sm:$0xff] %v2034
          %2291 = vst [vmem:[%s290 + $0x570] sm:$0xff] %v2035
          %2292 = vst [vmem:[%s290 + $0x578] sm:$0xff] %v2036
          %2293 = vst [vmem:[%s290 + $0x580] sm:$0xff] %v2037
          %2294 = vst [vmem:[%s290 + $0x588] sm:$0xff] %v2038
          %2295 = vst [vmem:[%s290 + $0x590] sm:$0xff] %v2039
          %2296 = vst [vmem:[%s290 + $0x598] sm:$0xff] %v2040
          %2297 = vst [vmem:[%s290 + $0x5a0] sm:$0xff] %v2041
          %2298 = vst [vmem:[%s290 + $0x5a8] sm:$0xff] %v2042
          %2299 = vst [vmem:[%s290 + $0x5b0] sm:$0xff] %v2043
          %2300 = vst [vmem:[%s290 + $0x5b8] sm:$0xff] %v2044
          %2301 = vst [vmem:[%s290 + $0x5c0] sm:$0xff] %v2045
          %2302 = vst [vmem:[%s290 + $0x5c8] sm:$0xff] %v2046
          %2303 = vst [vmem:[%s290 + $0x5d0] sm:$0xff] %v2047
          %2304 = vst [vmem:[%s290 + $0x5d8] sm:$0xff] %v2048
          %2305 = vst [vmem:[%s290 + $0x5e0] sm:$0xff] %v2049
          %2306 = vst [vmem:[%s290 + $0x5e8] sm:$0xff] %v2050
          %2307 = vst [vmem:[%s290 + $0x5f0] sm:$0xff] %v2051
          %2308 = vst [vmem:[%s290 + $0x5f8] sm:$0xff] %v2052
          %2309 = vst [vmem:[%s290 + $0x600] sm:$0xff] %v2053
          %2310 = vst [vmem:[%s290 + $0x608] sm:$0xff] %v2054
          %2311 = vst [vmem:[%s290 + $0x610] sm:$0xff] %v2055
          %2312 = vst [vmem:[%s290 + $0x618] sm:$0xff] %v2056
          %2313 = vst [vmem:[%s290 + $0x620] sm:$0xff] %v2057
          %2314 = vst [vmem:[%s290 + $0x628] sm:$0xff] %v2058
          %2315 = vst [vmem:[%s290 + $0x630] sm:$0xff] %v2059
          %2316 = vst [vmem:[%s290 + $0x638] sm:$0xff] %v2060
          %2317 = vst [vmem:[%s290 + $0x640] sm:$0xff] %v2061
          %2318 = vst [vmem:[%s290 + $0x648] sm:$0xff] %v2062
          %2319 = vst [vmem:[%s290 + $0x650] sm:$0xff] %v2063
          %2320 = vst [vmem:[%s290 + $0x658] sm:$0xff] %v2064
          %2321 = vst [vmem:[%s290 + $0x660] sm:$0xff] %v2065
          %2322 = vst [vmem:[%s290 + $0x668] sm:$0xff] %v2066
          %2323 = vst [vmem:[%s290 + $0x670] sm:$0xff] %v2067
          %2324 = vst [vmem:[%s290 + $0x678] sm:$0xff] %v2068
          %2325 = vst [vmem:[%s290 + $0x680] sm:$0xff] %v2069
          %2326 = vst [vmem:[%s290 + $0x688] sm:$0xff] %v2070
          %2327 = vst [vmem:[%s290 + $0x690] sm:$0xff] %v2071
          %2328 = vst [vmem:[%s290 + $0x698] sm:$0xff] %v2072
          %2329 = vst [vmem:[%s290 + $0x6a0] sm:$0xff] %v2073
          %2330 = vst [vmem:[%s290 + $0x6a8] sm:$0xff] %v2074
          %2331 = vst [vmem:[%s290 + $0x6b0] sm:$0xff] %v2075
          %2332 = vst [vmem:[%s290 + $0x6b8] sm:$0xff] %v2076
          %2333 = vst [vmem:[%s290 + $0x6c0] sm:$0xff] %v2077
          %2334 = vst [vmem:[%s290 + $0x6c8] sm:$0xff] %v2078
          %2335 = vst [vmem:[%s290 + $0x6d0] sm:$0xff] %v2079
          %2336 = vst [vmem:[%s290 + $0x6d8] sm:$0xff] %v2080
          %2337 = vst [vmem:[%s290 + $0x6e0] sm:$0xff] %v2081
          %2338 = vst [vmem:[%s290 + $0x6e8] sm:$0xff] %v2082
          %2339 = vst [vmem:[%s290 + $0x6f0] sm:$0xff] %v2083
          %2340 = vst [vmem:[%s290 + $0x6f8] sm:$0xff] %v2084
          %2341 = vst [vmem:[%s290 + $0x700] sm:$0xff] %v2085
          %2342 = vst [vmem:[%s290 + $0x708] sm:$0xff] %v2086
          %2343 = vst [vmem:[%s290 + $0x710] sm:$0xff] %v2087
          %2344 = vst [vmem:[%s290 + $0x718] sm:$0xff] %v2088
          %2345 = vst [vmem:[%s290 + $0x720] sm:$0xff] %v2089
          %2346 = vst [vmem:[%s290 + $0x728] sm:$0xff] %v2090
          %2347 = vst [vmem:[%s290 + $0x730] sm:$0xff] %v2091
          %2348 = vst [vmem:[%s290 + $0x738] sm:$0xff] %v2092
          %2349 = vst [vmem:[%s290 + $0x740] sm:$0xff] %v2093
          %2350 = vst [vmem:[%s290 + $0x748] sm:$0xff] %v2094
          %2351 = vst [vmem:[%s290 + $0x750] sm:$0xff] %v2095
          %2352 = vst [vmem:[%s290 + $0x758] sm:$0xff] %v2096
          %2353 = vst [vmem:[%s290 + $0x760] sm:$0xff] %v2097
          %2354 = vst [vmem:[%s290 + $0x768] sm:$0xff] %v2098
          %2355 = vst [vmem:[%s290 + $0x770] sm:$0xff] %v2099
          %2356 = vst [vmem:[%s290 + $0x778] sm:$0xff] %v2100
          %2357 = vst [vmem:[%s290 + $0x780] sm:$0xff] %v2101
          %2358 = vst [vmem:[%s290 + $0x788] sm:$0xff] %v2102
          %2359 = vst [vmem:[%s290 + $0x790] sm:$0xff] %v2103
          %2360 = vst [vmem:[%s290 + $0x798] sm:$0xff] %v2104
          %2361 = vst [vmem:[%s290 + $0x7a0] sm:$0xff] %v2105
          %2362 = vst [vmem:[%s290 + $0x7a8] sm:$0xff] %v2106
          %2363 = vst [vmem:[%s290 + $0x7b0] sm:$0xff] %v2107
          %2364 = vst [vmem:[%s290 + $0x7b8] sm:$0xff] %v2108
          %2365 = vst [vmem:[%s290 + $0x7c0] sm:$0xff] %v2109
          %2366 = vst [vmem:[%s290 + $0x7c8] sm:$0xff] %v2110
          %2367 = vst [vmem:[%s290 + $0x7d0] sm:$0xff] %v2111
          %2368 = vst [vmem:[%s290 + $0x7d8] sm:$0xff] %v2112
          %2369 = vst [vmem:[%s290 + $0x7e0] sm:$0xff] %v2113
          %2370 = vst [vmem:[%s290 + $0x7e8] sm:$0xff] %v2114
          %2371 = vst [vmem:[%s290 + $0x7f0] sm:$0xff] %v2115
          %2372 = vst [vmem:[%s290 + $0x7f8] sm:$0xff] %v2116
        $region64: #{tpu_custom_call.1} parent=39 // pred_fallthru
          _
        %s2373 = sand.u32 %s172, 1
        %s2374 = scalar_lea.sflag [#allocation7], %s2373
        %s2375 = sand.u32 %s172, 1
        %s2376 = smul.addr %s2375, 2048
        %s2377 = scalar_lea.vmem [#allocation10], %s2376
        // Predicated region
        $region65: #{tpu_custom_call.1} parent=39 // pred_check
          %p2378 = pneg %p182
        $region66: #{tpu_custom_call.1} parent=39 // pred_check_branch
          %2380 = sbr.rel (%p2378) target = $region68
        $region67: #{tpu_custom_call.1} parent=39 // pred_region
          %p2381 = scmp.eq.s32.totalorder %s29, 0
          %s2382 = scalar_select %p2381, 0, %s30
          %s2383 = smul.u32 32, %s2382
          %s2385 = ssub.s32 32768, 32768
          %2386 = vsyncadd %s2374, %s2385
          %s2387 = smul.addr %s28, 256
          %s2388 = sadd.s32 %s2383, %s2387
          %s2389 = smul.addr %s2388, 128
          %s2390 = scalar_lea.hbm %s5, %s2389
          %s2391 = sshll.u32 %s2377, 4
          %s2392 = int_to_ptr.vmem [resolvable:$true] %s2391
          %2397 = dma.vmem_to_hbm [thread:$0]  %s2392, 32768, %s2390, %s2374, 4096, 4096, 256
        $region68: #{tpu_custom_call.1} parent=39 // pred_fallthru
          _
      $region40: #{tpu_custom_call.1} parent=5 // pred_fallthru
        _
      %p2398 = scmp.le.s32.totalorder 2, %s18
      // Predicated region
      $region69: #{tpu_custom_call.1} parent=5 // pred_check
        %p2399 = pneg %p2398
      $region70: #{tpu_custom_call.1} parent=5 // pred_check_branch
        %2401 = sbr.rel (%p2399) target = $region72
      $region71: #{tpu_custom_call.1} parent=5 // pred_region
        %s2402 = ssub.s32 %s18, 2
        // Predicated region
        $region73: #{tpu_custom_call.1} parent=71 // pred_check
          %p2403 = pneg %p188
        $region74: #{tpu_custom_call.1} parent=71 // pred_check_branch
          %2405 = sbr.rel (%p2403) target = $region76
        $region75: #{tpu_custom_call.1} parent=71 // pred_region
          %s2406 = sand.u32 %s173, 1
          %s2407 = scalar_lea.sflag [#allocation7], %s2406
          %s2408 = sand.u32 %s173, 1
          %s2409 = smul.addr %s2408, 2048
          %s2410 = scalar_lea.vmem [#allocation10], %s2409
          %2411 = dma.done %s2407, 32768
        $region76: #{tpu_custom_call.1} parent=71 // pred_fallthru
          _
      $region72: #{tpu_custom_call.1} parent=5 // pred_fallthru
        _
    $region6: #{tpu_custom_call.1} parent=1 // loop_footer
      %s22 = sadd.s32 1, %s18
    $region7: #{tpu_custom_call.1} parent=1 // loop_footer_branch
      %17 = sbr.rel target = $region3
    $region8: #{tpu_custom_call.1} parent=1 // loop_exit
      _
    %2412 = vsyncpa [#allocation6], 1
    %s2413 = scalar_lea.sflag [#allocation6], 1
    %2414 = vsyncpa %s2413, 1
    %2415 = vsyncpa [#allocation9], 1
    %2416 = vsyncpa [#allocation7], 1
    %s2417 = scalar_lea.sflag [#allocation7], 1
    %2418 = vsyncpa %s2417, 1

</llo_original>
